<compile_context>
chip_gen: v6e
topology: v6e:2x2x1
jax: 0.10.0
libtpu: 0.0.40
codegen_flags: <defaults>
</compile_context>

<pallas_src>
import jax
import jax.numpy as jnp
from jax.experimental import pallas as pl
from jax.experimental.pallas import tpu as pltpu

# ---- model hyper-parameters (scaled-down versions of the defaults: 8 heads / 512 dims) ----
NUM_HEADS = 4
D_MODEL = 128          # in_channels == out_channels
SEQ_LEN = 64           # S = H * W of the original feature map
BATCH = 2
LN_EPS = 1e-6
HEAD_DIM = D_MODEL // NUM_HEADS
ATTN_SCALE = 1.0 / (float(HEAD_DIM) ** 0.5)

# MXU operand dtype. bf16 inputs + f32 accumulation = full MXU rate on all generations; the
# reference mirrors the same casts so the correctness check stays tight (~1e-5 agreement).
MXU_DTYPE = jnp.bfloat16


def _attn_block_kernel(x_ref, wqkv_ref, bqkv_ref, wl_ref, bl_ref,
                       gamma_ref, beta_ref, o_ref, attn_scr):
    """One grid step processes the whole (B, S, D) problem."""
    B, S, D = x_ref.shape
    H = NUM_HEADS
    hd = D // H
    M = B * S

    # Flatten batch*seq rows so the big matmuls run at M = B*S.
    x_f32 = x_ref[...].reshape(M, D).astype(jnp.float32)        # residual path stays f32
    x_mx = x_f32.astype(MXU_DTYPE)                               # MXU operand

    # --- fused q|k|v projection: one lane-dense MXU pass with N = 3D, f32 accumulation ---
    qkv = jnp.dot(x_mx, wqkv_ref[...],
                  preferred_element_type=jnp.float32) + bqkv_ref[...]
    q = qkv[:, 0 * D:1 * D].reshape(B, S, D).astype(MXU_DTYPE)
    k = qkv[:, 1 * D:2 * D].reshape(B, S, D).astype(MXU_DTYPE)
    v = qkv[:, 2 * D:3 * D].reshape(B, S, D).astype(MXU_DTYPE)

    # --- per-head attention (statically unrolled); outputs written to VMEM scratch slices ---
    for h in range(H):
        sl = slice(h * hd, (h + 1) * hd)
        qh, kh, vh = q[:, :, sl], k[:, :, sl], v[:, :, sl]
        # scores: batched over the batch dim, contracts last dims (no explicit transpose)
        s = jnp.einsum("bqd,bkd->bqk", qh, kh,
                       preferred_element_type=jnp.float32) * ATTN_SCALE
        s = s - jnp.max(s, axis=-1, keepdims=True)               # softmax_func
        e = jnp.exp(s)
        p = e / jnp.sum(e, axis=-1, keepdims=True)               # exact divide
        oh = jnp.einsum("bqk,bkd->bqd", p.astype(MXU_DTYPE), vh,
                        preferred_element_type=jnp.float32)      # (B, S, hd)
        attn_scr[:, sl] = oh.reshape(M, hd)                      # merge_last(., 2) via slices

    # --- residual + LayerNorm(eps=1e-6), two-pass variance ---
    y = x_f32 + attn_scr[...]
    mu = jnp.mean(y, axis=-1, keepdims=True)
    yc = y - mu
    var = jnp.mean(yc * yc, axis=-1, keepdims=True)
    yn = yc * jax.lax.rsqrt(var + LN_EPS)
    yn = yn * gamma_ref[...] + beta_ref[...]

    # --- final linear head ---
    out = jnp.dot(yn.astype(MXU_DTYPE), wl_ref[...],
                  preferred_element_type=jnp.float32) + bl_ref[...]
    o_ref[...] = out.reshape(B, S, D).astype(o_ref.dtype)


def simple_self_attention_block(x, kparams):
    B, S, D = x.shape

    x_spec = pl.BlockSpec((B, S, D), lambda i: (0, 0, 0))

    def full2d(r, c):
        return pl.BlockSpec((r, c), lambda i: (0, 0))

    return pl.pallas_call(
        _attn_block_kernel,
        out_shape=jax.ShapeDtypeStruct((B, S, D), x.dtype),
        grid=(1,),
        in_specs=[x_spec,
                  full2d(D, 3 * D),   # wqkv (bf16)
                  full2d(1, 3 * D),   # bqkv (f32)
                  full2d(D, D),       # wl   (bf16)
                  full2d(1, D),       # bl
                  full2d(1, D),       # gamma
                  full2d(1, D)],      # beta
        out_specs=x_spec,
        scratch_shapes=[pltpu.VMEM((B * S, D), jnp.float32)],    # attention output accumulator
        compiler_params=pltpu.CompilerParams(dimension_semantics=("arbitrary",)),
    )(x, kparams["wqkv"], kparams["bqkv"], kparams["wl"], kparams["bl"],
      kparams["gamma"], kparams["beta"])


# ------------------ parameter preparation (done ONCE, outside the hot path) ------------------
def prepare_kernel_params(params):
    """Fuse q|k|v weights/biases; pre-cast matmul weights to the MXU operand dtype."""
    wqkv = jnp.concatenate([params["wq"], params["wk"], params["wv"]], axis=1)   # (D, 3D)
    bqkv = jnp.concatenate([params["bq"], params["bk"], params["bv"]], axis=1)   # (1, 3D)
    return {
        "wqkv": wqkv.astype(MXU_DTYPE),
        "bqkv": bqkv.astype(jnp.float32),
        "wl": params["wl"].astype(MXU_DTYPE),
        "bl": params["bl"].astype(jnp.float32),
        "gamma": params["gamma"].astype(jnp.float32),
        "beta": params["beta"].astype(jnp.float32),
    }


# ------------------ pure-JAX reference (PyTorch forward, mirrored MXU input precision) -------
def reference_forward(x, params):
    B, S, D = x.shape
    H, hd = NUM_HEADS, D // NUM_HEADS
    f32 = jnp.float32

    def lin(a, w, b):   # bf16 MXU operands, f32 accumulation (same policy as the kernel)
        return jnp.dot(a.astype(MXU_DTYPE), w.astype(MXU_DTYPE),
                       preferred_element_type=f32) + b

    q = lin(x, params["wq"], params["bq"]).reshape(B, S, H, hd).transpose(0, 2, 1, 3)
    k = lin(x, params["wk"], params["bk"]).reshape(B, S, H, hd).transpose(0, 2, 1, 3)
    v = lin(x, params["wv"], params["bv"]).reshape(B, S, H, hd).transpose(0, 2, 1, 3)

    s = jnp.einsum("bhqd,bhkd->bhqk", q.astype(MXU_DTYPE), k.astype(MXU_DTYPE),
                   preferred_element_type=f32) * ATTN_SCALE
    s = s - jnp.max(s, axis=-1, keepdims=True)
    e = jnp.exp(s)
    p = e / jnp.sum(e, axis=-1, keepdims=True)
    attn = jnp.einsum("bhqk,bhkd->bhqd", p.astype(MXU_DTYPE), v.astype(MXU_DTYPE),
                      preferred_element_type=f32)
    attn = attn.transpose(0, 2, 1, 3).reshape(B, S, D)

    y = x + attn
    mu = jnp.mean(y, axis=-1, keepdims=True)
    var = jnp.mean((y - mu) ** 2, axis=-1, keepdims=True)
    yn = (y - mu) * jax.lax.rsqrt(var + LN_EPS) * params["gamma"] + params["beta"]
    return lin(yn, params["wl"], params["bl"])


def make_params(key, d):
    # Deterministic init mirroring the module's 'random' mode (xavier-normal weights, normal
    # biases, linear-head bias std=1e-6, layernorm weight=1 / bias=0).  Weights are (D_in, D_out).
    ks = jax.random.split(key, 8)
    xavier_std = (2.0 / (d + d)) ** 0.5
    return {
        "wq": jax.random.normal(ks[0], (d, d), jnp.float32) * xavier_std,
        "wk": jax.random.normal(ks[1], (d, d), jnp.float32) * xavier_std,
        "wv": jax.random.normal(ks[2], (d, d), jnp.float32) * xavier_std,
        "wl": jax.random.normal(ks[3], (d, d), jnp.float32) * xavier_std,
        "bq": jax.random.normal(ks[4], (1, d), jnp.float32),
        "bk": jax.random.normal(ks[5], (1, d), jnp.float32),
        "bv": jax.random.normal(ks[6], (1, d), jnp.float32),
        "bl": jax.random.normal(ks[7], (1, d), jnp.float32) * 1e-6,
        "gamma": jnp.ones((1, d), jnp.float32),
        "beta": jnp.zeros((1, d), jnp.float32),
    }


if __name__ == "__main__":
    key = jax.random.PRNGKey(0)
    k_x, k_p = jax.random.split(key)
    x = jax.random.normal(k_x, (BATCH, SEQ_LEN, D_MODEL), jnp.float32)
    params = make_params(k_p, D_MODEL)
    kparams = prepare_kernel_params(params)

    out = simple_self_attention_block(x, kparams)
    out = jax.block_until_ready(out)

    ref = reference_forward(x, params)
    assert out.shape == (BATCH, SEQ_LEN, D_MODEL)
    max_err = jnp.max(jnp.abs(out - ref))
    # Kernel and reference share the exact same precision policy (bf16 MXU operands, f32
    # accumulation, exact softmax divide, two-pass LN variance) -> only summation-order noise.
    assert jnp.allclose(out, ref, rtol=2e-3, atol=2e-3), f"mismatch vs reference (max|err|={max_err})"

    print("KERNEL_OK")
</pallas_src>

<mosaic_0001>
module attributes {stable_mosaic.version = 11 : i64} {
  func.func @_attn_block_kernel(%arg0: i32, %arg1: memref<2x64x128xf32, #tpu.memory_space<vmem>>, %arg2: memref<128x384xbf16, #tpu.memory_space<vmem>>, %arg3: memref<1x384xf32, #tpu.memory_space<vmem>>, %arg4: memref<128x128xbf16, #tpu.memory_space<vmem>>, %arg5: memref<1x128xf32, #tpu.memory_space<vmem>>, %arg6: memref<1x128xf32, #tpu.memory_space<vmem>>, %arg7: memref<1x128xf32, #tpu.memory_space<vmem>>, %arg8: memref<2x64x128xf32, #tpu.memory_space<vmem>>, %arg9: memref<128x128xf32, #tpu.memory_space<vmem>>) attributes {dimension_semantics = [#tpu.dimension_semantics<arbitrary>], iteration_bounds = array<i64: 1>, scalar_prefetch = 0 : i64, scratch_operands = 1 : i64, tpu.core_type = #tpu.core_type<tc>, window_params = [{pipeline_mode = #tpu.pipeline_mode<synchronous>, transform_indices = @transform_0, window_bounds = array<i64: 2, 64, 128>}, {pipeline_mode = #tpu.pipeline_mode<synchronous>, transform_indices = @transform_1, window_bounds = array<i64: 128, 384>}, {pipeline_mode = #tpu.pipeline_mode<synchronous>, transform_indices = @transform_2, window_bounds = array<i64: 1, 384>}, {pipeline_mode = #tpu.pipeline_mode<synchronous>, transform_indices = @transform_3, window_bounds = array<i64: 128, 128>}, {pipeline_mode = #tpu.pipeline_mode<synchronous>, transform_indices = @transform_4, window_bounds = array<i64: 1, 128>}, {pipeline_mode = #tpu.pipeline_mode<synchronous>, transform_indices = @transform_5, window_bounds = array<i64: 1, 128>}, {pipeline_mode = #tpu.pipeline_mode<synchronous>, transform_indices = @transform_6, window_bounds = array<i64: 1, 128>}, {pipeline_mode = #tpu.pipeline_mode<synchronous>, transform_indices = @transform_7, window_bounds = array<i64: 2, 64, 128>}]} {
    %c0 = arith.constant 0 : index
    %c0_0 = arith.constant 0 : index
    %c0_1 = arith.constant 0 : index
    %0 = vector.load %arg1[%c0, %c0_0, %c0_1] : memref<2x64x128xf32, #tpu.memory_space<vmem>>, vector<2x64x128xf32>
    %1 = vector.shape_cast %0 : vector<2x64x128xf32> to vector<128x128xf32>
    %2 = arith.truncf %1 : vector<128x128xf32> to vector<128x128xbf16>
    %c0_2 = arith.constant 0 : index
    %c0_3 = arith.constant 0 : index
    %3 = vector.load %arg2[%c0_2, %c0_3] : memref<128x384xbf16, #tpu.memory_space<vmem>>, vector<128x384xbf16>
    %cst = arith.constant dense<0.000000e+00> : vector<128x384xf32>
    %4 = tpu.matmul %2, %3, %cst {dimension_numbers = #tpu.dot_dimension_numbers<[1], [0], [0], [1], [0, 0, 1, 1], [], []>} : vector<128x128xbf16>, vector<128x384xbf16>, vector<128x384xf32> -> vector<128x384xf32>
    %c0_4 = arith.constant 0 : index
    %c0_5 = arith.constant 0 : index
    %5 = vector.load %arg3[%c0_4, %c0_5] : memref<1x384xf32, #tpu.memory_space<vmem>>, vector<1x384xf32>
    %6 = vector.broadcast %5 : vector<1x384xf32> to vector<128x384xf32>
    %7 = arith.addf %4, %6 : vector<128x384xf32>
    %8 = vector.extract_strided_slice %7 {offsets = [0, 0], sizes = [128, 128], strides = [1, 1]} : vector<128x384xf32> to vector<128x128xf32>
    %9 = vector.shape_cast %8 : vector<128x128xf32> to vector<2x64x128xf32>
    %10 = arith.truncf %9 : vector<2x64x128xf32> to vector<2x64x128xbf16>
    %11 = vector.extract_strided_slice %7 {offsets = [0, 128], sizes = [128, 128], strides = [1, 1]} : vector<128x384xf32> to vector<128x128xf32>
    %12 = vector.shape_cast %11 : vector<128x128xf32> to vector<2x64x128xf32>
    %13 = arith.truncf %12 : vector<2x64x128xf32> to vector<2x64x128xbf16>
    %14 = vector.extract_strided_slice %7 {offsets = [0, 256], sizes = [128, 128], strides = [1, 1]} : vector<128x384xf32> to vector<128x128xf32>
    %15 = vector.shape_cast %14 : vector<128x128xf32> to vector<2x64x128xf32>
    %16 = arith.truncf %15 : vector<2x64x128xf32> to vector<2x64x128xbf16>
    %17 = vector.extract_strided_slice %10 {offsets = [0, 0, 0], sizes = [2, 64, 32], strides = [1, 1, 1]} : vector<2x64x128xbf16> to vector<2x64x32xbf16>
    %18 = vector.extract_strided_slice %13 {offsets = [0, 0, 0], sizes = [2, 64, 32], strides = [1, 1, 1]} : vector<2x64x128xbf16> to vector<2x64x32xbf16>
    %19 = vector.extract_strided_slice %16 {offsets = [0, 0, 0], sizes = [2, 64, 32], strides = [1, 1, 1]} : vector<2x64x128xbf16> to vector<2x64x32xbf16>
    "tpu.trace_start"() <{level = 10 : i32, message = "bqd,bkd->bqk"}> : () -> ()
    %cst_6 = arith.constant dense<0.000000e+00> : vector<2x64x64xf32>
    %20 = tpu.matmul %17, %18, %cst_6 {dimension_numbers = #tpu.dot_dimension_numbers<[2], [2], [1], [1], [0, 0, 0, 1, 1, 1], [0], [0]>} : vector<2x64x32xbf16>, vector<2x64x32xbf16>, vector<2x64x64xf32> -> vector<2x64x64xf32>
    "tpu.trace_stop"() : () -> ()
    %cst_7 = arith.constant 0.176776692 : f32
    %21 = vector.broadcast %cst_7 : f32 to vector<2x64x64xf32>
    %22 = arith.mulf %20, %21 : vector<2x64x64xf32>
    %cst_8 = arith.constant dense<0xFF800000> : vector<2x64xf32>
    %23 = vector.multi_reduction <maximumf>, %22, %cst_8 [2] : vector<2x64x64xf32> to vector<2x64xf32>
    %24 = vector.shape_cast %23 : vector<2x64xf32> to vector<2x64x1xf32>
    %25 = vector.broadcast %24 : vector<2x64x1xf32> to vector<2x64x64xf32>
    %26 = arith.subf %22, %25 : vector<2x64x64xf32>
    %27 = math.exp %26 : vector<2x64x64xf32>
    %cst_9 = arith.constant dense<0.000000e+00> : vector<2x64xf32>
    %28 = vector.multi_reduction <add>, %27, %cst_9 [2] : vector<2x64x64xf32> to vector<2x64xf32>
    %29 = vector.shape_cast %28 : vector<2x64xf32> to vector<2x64x1xf32>
    %30 = vector.broadcast %29 : vector<2x64x1xf32> to vector<2x64x64xf32>
    %31 = arith.divf %27, %30 : vector<2x64x64xf32>
    %32 = arith.truncf %31 : vector<2x64x64xf32> to vector<2x64x64xbf16>
    "tpu.trace_start"() <{level = 10 : i32, message = "bqk,bkd->bqd"}> : () -> ()
    %cst_10 = arith.constant dense<0.000000e+00> : vector<2x64x32xf32>
    %33 = tpu.matmul %32, %19, %cst_10 {dimension_numbers = #tpu.dot_dimension_numbers<[2], [1], [1], [2], [0, 0, 0, 1, 1, 2], [0], [0]>} : vector<2x64x64xbf16>, vector<2x64x32xbf16>, vector<2x64x32xf32> -> vector<2x64x32xf32>
    "tpu.trace_stop"() : () -> ()
    %34 = vector.shape_cast %33 : vector<2x64x32xf32> to vector<128x32xf32>
    %c0_11 = arith.constant 0 : index
    %c0_12 = arith.constant 0 : index
    %35 = vector.load %arg9[%c0_11, %c0_12] : memref<128x128xf32, #tpu.memory_space<vmem>>, vector<128x32xf32>
    tpu.vector_store %arg9[%c0_11, %c0_12], %34 {strides = array<i32>} : memref<128x128xf32, #tpu.memory_space<vmem>>, vector<128x32xf32>,
    %36 = vector.extract_strided_slice %10 {offsets = [0, 0, 32], sizes = [2, 64, 32], strides = [1, 1, 1]} : vector<2x64x128xbf16> to vector<2x64x32xbf16>
    %37 = vector.extract_strided_slice %13 {offsets = [0, 0, 32], sizes = [2, 64, 32], strides = [1, 1, 1]} : vector<2x64x128xbf16> to vector<2x64x32xbf16>
    %38 = vector.extract_strided_slice %16 {offsets = [0, 0, 32], sizes = [2, 64, 32], strides = [1, 1, 1]} : vector<2x64x128xbf16> to vector<2x64x32xbf16>
    "tpu.trace_start"() <{level = 10 : i32, message = "bqd,bkd->bqk"}> : () -> ()
    %cst_13 = arith.constant dense<0.000000e+00> : vector<2x64x64xf32>
    %39 = tpu.matmul %36, %37, %cst_13 {dimension_numbers = #tpu.dot_dimension_numbers<[2], [2], [1], [1], [0, 0, 0, 1, 1, 1], [0], [0]>} : vector<2x64x32xbf16>, vector<2x64x32xbf16>, vector<2x64x64xf32> -> vector<2x64x64xf32>
    "tpu.trace_stop"() : () -> ()
    %cst_14 = arith.constant 0.176776692 : f32
    %40 = vector.broadcast %cst_14 : f32 to vector<2x64x64xf32>
    %41 = arith.mulf %39, %40 : vector<2x64x64xf32>
    %cst_15 = arith.constant dense<0xFF800000> : vector<2x64xf32>
    %42 = vector.multi_reduction <maximumf>, %41, %cst_15 [2] : vector<2x64x64xf32> to vector<2x64xf32>
    %43 = vector.shape_cast %42 : vector<2x64xf32> to vector<2x64x1xf32>
    %44 = vector.broadcast %43 : vector<2x64x1xf32> to vector<2x64x64xf32>
    %45 = arith.subf %41, %44 : vector<2x64x64xf32>
    %46 = math.exp %45 : vector<2x64x64xf32>
    %cst_16 = arith.constant dense<0.000000e+00> : vector<2x64xf32>
    %47 = vector.multi_reduction <add>, %46, %cst_16 [2] : vector<2x64x64xf32> to vector<2x64xf32>
    %48 = vector.shape_cast %47 : vector<2x64xf32> to vector<2x64x1xf32>
    %49 = vector.broadcast %48 : vector<2x64x1xf32> to vector<2x64x64xf32>
    %50 = arith.divf %46, %49 : vector<2x64x64xf32>
    %51 = arith.truncf %50 : vector<2x64x64xf32> to vector<2x64x64xbf16>
    "tpu.trace_start"() <{level = 10 : i32, message = "bqk,bkd->bqd"}> : () -> ()
    %cst_17 = arith.constant dense<0.000000e+00> : vector<2x64x32xf32>
    %52 = tpu.matmul %51, %38, %cst_17 {dimension_numbers = #tpu.dot_dimension_numbers<[2], [1], [1], [2], [0, 0, 0, 1, 1, 2], [0], [0]>} : vector<2x64x64xbf16>, vector<2x64x32xbf16>, vector<2x64x32xf32> -> vector<2x64x32xf32>
    "tpu.trace_stop"() : () -> ()
    %53 = vector.shape_cast %52 : vector<2x64x32xf32> to vector<128x32xf32>
    %c0_18 = arith.constant 0 : index
    %c32 = arith.constant 32 : index
    %54 = vector.load %arg9[%c0_18, %c32] : memref<128x128xf32, #tpu.memory_space<vmem>>, vector<128x32xf32>
    tpu.vector_store %arg9[%c0_18, %c32], %53 {strides = array<i32>} : memref<128x128xf32, #tpu.memory_space<vmem>>, vector<128x32xf32>,
    %55 = vector.extract_strided_slice %10 {offsets = [0, 0, 64], sizes = [2, 64, 32], strides = [1, 1, 1]} : vector<2x64x128xbf16> to vector<2x64x32xbf16>
    %56 = vector.extract_strided_slice %13 {offsets = [0, 0, 64], sizes = [2, 64, 32], strides = [1, 1, 1]} : vector<2x64x128xbf16> to vector<2x64x32xbf16>
    %57 = vector.extract_strided_slice %16 {offsets = [0, 0, 64], sizes = [2, 64, 32], strides = [1, 1, 1]} : vector<2x64x128xbf16> to vector<2x64x32xbf16>
    "tpu.trace_start"() <{level = 10 : i32, message = "bqd,bkd->bqk"}> : () -> ()
    %cst_19 = arith.constant dense<0.000000e+00> : vector<2x64x64xf32>
    %58 = tpu.matmul %55, %56, %cst_19 {dimension_numbers = #tpu.dot_dimension_numbers<[2], [2], [1], [1], [0, 0, 0, 1, 1, 1], [0], [0]>} : vector<2x64x32xbf16>, vector<2x64x32xbf16>, vector<2x64x64xf32> -> vector<2x64x64xf32>
    "tpu.trace_stop"() : () -> ()
    %cst_20 = arith.constant 0.176776692 : f32
    %59 = vector.broadcast %cst_20 : f32 to vector<2x64x64xf32>
    %60 = arith.mulf %58, %59 : vector<2x64x64xf32>
    %cst_21 = arith.constant dense<0xFF800000> : vector<2x64xf32>
    %61 = vector.multi_reduction <maximumf>, %60, %cst_21 [2] : vector<2x64x64xf32> to vector<2x64xf32>
    %62 = vector.shape_cast %61 : vector<2x64xf32> to vector<2x64x1xf32>
    %63 = vector.broadcast %62 : vector<2x64x1xf32> to vector<2x64x64xf32>
    %64 = arith.subf %60, %63 : vector<2x64x64xf32>
    %65 = math.exp %64 : vector<2x64x64xf32>
    %cst_22 = arith.constant dense<0.000000e+00> : vector<2x64xf32>
    %66 = vector.multi_reduction <add>, %65, %cst_22 [2] : vector<2x64x64xf32> to vector<2x64xf32>
    %67 = vector.shape_cast %66 : vector<2x64xf32> to vector<2x64x1xf32>
    %68 = vector.broadcast %67 : vector<2x64x1xf32> to vector<2x64x64xf32>
    %69 = arith.divf %65, %68 : vector<2x64x64xf32>
    %70 = arith.truncf %69 : vector<2x64x64xf32> to vector<2x64x64xbf16>
    "tpu.trace_start"() <{level = 10 : i32, message = "bqk,bkd->bqd"}> : () -> ()
    %cst_23 = arith.constant dense<0.000000e+00> : vector<2x64x32xf32>
    %71 = tpu.matmul %70, %57, %cst_23 {dimension_numbers = #tpu.dot_dimension_numbers<[2], [1], [1], [2], [0, 0, 0, 1, 1, 2], [0], [0]>} : vector<2x64x64xbf16>, vector<2x64x32xbf16>, vector<2x64x32xf32> -> vector<2x64x32xf32>
    "tpu.trace_stop"() : () -> ()
    %72 = vector.shape_cast %71 : vector<2x64x32xf32> to vector<128x32xf32>
    %c0_24 = arith.constant 0 : index
    %c64 = arith.constant 64 : index
    %73 = vector.load %arg9[%c0_24, %c64] : memref<128x128xf32, #tpu.memory_space<vmem>>, vector<128x32xf32>
    tpu.vector_store %arg9[%c0_24, %c64], %72 {strides = array<i32>} : memref<128x128xf32, #tpu.memory_space<vmem>>, vector<128x32xf32>,
    %74 = vector.extract_strided_slice %10 {offsets = [0, 0, 96], sizes = [2, 64, 32], strides = [1, 1, 1]} : vector<2x64x128xbf16> to vector<2x64x32xbf16>
    %75 = vector.extract_strided_slice %13 {offsets = [0, 0, 96], sizes = [2, 64, 32], strides = [1, 1, 1]} : vector<2x64x128xbf16> to vector<2x64x32xbf16>
    %76 = vector.extract_strided_slice %16 {offsets = [0, 0, 96], sizes = [2, 64, 32], strides = [1, 1, 1]} : vector<2x64x128xbf16> to vector<2x64x32xbf16>
    "tpu.trace_start"() <{level = 10 : i32, message = "bqd,bkd->bqk"}> : () -> ()
    %cst_25 = arith.constant dense<0.000000e+00> : vector<2x64x64xf32>
    %77 = tpu.matmul %74, %75, %cst_25 {dimension_numbers = #tpu.dot_dimension_numbers<[2], [2], [1], [1], [0, 0, 0, 1, 1, 1], [0], [0]>} : vector<2x64x32xbf16>, vector<2x64x32xbf16>, vector<2x64x64xf32> -> vector<2x64x64xf32>
    "tpu.trace_stop"() : () -> ()
    %cst_26 = arith.constant 0.176776692 : f32
    %78 = vector.broadcast %cst_26 : f32 to vector<2x64x64xf32>
    %79 = arith.mulf %77, %78 : vector<2x64x64xf32>
    %cst_27 = arith.constant dense<0xFF800000> : vector<2x64xf32>
    %80 = vector.multi_reduction <maximumf>, %79, %cst_27 [2] : vector<2x64x64xf32> to vector<2x64xf32>
    %81 = vector.shape_cast %80 : vector<2x64xf32> to vector<2x64x1xf32>
    %82 = vector.broadcast %81 : vector<2x64x1xf32> to vector<2x64x64xf32>
    %83 = arith.subf %79, %82 : vector<2x64x64xf32>
    %84 = math.exp %83 : vector<2x64x64xf32>
    %cst_28 = arith.constant dense<0.000000e+00> : vector<2x64xf32>
    %85 = vector.multi_reduction <add>, %84, %cst_28 [2] : vector<2x64x64xf32> to vector<2x64xf32>
    %86 = vector.shape_cast %85 : vector<2x64xf32> to vector<2x64x1xf32>
    %87 = vector.broadcast %86 : vector<2x64x1xf32> to vector<2x64x64xf32>
    %88 = arith.divf %84, %87 : vector<2x64x64xf32>
    %89 = arith.truncf %88 : vector<2x64x64xf32> to vector<2x64x64xbf16>
    "tpu.trace_start"() <{level = 10 : i32, message = "bqk,bkd->bqd"}> : () -> ()
    %cst_29 = arith.constant dense<0.000000e+00> : vector<2x64x32xf32>
    %90 = tpu.matmul %89, %76, %cst_29 {dimension_numbers = #tpu.dot_dimension_numbers<[2], [1], [1], [2], [0, 0, 0, 1, 1, 2], [0], [0]>} : vector<2x64x64xbf16>, vector<2x64x32xbf16>, vector<2x64x32xf32> -> vector<2x64x32xf32>
    "tpu.trace_stop"() : () -> ()
    %91 = vector.shape_cast %90 : vector<2x64x32xf32> to vector<128x32xf32>
    %c0_30 = arith.constant 0 : index
    %c96 = arith.constant 96 : index
    %92 = vector.load %arg9[%c0_30, %c96] : memref<128x128xf32, #tpu.memory_space<vmem>>, vector<128x32xf32>
    tpu.vector_store %arg9[%c0_30, %c96], %91 {strides = array<i32>} : memref<128x128xf32, #tpu.memory_space<vmem>>, vector<128x32xf32>,
    %c0_31 = arith.constant 0 : index
    %c0_32 = arith.constant 0 : index
    %93 = vector.load %arg9[%c0_31, %c0_32] : memref<128x128xf32, #tpu.memory_space<vmem>>, vector<128x128xf32>
    %94 = arith.addf %1, %93 : vector<128x128xf32>
    %cst_33 = arith.constant dense<0.000000e+00> : vector<128xf32>
    %95 = vector.multi_reduction <add>, %94, %cst_33 [1] : vector<128x128xf32> to vector<128xf32>
    %96 = vector.shape_cast %95 : vector<128xf32> to vector<128x1xf32>
    %cst_34 = arith.constant 1.280000e+02 : f32
    %97 = vector.broadcast %cst_34 : f32 to vector<128x1xf32>
    %98 = arith.divf %96, %97 : vector<128x1xf32>
    %99 = vector.broadcast %98 : vector<128x1xf32> to vector<128x128xf32>
    %100 = arith.subf %94, %99 : vector<128x128xf32>
    %101 = arith.mulf %100, %100 : vector<128x128xf32>
    %cst_35 = arith.constant dense<0.000000e+00> : vector<128xf32>
    %102 = vector.multi_reduction <add>, %101, %cst_35 [1] : vector<128x128xf32> to vector<128xf32>
    %103 = vector.shape_cast %102 : vector<128xf32> to vector<128x1xf32>
    %cst_36 = arith.constant 1.280000e+02 : f32
    %104 = vector.broadcast %cst_36 : f32 to vector<128x1xf32>
    %105 = arith.divf %103, %104 : vector<128x1xf32>
    %cst_37 = arith.constant 9.99999997E-7 : f32
    %106 = vector.broadcast %cst_37 : f32 to vector<128x1xf32>
    %107 = arith.addf %105, %106 : vector<128x1xf32>
    %108 = math.rsqrt %107 : vector<128x1xf32>
    %109 = vector.broadcast %108 : vector<128x1xf32> to vector<128x128xf32>
    %110 = arith.mulf %100, %109 : vector<128x128xf32>
    %c0_38 = arith.constant 0 : index
    %c0_39 = arith.constant 0 : index
    %111 = vector.load %arg6[%c0_38, %c0_39] : memref<1x128xf32, #tpu.memory_space<vmem>>, vector<1x128xf32>
    %112 = vector.broadcast %111 : vector<1x128xf32> to vector<128x128xf32>
    %113 = arith.mulf %110, %112 : vector<128x128xf32>
    %c0_40 = arith.constant 0 : index
    %c0_41 = arith.constant 0 : index
    %114 = vector.load %arg7[%c0_40, %c0_41] : memref<1x128xf32, #tpu.memory_space<vmem>>, vector<1x128xf32>
    %115 = vector.broadcast %114 : vector<1x128xf32> to vector<128x128xf32>
    %116 = arith.addf %113, %115 : vector<128x128xf32>
    %117 = arith.truncf %116 : vector<128x128xf32> to vector<128x128xbf16>
    %c0_42 = arith.constant 0 : index
    %c0_43 = arith.constant 0 : index
    %118 = vector.load %arg4[%c0_42, %c0_43] : memref<128x128xbf16, #tpu.memory_space<vmem>>, vector<128x128xbf16>
    %cst_44 = arith.constant dense<0.000000e+00> : vector<128x128xf32>
    %119 = tpu.matmul %117, %118, %cst_44 {dimension_numbers = #tpu.dot_dimension_numbers<[1], [0], [0], [1], [0, 0, 1, 1], [], []>} : vector<128x128xbf16>, vector<128x128xbf16>, vector<128x128xf32> -> vector<128x128xf32>
    %c0_45 = arith.constant 0 : index
    %c0_46 = arith.constant 0 : index
    %120 = vector.load %arg5[%c0_45, %c0_46] : memref<1x128xf32, #tpu.memory_space<vmem>>, vector<1x128xf32>
    %121 = vector.broadcast %120 : vector<1x128xf32> to vector<128x128xf32>
    %122 = arith.addf %119, %121 : vector<128x128xf32>
    %123 = vector.shape_cast %122 : vector<128x128xf32> to vector<2x64x128xf32>
    %c0_47 = arith.constant 0 : index
    %c0_48 = arith.constant 0 : index
    %c0_49 = arith.constant 0 : index
    %124 = vector.load %arg8[%c0_47, %c0_48, %c0_49] : memref<2x64x128xf32, #tpu.memory_space<vmem>>, vector<2x64x128xf32>
    tpu.vector_store %arg8[%c0_47, %c0_48, %c0_49], %123 {strides = array<i32>} : memref<2x64x128xf32, #tpu.memory_space<vmem>>, vector<2x64x128xf32>,
    return
  }
  func.func @transform_0(%arg0: i32) -> (i32, i32, i32) {
    %c0_i32 = arith.constant 0 : i32
    %c0_i32_0 = arith.constant 0 : i32
    %c0_i32_1 = arith.constant 0 : i32
    %c0_i32_2 = arith.constant 0 : i32
    return %c0_i32, %c0_i32_0, %c0_i32_1 : i32, i32, i32
  }
  func.func @transform_1(%arg0: i32) -> (i32, i32) {
    %c0_i32 = arith.constant 0 : i32
    %c0_i32_0 = arith.constant 0 : i32
    %c0_i32_1 = arith.constant 0 : i32
    return %c0_i32, %c0_i32_0 : i32, i32
  }
  func.func @transform_2(%arg0: i32) -> (i32, i32) {
    %c0_i32 = arith.constant 0 : i32
    %c0_i32_0 = arith.constant 0 : i32
    %c0_i32_1 = arith.constant 0 : i32
    return %c0_i32, %c0_i32_0 : i32, i32
  }
  func.func @transform_3(%arg0: i32) -> (i32, i32) {
    %c0_i32 = arith.constant 0 : i32
    %c0_i32_0 = arith.constant 0 : i32
    %c0_i32_1 = arith.constant 0 : i32
    return %c0_i32, %c0_i32_0 : i32, i32
  }
  func.func @transform_4(%arg0: i32) -> (i32, i32) {
    %c0_i32 = arith.constant 0 : i32
    %c0_i32_0 = arith.constant 0 : i32
    %c0_i32_1 = arith.constant 0 : i32
    return %c0_i32, %c0_i32_0 : i32, i32
  }
  func.func @transform_5(%arg0: i32) -> (i32, i32) {
    %c0_i32 = arith.constant 0 : i32
    %c0_i32_0 = arith.constant 0 : i32
    %c0_i32_1 = arith.constant 0 : i32
    return %c0_i32, %c0_i32_0 : i32, i32
  }
  func.func @transform_6(%arg0: i32) -> (i32, i32) {
    %c0_i32 = arith.constant 0 : i32
    %c0_i32_0 = arith.constant 0 : i32
    %c0_i32_1 = arith.constant 0 : i32
    return %c0_i32, %c0_i32_0 : i32, i32
  }
  func.func @transform_7(%arg0: i32) -> (i32, i32, i32) {
    %c0_i32 = arith.constant 0 : i32
    %c0_i32_0 = arith.constant 0 : i32
    %c0_i32_1 = arith.constant 0 : i32
    %c0_i32_2 = arith.constant 0 : i32
    return %c0_i32, %c0_i32_0, %c0_i32_1 : i32, i32, i32
  }
}

</mosaic_0001>

<llo_original>
// kernel: tpu_custom_call.1
$region0: #{tpu_custom_call.1}
  #allocation0 [shape = 'u32[]', space=smem, size = 0x4, offset = 0x4, fixed_abs, tag = 'smem constant byte address 0x4 - core index']
  #allocation1 [shape = 'u32[144,128]{1,0:T(1,128)}', space=vmem, size = 0x12000, scoped, tag = 'internal scratch']
  #allocation2 [shape = 'f32[128,128]{1,0:T(8,128)}', space=vmem, size = 0x10000, scoped, tag = 'scratch operand']
  %s0 = inlined_call_operand.hbm [shape: f32[2,64,128], index: 0, kind: input, shape index: {}]
  %s1 = inlined_call_operand.hbm [shape: bf16[128,384], index: 1, kind: input, shape index: {}]
  %s2 = inlined_call_operand.vmem [shape: f32[1,384], index: 2, kind: input, shape index: {}]
  %s3 = inlined_call_operand.hbm [shape: bf16[128,128], index: 3, kind: input, shape index: {}]
  %s4 = inlined_call_operand.vmem [shape: f32[1,128], index: 4, kind: input, shape index: {}]
  %s5 = inlined_call_operand.vmem [shape: f32[1,128], index: 5, kind: input, shape index: {}]
  %s6 = inlined_call_operand.vmem [shape: f32[1,128], index: 6, kind: input, shape index: {}]
  %s7 = inlined_call_operand.hbm [shape: f32[2,64,128], index: 7, kind: output, shape index: {}]
  %s8 = sld [smem:[#allocation0]]
  $region50: #{tpu_custom_call.1} parent=0
    _
  %s10 = ssub.s32 1, %s8
  %s11 = scalar_select 0, %s10, %s8
  $region1: #{tpu_custom_call.1} parent=0
    #allocation3 [shape = 'u8[65536]{0}', space=vmem, size = 0x10000, scoped, tag = 'input window, operand 0, single buffered']
    #allocation4 [shape = 's32[1]{0}', space=sflag, size = 0x4, scoped, tag = 'scoped memory for tpu_custom_call.1']
    #allocation5 [shape = 's32[1]{0}', space=sflag, size = 0x4, scoped, tag = 'scoped memory for tpu_custom_call.1']
    #allocation6 [shape = 'u8[98304]{0}', space=vmem, size = 0x18000, scoped, tag = 'input window, operand 1, single buffered']
    #allocation7 [shape = 's32[1]{0}', space=sflag, size = 0x4, scoped, tag = 'scoped memory for tpu_custom_call.1']
    #allocation8 [shape = 'u8[32768]{0}', space=vmem, size = 0x8000, scoped, tag = 'input window, operand 3, single buffered']
    #allocation9 [shape = 'u8[65536]{0}', space=vmem, size = 0x10000, scoped, tag = 'output window, operand 0, single buffered']
    %12 = vsyncpa [#allocation4], 0
    %13 = vsyncpa [#allocation7], 0
    %14 = vsyncpa [#allocation5], 0
    // Predicated region
    $region2: #{tpu_custom_call.1} parent=1 // pred_check
      _
    $region3: #{tpu_custom_call.1} parent=1 // pred_check_branch
      %16 = sbr.rel (0) target = $region5
    $region4: #{tpu_custom_call.1} parent=1 // pred_region
      %s18 = ssub.s32 2048, 2048
      %19 = vsyncadd [#allocation4], %s18
      %s20 = sshll.u32 [#allocation3], 4
      %s21 = int_to_ptr.vmem [resolvable:$true] %s20
      %26 = dma.hbm_to_vmem [thread:$0]  %s0, 2048, %s21, [#allocation4], 128, 128, 8
    $region5: #{tpu_custom_call.1} parent=1 // pred_fallthru
      _
    // Predicated region
    $region6: #{tpu_custom_call.1} parent=1 // pred_check
      _
    $region7: #{tpu_custom_call.1} parent=1 // pred_check_branch
      %28 = sbr.rel (0) target = $region9
    $region8: #{tpu_custom_call.1} parent=1 // pred_region
      %s30 = ssub.s32 3072, 3072
      %31 = vsyncadd [#allocation7], %s30
      %s32 = sshll.u32 [#allocation6], 4
      %s33 = int_to_ptr.vmem [resolvable:$true] %s32
      %38 = dma.hbm_to_vmem [thread:$0]  %s1, 3072, %s33, [#allocation7], 192, 192, 12
    $region9: #{tpu_custom_call.1} parent=1 // pred_fallthru
      _
    // Predicated region
    $region10: #{tpu_custom_call.1} parent=1 // pred_check
      _
    $region11: #{tpu_custom_call.1} parent=1 // pred_check_branch
      %40 = sbr.rel (0) target = $region13
    $region12: #{tpu_custom_call.1} parent=1 // pred_region
      _
    $region13: #{tpu_custom_call.1} parent=1 // pred_fallthru
      _
    // Predicated region
    $region14: #{tpu_custom_call.1} parent=1 // pred_check
      _
    $region15: #{tpu_custom_call.1} parent=1 // pred_check_branch
      %42 = sbr.rel (0) target = $region17
    $region16: #{tpu_custom_call.1} parent=1 // pred_region
      %s44 = ssub.s32 1024, 1024
      %45 = vsyncadd [#allocation7], %s44
      %s46 = sshll.u32 [#allocation8], 4
      %s47 = int_to_ptr.vmem [resolvable:$true] %s46
      %52 = dma.hbm_to_vmem [thread:$0]  %s3, 1024, %s47, [#allocation7], 64, 64, 4
    $region17: #{tpu_custom_call.1} parent=1 // pred_fallthru
      _
    // Predicated region
    $region18: #{tpu_custom_call.1} parent=1 // pred_check
      _
    $region19: #{tpu_custom_call.1} parent=1 // pred_check_branch
      %54 = sbr.rel (0) target = $region21
    $region20: #{tpu_custom_call.1} parent=1 // pred_region
      _
    $region21: #{tpu_custom_call.1} parent=1 // pred_fallthru
      _
    // Predicated region
    $region22: #{tpu_custom_call.1} parent=1 // pred_check
      _
    $region23: #{tpu_custom_call.1} parent=1 // pred_check_branch
      %56 = sbr.rel (0) target = $region25
    $region24: #{tpu_custom_call.1} parent=1 // pred_region
      _
    $region25: #{tpu_custom_call.1} parent=1 // pred_fallthru
      _
    // Predicated region
    $region26: #{tpu_custom_call.1} parent=1 // pred_check
      _
    $region27: #{tpu_custom_call.1} parent=1 // pred_check_branch
      %58 = sbr.rel (0) target = $region29
    $region28: #{tpu_custom_call.1} parent=1 // pred_region
      _
    $region29: #{tpu_custom_call.1} parent=1 // pred_fallthru
      _
    // Predicated region
    $region30: #{tpu_custom_call.1} parent=1 // pred_check
      _
    $region31: #{tpu_custom_call.1} parent=1 // pred_check_branch
      %60 = sbr.rel (0) target = $region33
    $region32: #{tpu_custom_call.1} parent=1 // pred_region
      %61 = dma.done [#allocation4], 2048
    $region33: #{tpu_custom_call.1} parent=1 // pred_fallthru
      _
    // Predicated region
    $region34: #{tpu_custom_call.1} parent=1 // pred_check
      _
    $region35: #{tpu_custom_call.1} parent=1 // pred_check_branch
      %63 = sbr.rel (0) target = $region37
    $region36: #{tpu_custom_call.1} parent=1 // pred_region
      %64 = dma.done [#allocation7], 3072
    $region37: #{tpu_custom_call.1} parent=1 // pred_fallthru
      _
    // Predicated region
    $region38: #{tpu_custom_call.1} parent=1 // pred_check
      _
    $region39: #{tpu_custom_call.1} parent=1 // pred_check_branch
      %66 = sbr.rel (0) target = $region41
    $region40: #{tpu_custom_call.1} parent=1 // pred_region
      %67 = dma.done [#allocation7], 1024
    $region41: #{tpu_custom_call.1} parent=1 // pred_fallthru
      _
    %v69 = vld [vmem:[#allocation3] sm:$0xff]
    %v70 = vld [vmem:[#allocation3 + $0x8] sm:$0xff]
    %v71 = vld [vmem:[#allocation3 + $0x10] sm:$0xff]
    %v72 = vld [vmem:[#allocation3 + $0x18] sm:$0xff]
    %v73 = vld [vmem:[#allocation3 + $0x20] sm:$0xff]
    %v74 = vld [vmem:[#allocation3 + $0x28] sm:$0xff]
    %v75 = vld [vmem:[#allocation3 + $0x30] sm:$0xff]
    %v76 = vld [vmem:[#allocation3 + $0x38] sm:$0xff]
    %v77 = vld [vmem:[#allocation3 + $0x40] sm:$0xff]
    %v78 = vld [vmem:[#allocation3 + $0x48] sm:$0xff]
    %v79 = vld [vmem:[#allocation3 + $0x50] sm:$0xff]
    %v80 = vld [vmem:[#allocation3 + $0x58] sm:$0xff]
    %v81 = vld [vmem:[#allocation3 + $0x60] sm:$0xff]
    %v82 = vld [vmem:[#allocation3 + $0x68] sm:$0xff]
    %v83 = vld [vmem:[#allocation3 + $0x70] sm:$0xff]
    %v84 = vld [vmem:[#allocation3 + $0x78] sm:$0xff]
    %v85 = vpack.c.bf16 %v70, %v69
    %v86 = vpack.c.bf16 %v72, %v71
    %v87 = vpack.c.bf16 %v74, %v73
    %v88 = vpack.c.bf16 %v76, %v75
    %v89 = vpack.c.bf16 %v78, %v77
    %v90 = vpack.c.bf16 %v80, %v79
    %v91 = vpack.c.bf16 %v82, %v81
    %v92 = vpack.c.bf16 %v84, %v83
    %v93 = vld [vmem:[#allocation6] sm:$0xff]
    %v94 = vld [vmem:[#allocation6 + $0x8] sm:$0xf]
    %v95 = vld [vmem:[#allocation6 + $0xc] sm:$0xff]
    %v96 = vld [vmem:[#allocation6 + $0x14] sm:$0xf]
    %v97 = vld [vmem:[#allocation6 + $0x18] sm:$0xff]
    %v98 = vld [vmem:[#allocation6 + $0x20] sm:$0xf]
    %v99 = vld [vmem:[#allocation6 + $0x24] sm:$0xff]
    %v100 = vld [vmem:[#allocation6 + $0x2c] sm:$0xf]
    %v101 = vld [vmem:[#allocation6 + $0x30] sm:$0xff]
    %v102 = vld [vmem:[#allocation6 + $0x38] sm:$0xf]
    %v103 = vld [vmem:[#allocation6 + $0x3c] sm:$0xff]
    %v104 = vld [vmem:[#allocation6 + $0x44] sm:$0xf]
    %v105 = vld [vmem:[#allocation6 + $0x48] sm:$0xff]
    %v106 = vld [vmem:[#allocation6 + $0x50] sm:$0xf]
    %v107 = vld [vmem:[#allocation6 + $0x54] sm:$0xff]
    %v108 = vld [vmem:[#allocation6 + $0x5c] sm:$0xf]
    %v109 = vld [vmem:[#allocation6 + $0x60] sm:$0xff]
    %v110 = vld [vmem:[#allocation6 + $0x68] sm:$0xf]
    %v111 = vld [vmem:[#allocation6 + $0x6c] sm:$0xff]
    %v112 = vld [vmem:[#allocation6 + $0x74] sm:$0xf]
    %v113 = vld [vmem:[#allocation6 + $0x78] sm:$0xff]
    %v114 = vld [vmem:[#allocation6 + $0x80] sm:$0xf]
    %v115 = vld [vmem:[#allocation6 + $0x84] sm:$0xff]
    %v116 = vld [vmem:[#allocation6 + $0x8c] sm:$0xf]
    %v117 = vld [vmem:[#allocation6 + $0x90] sm:$0xff]
    %v118 = vld [vmem:[#allocation6 + $0x98] sm:$0xf]
    %v119 = vld [vmem:[#allocation6 + $0x9c] sm:$0xff]
    %v120 = vld [vmem:[#allocation6 + $0xa4] sm:$0xf]
    %v121 = vld [vmem:[#allocation6 + $0xa8] sm:$0xff]
    %v122 = vld [vmem:[#allocation6 + $0xb0] sm:$0xf]
    %v123 = vld [vmem:[#allocation6 + $0xb4] sm:$0xff]
    %v124 = vld [vmem:[#allocation6 + $0xbc] sm:$0xf]
    %v125 = vld [vmem:[%s2] sm:$0x7]
    %v127 = vlaneseq
    %v128 = vshrl.u32 %v127, 7
    %v129 = vsub.s32 0, %v128
    %v130 = vrot.slane %v125, %v129
    %v131 = vlaneseq
    %v132 = vshrl.u32 %v131, 7
    %v133 = vsub.s32 1, %v132
    %v134 = vrot.slane %v125, %v133
    %v135 = vlaneseq
    %v136 = vshrl.u32 %v135, 7
    %v137 = vsub.s32 2, %v136
    %v138 = vrot.slane %v125, %v137
    %v174 = vunpack.c.l.b16 %v93
    %v175 = vunpack.c.h.b16 %v93
    %v176 = vunpack.c.l.b16 %v94
    %v177 = vunpack.c.l.b16 %v95
    %v178 = vunpack.c.h.b16 %v95
    %v179 = vunpack.c.l.b16 %v96
    %v180 = vunpack.c.l.b16 %v97
    %v181 = vunpack.c.h.b16 %v97
    %v182 = vunpack.c.l.b16 %v98
    %v183 = vunpack.c.l.b16 %v99
    %v184 = vunpack.c.h.b16 %v99
    %v185 = vunpack.c.l.b16 %v100
    %v186 = vunpack.c.l.b16 %v101
    %v187 = vunpack.c.h.b16 %v101
    %v188 = vunpack.c.l.b16 %v102
    %v189 = vunpack.c.l.b16 %v103
    %v190 = vunpack.c.h.b16 %v103
    %v191 = vunpack.c.l.b16 %v104
    %v192 = vunpack.c.l.b16 %v105
    %v193 = vunpack.c.h.b16 %v105
    %v194 = vunpack.c.l.b16 %v106
    %v195 = vunpack.c.l.b16 %v107
    %v196 = vunpack.c.h.b16 %v107
    %v197 = vunpack.c.l.b16 %v108
    %v198 = vunpack.c.l.b16 %v109
    %v199 = vunpack.c.h.b16 %v109
    %v200 = vunpack.c.l.b16 %v110
    %v201 = vunpack.c.l.b16 %v111
    %v202 = vunpack.c.h.b16 %v111
    %v203 = vunpack.c.l.b16 %v112
    %v204 = vunpack.c.l.b16 %v113
    %v205 = vunpack.c.h.b16 %v113
    %v206 = vunpack.c.l.b16 %v114
    %v207 = vunpack.c.l.b16 %v115
    %v208 = vunpack.c.h.b16 %v115
    %v209 = vunpack.c.l.b16 %v116
    %v210 = vunpack.c.l.b16 %v117
    %v211 = vunpack.c.h.b16 %v117
    %v212 = vunpack.c.l.b16 %v118
    %v213 = vunpack.c.l.b16 %v119
    %v214 = vunpack.c.h.b16 %v119
    %v215 = vunpack.c.l.b16 %v120
    %v216 = vunpack.c.l.b16 %v121
    %v217 = vunpack.c.h.b16 %v121
    %v218 = vunpack.c.l.b16 %v122
    %v219 = vunpack.c.l.b16 %v123
    %v220 = vunpack.c.h.b16 %v123
    %v221 = vunpack.c.l.b16 %v124
    %v222 = vpack.c.b16 %v177, %v174
    %v223 = vpack.c.b16 %v178, %v175
    %v224 = vpack.c.b16 %v179, %v176
    %v225 = vpack.c.b16 %v183, %v180
    %v226 = vpack.c.b16 %v184, %v181
    %v227 = vpack.c.b16 %v185, %v182
    %v228 = vpack.c.b16 %v189, %v186
    %v229 = vpack.c.b16 %v190, %v187
    %v230 = vpack.c.b16 %v191, %v188
    %v231 = vpack.c.b16 %v195, %v192
    %v232 = vpack.c.b16 %v196, %v193
    %v233 = vpack.c.b16 %v197, %v194
    %v234 = vpack.c.b16 %v201, %v198
    %v235 = vpack.c.b16 %v202, %v199
    %v236 = vpack.c.b16 %v203, %v200
    %v237 = vpack.c.b16 %v207, %v204
    %v238 = vpack.c.b16 %v208, %v205
    %v239 = vpack.c.b16 %v209, %v206
    %v240 = vpack.c.b16 %v213, %v210
    %v241 = vpack.c.b16 %v214, %v211
    %v242 = vpack.c.b16 %v215, %v212
    %v243 = vpack.c.b16 %v219, %v216
    %v244 = vpack.c.b16 %v220, %v217
    %v245 = vpack.c.b16 %v221, %v218
    %270 = vmatprep.subr.bf16.mxu0 %v244
    %271 = vmatpush1.bf16.msra.mxu0 %v243
    %272 = vmatprep.subr.bf16.mxu0 %v241
    %273 = vmatpush1.bf16.msra.mxu0 %v240
    %274 = vmatprep.subr.bf16.mxu0 %v238
    %275 = vmatpush1.bf16.msra.mxu0 %v237
    %276 = vmatprep.subr.bf16.mxu0 %v235
    %277 = vmatpush1.bf16.msra.mxu0 %v234
    %278 = vmatprep.subr.bf16.mxu0 %v232
    %279 = vmatpush1.bf16.msra.mxu0 %v231
    %280 = vmatprep.subr.bf16.mxu0 %v229
    %281 = vmatpush1.bf16.msra.mxu0 %v228
    %282 = vmatprep.subr.bf16.mxu0 %v226
    %283 = vmatpush1.bf16.msra.mxu0 %v225
    %284 = vmatprep.subr.bf16.mxu0 %v223
    %285 = vmatpush1.bf16.msra.mxu0 %v222
    %286 = vmatprep.subr.bf16.mxu0 0
    %287 = vmatpush2.bf16.msra.mxu0 0
    %288 = vmatprep.subr.bf16.mxu0 0
    %289 = vmatpush2.bf16.msra.mxu0 0
    %290 = vmatprep.subr.bf16.mxu0 0
    %291 = vmatpush2.bf16.msra.mxu0 0
    %292 = vmatprep.subr.bf16.mxu0 0
    %293 = vmatpush2.bf16.msra.mxu0 0
    %294 = vmatprep.subr.bf16.mxu0 0
    %295 = vmatpush2.bf16.msra.mxu0 0
    %296 = vmatprep.subr.bf16.mxu0 0
    %297 = vmatpush2.bf16.msra.mxu0 0
    %298 = vmatprep.subr.bf16.mxu0 0
    %299 = vmatpush2.bf16.msra.mxu0 0
    %300 = vmatprep.subr.bf16.mxu0 0
    %301 = vmatpush2.bf16.msra.mxu0 0
    %302 = vmatprep.mubr.bf16.mxu0 0
    %303 = vmatmul.mubr.bf16.gmra.mxu0 %v85
    %v304 = vpop.f32.mrf.mxu0
    %v305 = vadd.f32 %v130, %v304
    %v306 = vpop.f32.mrf.mxu0
    %v307 = vadd.f32 %v134, %v306
    %v308 = vpop.f32.mrf.mxu0
    %v309 = vadd.f32 %v130, %v308
    %v310 = vpop.f32.mrf.mxu0
    %v311 = vadd.f32 %v134, %v310
    %312 = vmatprep.mubr.bf16.mxu0 0
    %313 = vmatmul.mubr.bf16.gmra.mxu0 %v86
    %v314 = vpop.f32.mrf.mxu0
    %v315 = vadd.f32 %v130, %v314
    %v316 = vpop.f32.mrf.mxu0
    %v317 = vadd.f32 %v134, %v316
    %v318 = vpop.f32.mrf.mxu0
    %v319 = vadd.f32 %v130, %v318
    %v320 = vpop.f32.mrf.mxu0
    %v321 = vadd.f32 %v134, %v320
    %322 = vmatprep.mubr.bf16.mxu0 0
    %323 = vmatmul.mubr.bf16.gmra.mxu0 %v87
    %v324 = vpop.f32.mrf.mxu0
    %v325 = vadd.f32 %v130, %v324
    %v326 = vpop.f32.mrf.mxu0
    %v327 = vadd.f32 %v134, %v326
    %v328 = vpop.f32.mrf.mxu0
    %v329 = vadd.f32 %v130, %v328
    %v330 = vpop.f32.mrf.mxu0
    %v331 = vadd.f32 %v134, %v330
    %332 = vmatprep.mubr.bf16.mxu0 0
    %333 = vmatmul.mubr.bf16.gmra.mxu0 %v88
    %v334 = vpop.f32.mrf.mxu0
    %v335 = vadd.f32 %v130, %v334
    %v336 = vpop.f32.mrf.mxu0
    %v337 = vadd.f32 %v134, %v336
    %v338 = vpop.f32.mrf.mxu0
    %v339 = vadd.f32 %v130, %v338
    %v340 = vpop.f32.mrf.mxu0
    %v341 = vadd.f32 %v134, %v340
    %342 = vmatprep.mubr.bf16.mxu0 0
    %343 = vmatmul.mubr.bf16.gmra.mxu0 %v89
    %v344 = vpop.f32.mrf.mxu0
    %v345 = vadd.f32 %v130, %v344
    %v346 = vpop.f32.mrf.mxu0
    %v347 = vadd.f32 %v134, %v346
    %v348 = vpop.f32.mrf.mxu0
    %v349 = vadd.f32 %v130, %v348
    %v350 = vpop.f32.mrf.mxu0
    %v351 = vadd.f32 %v134, %v350
    %352 = vmatprep.mubr.bf16.mxu0 0
    %353 = vmatmul.mubr.bf16.gmra.mxu0 %v90
    %v354 = vpop.f32.mrf.mxu0
    %v355 = vadd.f32 %v130, %v354
    %v356 = vpop.f32.mrf.mxu0
    %v357 = vadd.f32 %v134, %v356
    %v358 = vpop.f32.mrf.mxu0
    %v359 = vadd.f32 %v130, %v358
    %v360 = vpop.f32.mrf.mxu0
    %v361 = vadd.f32 %v134, %v360
    %362 = vmatprep.mubr.bf16.mxu0 0
    %363 = vmatmul.mubr.bf16.gmra.mxu0 %v91
    %v364 = vpop.f32.mrf.mxu0
    %v365 = vadd.f32 %v130, %v364
    %v366 = vpop.f32.mrf.mxu0
    %v367 = vadd.f32 %v134, %v366
    %v368 = vpop.f32.mrf.mxu0
    %v369 = vadd.f32 %v130, %v368
    %v370 = vpop.f32.mrf.mxu0
    %v371 = vadd.f32 %v134, %v370
    %372 = vmatprep.mubr.bf16.mxu0 0
    %373 = vmatmul.mubr.bf16.gmra.mxu0 %v92
    %v374 = vpop.f32.mrf.mxu0
    %v375 = vadd.f32 %v130, %v374
    %v376 = vpop.f32.mrf.mxu0
    %v377 = vadd.f32 %v134, %v376
    %v378 = vpop.f32.mrf.mxu0
    %v379 = vadd.f32 %v130, %v378
    %v380 = vpop.f32.mrf.mxu0
    %v381 = vadd.f32 %v134, %v380
    %382 = vdwg.mxu0
    %383 = vmatprep.subr.bf16.mxu0 0
    %384 = vmatpush1.bf16.msra.mxu0 %v245
    %385 = vmatprep.subr.bf16.mxu0 0
    %386 = vmatpush1.bf16.msra.mxu0 %v242
    %387 = vmatprep.subr.bf16.mxu0 0
    %388 = vmatpush1.bf16.msra.mxu0 %v239
    %389 = vmatprep.subr.bf16.mxu0 0
    %390 = vmatpush1.bf16.msra.mxu0 %v236
    %391 = vmatprep.subr.bf16.mxu0 0
    %392 = vmatpush1.bf16.msra.mxu0 %v233
    %393 = vmatprep.subr.bf16.mxu0 0
    %394 = vmatpush1.bf16.msra.mxu0 %v230
    %395 = vmatprep.subr.bf16.mxu0 0
    %396 = vmatpush1.bf16.msra.mxu0 %v227
    %397 = vmatprep.subr.bf16.mxu0 0
    %398 = vmatpush1.bf16.msra.mxu0 %v224
    %399 = vmatprep.subr.bf16.mxu0 0
    %400 = vmatpush2.bf16.msra.mxu0 0
    %401 = vmatprep.subr.bf16.mxu0 0
    %402 = vmatpush2.bf16.msra.mxu0 0
    %403 = vmatprep.subr.bf16.mxu0 0
    %404 = vmatpush2.bf16.msra.mxu0 0
    %405 = vmatprep.subr.bf16.mxu0 0
    %406 = vmatpush2.bf16.msra.mxu0 0
    %407 = vmatprep.subr.bf16.mxu0 0
    %408 = vmatpush2.bf16.msra.mxu0 0
    %409 = vmatprep.subr.bf16.mxu0 0
    %410 = vmatpush2.bf16.msra.mxu0 0
    %411 = vmatprep.subr.bf16.mxu0 0
    %412 = vmatpush2.bf16.msra.mxu0 0
    %413 = vmatprep.subr.bf16.mxu0 0
    %414 = vmatpush2.bf16.msra.mxu0 0
    %415 = vmatprep.mubr.bf16.mxu0 0
    %416 = vmatmul.mubr.bf16.gmra.mxu0 %v85
    %v417 = vpop.f32.mrf.mxu0
    %v418 = vadd.f32 %v138, %v417
    %v419 = vpop.f32.mrf.mxu0
    %v420 = vpop.f32.mrf.mxu0
    %v421 = vadd.f32 %v138, %v420
    %v422 = vpop.f32.mrf.mxu0
    %423 = vmatprep.mubr.bf16.mxu0 0
    %424 = vmatmul.mubr.bf16.gmra.mxu0 %v86
    %v425 = vpop.f32.mrf.mxu0
    %v426 = vadd.f32 %v138, %v425
    %v427 = vpop.f32.mrf.mxu0
    %v428 = vpop.f32.mrf.mxu0
    %v429 = vadd.f32 %v138, %v428
    %v430 = vpop.f32.mrf.mxu0
    %431 = vmatprep.mubr.bf16.mxu0 0
    %432 = vmatmul.mubr.bf16.gmra.mxu0 %v87
    %v433 = vpop.f32.mrf.mxu0
    %v434 = vadd.f32 %v138, %v433
    %v435 = vpop.f32.mrf.mxu0
    %v436 = vpop.f32.mrf.mxu0
    %v437 = vadd.f32 %v138, %v436
    %v438 = vpop.f32.mrf.mxu0
    %439 = vmatprep.mubr.bf16.mxu0 0
    %440 = vmatmul.mubr.bf16.gmra.mxu0 %v88
    %v441 = vpop.f32.mrf.mxu0
    %v442 = vadd.f32 %v138, %v441
    %v443 = vpop.f32.mrf.mxu0
    %v444 = vpop.f32.mrf.mxu0
    %v445 = vadd.f32 %v138, %v444
    %v446 = vpop.f32.mrf.mxu0
    %447 = vmatprep.mubr.bf16.mxu0 0
    %448 = vmatmul.mubr.bf16.gmra.mxu0 %v89
    %v449 = vpop.f32.mrf.mxu0
    %v450 = vadd.f32 %v138, %v449
    %v451 = vpop.f32.mrf.mxu0
    %v452 = vpop.f32.mrf.mxu0
    %v453 = vadd.f32 %v138, %v452
    %v454 = vpop.f32.mrf.mxu0
    %455 = vmatprep.mubr.bf16.mxu0 0
    %456 = vmatmul.mubr.bf16.gmra.mxu0 %v90
    %v457 = vpop.f32.mrf.mxu0
    %v458 = vadd.f32 %v138, %v457
    %v459 = vpop.f32.mrf.mxu0
    %v460 = vpop.f32.mrf.mxu0
    %v461 = vadd.f32 %v138, %v460
    %v462 = vpop.f32.mrf.mxu0
    %463 = vmatprep.mubr.bf16.mxu0 0
    %464 = vmatmul.mubr.bf16.gmra.mxu0 %v91
    %v465 = vpop.f32.mrf.mxu0
    %v466 = vadd.f32 %v138, %v465
    %v467 = vpop.f32.mrf.mxu0
    %v468 = vpop.f32.mrf.mxu0
    %v469 = vadd.f32 %v138, %v468
    %v470 = vpop.f32.mrf.mxu0
    %471 = vmatprep.mubr.bf16.mxu0 0
    %472 = vmatmul.mubr.bf16.gmra.mxu0 %v92
    %v473 = vpop.f32.mrf.mxu0
    %v474 = vadd.f32 %v138, %v473
    %v475 = vpop.f32.mrf.mxu0
    %v476 = vpop.f32.mrf.mxu0
    %v477 = vadd.f32 %v138, %v476
    %v478 = vpop.f32.mrf.mxu0
    %479 = vdwg.mxu0
    %v480 = vpack.c.bf16 %v309, %v305
    %v481 = vpack.c.bf16 %v319, %v315
    %v482 = vpack.c.bf16 %v329, %v325
    %v483 = vpack.c.bf16 %v339, %v335
    %v484 = vpack.c.bf16 %v349, %v345
    %v485 = vpack.c.bf16 %v359, %v355
    %v486 = vpack.c.bf16 %v369, %v365
    %v487 = vpack.c.bf16 %v379, %v375
    %v488 = vpack.c.bf16 %v311, %v307
    %v489 = vpack.c.bf16 %v321, %v317
    %v490 = vpack.c.bf16 %v331, %v327
    %v491 = vpack.c.bf16 %v341, %v337
    %v492 = vpack.c.bf16 %v351, %v347
    %v493 = vpack.c.bf16 %v361, %v357
    %v494 = vpack.c.bf16 %v371, %v367
    %v495 = vpack.c.bf16 %v381, %v377
    %v496 = vpack.c.bf16 %v421, %v418
    %v497 = vpack.c.bf16 %v429, %v426
    %v498 = vpack.c.bf16 %v437, %v434
    %v499 = vpack.c.bf16 %v445, %v442
    %v500 = vpack.c.bf16 %v453, %v450
    %v501 = vpack.c.bf16 %v461, %v458
    %v502 = vpack.c.bf16 %v469, %v466
    %v503 = vpack.c.bf16 %v477, %v474
    %vm504 = vcmask 261120
    %v506 = vsel %vm504, %v480, 0
    %v509 = vsel %vm504, %v481, 0
    %v512 = vsel %vm504, %v482, 0
    %v515 = vsel %vm504, %v483, 0
    %v518 = vsel %vm504, %v488, 0
    %v521 = vsel %vm504, %v489, 0
    %v524 = vsel %vm504, %v490, 0
    %v527 = vsel %vm504, %v491, 0
    %529 = vmatprep.subr.bf16.mxu0 0
    %530 = vmatpush1.bf16.xpose.msra.mxu0 0
    %531 = vmatprep.subr.bf16.mxu0 0
    %532 = vmatpush1.bf16.xpose.msra.mxu0 0
    %533 = vmatprep.subr.bf16.mxu0 0
    %534 = vmatpush1.bf16.xpose.msra.mxu0 0
    %535 = vmatprep.subr.bf16.mxu0 0
    %536 = vmatpush1.bf16.xpose.msra.mxu0 0
    %537 = vmatprep.subr.bf16.mxu0 0
    %538 = vmatpush1.bf16.xpose.msra.mxu0 %v527
    %539 = vmatprep.subr.bf16.mxu0 0
    %540 = vmatpush1.bf16.xpose.msra.mxu0 %v524
    %541 = vmatprep.subr.bf16.mxu0 0
    %542 = vmatpush1.bf16.xpose.msra.mxu0 %v521
    %543 = vmatprep.subr.bf16.mxu0 0
    %544 = vmatpush1.bf16.xpose.msra.mxu0 %v518
    %545 = vmatprep.subr.bf16.mxu0 0
    %546 = vmatpush2.bf16.xpose.msra.mxu0 0
    %547 = vmatprep.subr.bf16.mxu0 0
    %548 = vmatpush2.bf16.xpose.msra.mxu0 0
    %549 = vmatprep.subr.bf16.mxu0 0
    %550 = vmatpush2.bf16.xpose.msra.mxu0 0
    %551 = vmatprep.subr.bf16.mxu0 0
    %552 = vmatpush2.bf16.xpose.msra.mxu0 0
    %553 = vmatprep.subr.bf16.mxu0 0
    %554 = vmatpush2.bf16.xpose.msra.mxu0 0
    %555 = vmatprep.subr.bf16.mxu0 0
    %556 = vmatpush2.bf16.xpose.msra.mxu0 0
    %557 = vmatprep.subr.bf16.mxu0 0
    %558 = vmatpush2.bf16.xpose.msra.mxu0 0
    %559 = vmatprep.subr.bf16.mxu0 0
    %560 = vmatpush2.bf16.xpose.msra.mxu0 0
    %561 = vmatprep.mubr.bf16.mxu0 0
    %562 = vmatmul.mubr.bf16.gmra.mxu0 %v506
    %v563 = vpop.f32.mrf.mxu0
    %v564 = vadd.f32 0.0, %v563
    %v565 = vpop.f32.mrf.mxu0
    %v566 = vpop.f32.mrf.mxu0
    %v567 = vadd.f32 0.0, %v566
    %v568 = vpop.f32.mrf.mxu0
    %569 = vmatprep.mubr.bf16.mxu0 0
    %570 = vmatmul.mubr.bf16.gmra.mxu0 %v509
    %v571 = vpop.f32.mrf.mxu0
    %v572 = vadd.f32 0.0, %v571
    %v573 = vpop.f32.mrf.mxu0
    %v574 = vpop.f32.mrf.mxu0
    %v575 = vadd.f32 0.0, %v574
    %v576 = vpop.f32.mrf.mxu0
    %577 = vmatprep.mubr.bf16.mxu0 0
    %578 = vmatmul.mubr.bf16.gmra.mxu0 %v512
    %v579 = vpop.f32.mrf.mxu0
    %v580 = vadd.f32 0.0, %v579
    %v581 = vpop.f32.mrf.mxu0
    %v582 = vpop.f32.mrf.mxu0
    %v583 = vadd.f32 0.0, %v582
    %v584 = vpop.f32.mrf.mxu0
    %585 = vmatprep.mubr.bf16.mxu0 0
    %586 = vmatmul.mubr.bf16.gmra.mxu0 %v515
    %v587 = vpop.f32.mrf.mxu0
    %v588 = vadd.f32 0.0, %v587
    %v589 = vpop.f32.mrf.mxu0
    %v590 = vpop.f32.mrf.mxu0
    %v591 = vadd.f32 0.0, %v590
    %v592 = vpop.f32.mrf.mxu0
    %593 = vdwg.mxu0
    %v595 = vsel %vm504, %v484, 0
    %v598 = vsel %vm504, %v485, 0
    %v601 = vsel %vm504, %v486, 0
    %v604 = vsel %vm504, %v487, 0
    %v607 = vsel %vm504, %v492, 0
    %v610 = vsel %vm504, %v493, 0
    %v613 = vsel %vm504, %v494, 0
    %v616 = vsel %vm504, %v495, 0
    %618 = vmatprep.subr.bf16.mxu0 0
    %619 = vmatpush1.bf16.xpose.msra.mxu0 0
    %620 = vmatprep.subr.bf16.mxu0 0
    %621 = vmatpush1.bf16.xpose.msra.mxu0 0
    %622 = vmatprep.subr.bf16.mxu0 0
    %623 = vmatpush1.bf16.xpose.msra.mxu0 0
    %624 = vmatprep.subr.bf16.mxu0 0
    %625 = vmatpush1.bf16.xpose.msra.mxu0 0
    %626 = vmatprep.subr.bf16.mxu0 0
    %627 = vmatpush1.bf16.xpose.msra.mxu0 %v616
    %628 = vmatprep.subr.bf16.mxu0 0
    %629 = vmatpush1.bf16.xpose.msra.mxu0 %v613
    %630 = vmatprep.subr.bf16.mxu0 0
    %631 = vmatpush1.bf16.xpose.msra.mxu0 %v610
    %632 = vmatprep.subr.bf16.mxu0 0
    %633 = vmatpush1.bf16.xpose.msra.mxu0 %v607
    %634 = vmatprep.subr.bf16.mxu0 0
    %635 = vmatpush2.bf16.xpose.msra.mxu0 0
    %636 = vmatprep.subr.bf16.mxu0 0
    %637 = vmatpush2.bf16.xpose.msra.mxu0 0
    %638 = vmatprep.subr.bf16.mxu0 0
    %639 = vmatpush2.bf16.xpose.msra.mxu0 0
    %640 = vmatprep.subr.bf16.mxu0 0
    %641 = vmatpush2.bf16.xpose.msra.mxu0 0
    %642 = vmatprep.subr.bf16.mxu0 0
    %643 = vmatpush2.bf16.xpose.msra.mxu0 0
    %644 = vmatprep.subr.bf16.mxu0 0
    %645 = vmatpush2.bf16.xpose.msra.mxu0 0
    %646 = vmatprep.subr.bf16.mxu0 0
    %647 = vmatpush2.bf16.xpose.msra.mxu0 0
    %648 = vmatprep.subr.bf16.mxu0 0
    %649 = vmatpush2.bf16.xpose.msra.mxu0 0
    %650 = vmatprep.mubr.bf16.mxu0 0
    %651 = vmatmul.mubr.bf16.gmra.mxu0 %v595
    %v652 = vpop.f32.mrf.mxu0
    %v653 = vadd.f32 0.0, %v652
    %v654 = vpop.f32.mrf.mxu0
    %v655 = vpop.f32.mrf.mxu0
    %v656 = vadd.f32 0.0, %v655
    %v657 = vpop.f32.mrf.mxu0
    %658 = vmatprep.mubr.bf16.mxu0 0
    %659 = vmatmul.mubr.bf16.gmra.mxu0 %v598
    %v660 = vpop.f32.mrf.mxu0
    %v661 = vadd.f32 0.0, %v660
    %v662 = vpop.f32.mrf.mxu0
    %v663 = vpop.f32.mrf.mxu0
    %v664 = vadd.f32 0.0, %v663
    %v665 = vpop.f32.mrf.mxu0
    %666 = vmatprep.mubr.bf16.mxu0 0
    %667 = vmatmul.mubr.bf16.gmra.mxu0 %v601
    %v668 = vpop.f32.mrf.mxu0
    %v669 = vadd.f32 0.0, %v668
    %v670 = vpop.f32.mrf.mxu0
    %v671 = vpop.f32.mrf.mxu0
    %v672 = vadd.f32 0.0, %v671
    %v673 = vpop.f32.mrf.mxu0
    %674 = vmatprep.mubr.bf16.mxu0 0
    %675 = vmatmul.mubr.bf16.gmra.mxu0 %v604
    %v676 = vpop.f32.mrf.mxu0
    %v677 = vadd.f32 0.0, %v676
    %v678 = vpop.f32.mrf.mxu0
    %v679 = vpop.f32.mrf.mxu0
    %v680 = vadd.f32 0.0, %v679
    %v681 = vpop.f32.mrf.mxu0
    %682 = vdwg.mxu0
    %v683 = vmul.f32 %v564, 0.17677669
    %v684 = vmul.f32 %v567, 0.17677669
    %v685 = vmul.f32 %v572, 0.17677669
    %v686 = vmul.f32 %v575, 0.17677669
    %v687 = vmul.f32 %v580, 0.17677669
    %v688 = vmul.f32 %v583, 0.17677669
    %v689 = vmul.f32 %v588, 0.17677669
    %v690 = vmul.f32 %v591, 0.17677669
    %v691 = vmul.f32 %v653, 0.17677669
    %v692 = vmul.f32 %v656, 0.17677669
    %v693 = vmul.f32 %v661, 0.17677669
    %v694 = vmul.f32 %v664, 0.17677669
    %v695 = vmul.f32 %v669, 0.17677669
    %v696 = vmul.f32 %v672, 0.17677669
    %v697 = vmul.f32 %v677, 0.17677669
    %v698 = vmul.f32 %v680, 0.17677669
    %vm699 = vcmask 523264
    %v700 = vsel %vm699, %v683, -inf
    %701 = vmax.xlane.f32.xlu0 %v700
    %v702 = vpop.xlane.xlu0 %701
    %v703 = vsel %vm699, %v684, -inf
    %704 = vmax.xlane.f32.xlu0 %v703
    %v705 = vpop.xlane.xlu0 %704
    %v706 = vsel %vm699, %v685, -inf
    %707 = vmax.xlane.f32.xlu0 %v706
    %v708 = vpop.xlane.xlu0 %707
    %v709 = vsel %vm699, %v686, -inf
    %710 = vmax.xlane.f32.xlu0 %v709
    %v711 = vpop.xlane.xlu0 %710
    %v712 = vsel %vm699, %v687, -inf
    %713 = vmax.xlane.f32.xlu0 %v712
    %v714 = vpop.xlane.xlu0 %713
    %v715 = vsel %vm699, %v688, -inf
    %716 = vmax.xlane.f32.xlu0 %v715
    %v717 = vpop.xlane.xlu0 %716
    %v718 = vsel %vm699, %v689, -inf
    %719 = vmax.xlane.f32.xlu0 %v718
    %v720 = vpop.xlane.xlu0 %719
    %v721 = vsel %vm699, %v690, -inf
    %722 = vmax.xlane.f32.xlu0 %v721
    %v723 = vpop.xlane.xlu0 %722
    %v724 = vsel %vm699, %v691, -inf
    %725 = vmax.xlane.f32.xlu0 %v724
    %v726 = vpop.xlane.xlu0 %725
    %v727 = vsel %vm699, %v692, -inf
    %728 = vmax.xlane.f32.xlu0 %v727
    %v729 = vpop.xlane.xlu0 %728
    %v730 = vsel %vm699, %v693, -inf
    %731 = vmax.xlane.f32.xlu0 %v730
    %v732 = vpop.xlane.xlu0 %731
    %v733 = vsel %vm699, %v694, -inf
    %734 = vmax.xlane.f32.xlu0 %v733
    %v735 = vpop.xlane.xlu0 %734
    %v736 = vsel %vm699, %v695, -inf
    %737 = vmax.xlane.f32.xlu0 %v736
    %v738 = vpop.xlane.xlu0 %737
    %v739 = vsel %vm699, %v696, -inf
    %740 = vmax.xlane.f32.xlu0 %v739
    %v741 = vpop.xlane.xlu0 %740
    %v742 = vsel %vm699, %v697, -inf
    %743 = vmax.xlane.f32.xlu0 %v742
    %v744 = vpop.xlane.xlu0 %743
    %v745 = vsel %vm699, %v698, -inf
    %746 = vmax.xlane.f32.xlu0 %v745
    %v747 = vpop.xlane.xlu0 %746
    %v748 = vsub.f32 %v683, %v702
    %v749 = vsub.f32 %v684, %v705
    %v750 = vsub.f32 %v685, %v708
    %v751 = vsub.f32 %v686, %v711
    %v752 = vsub.f32 %v687, %v714
    %v753 = vsub.f32 %v688, %v717
    %v754 = vsub.f32 %v689, %v720
    %v755 = vsub.f32 %v690, %v723
    %v756 = vsub.f32 %v691, %v726
    %v757 = vsub.f32 %v692, %v729
    %v758 = vsub.f32 %v693, %v732
    %v759 = vsub.f32 %v694, %v735
    %v760 = vsub.f32 %v695, %v738
    %v761 = vsub.f32 %v696, %v741
    %v762 = vsub.f32 %v697, %v744
    %v763 = vsub.f32 %v698, %v747
    %v764 = vmul.f32 %v748, 1.442695
    %v765 = vpow.pop %v764
    %v766 = vmul.f32 %v749, 1.442695
    %v767 = vpow.pop %v766
    %v768 = vmul.f32 %v750, 1.442695
    %v769 = vpow.pop %v768
    %v770 = vmul.f32 %v751, 1.442695
    %v771 = vpow.pop %v770
    %v772 = vmul.f32 %v752, 1.442695
    %v773 = vpow.pop %v772
    %v774 = vmul.f32 %v753, 1.442695
    %v775 = vpow.pop %v774
    %v776 = vmul.f32 %v754, 1.442695
    %v777 = vpow.pop %v776
    %v778 = vmul.f32 %v755, 1.442695
    %v779 = vpow.pop %v778
    %v780 = vmul.f32 %v756, 1.442695
    %v781 = vpow.pop %v780
    %v782 = vmul.f32 %v757, 1.442695
    %v783 = vpow.pop %v782
    %v784 = vmul.f32 %v758, 1.442695
    %v785 = vpow.pop %v784
    %v786 = vmul.f32 %v759, 1.442695
    %v787 = vpow.pop %v786
    %v788 = vmul.f32 %v760, 1.442695
    %v789 = vpow.pop %v788
    %v790 = vmul.f32 %v761, 1.442695
    %v791 = vpow.pop %v790
    %v792 = vmul.f32 %v762, 1.442695
    %v793 = vpow.pop %v792
    %v794 = vmul.f32 %v763, 1.442695
    %v795 = vpow.pop %v794
    %v796 = vsel %vm699, %v765, 0.0
    %797 = vadd.xlane.f32.xlu0 %v796
    %v798 = vpop.xlane.xlu0 %797
    %v799 = vsel %vm699, %v767, 0.0
    %800 = vadd.xlane.f32.xlu0 %v799
    %v801 = vpop.xlane.xlu0 %800
    %v802 = vsel %vm699, %v769, 0.0
    %803 = vadd.xlane.f32.xlu0 %v802
    %v804 = vpop.xlane.xlu0 %803
    %v805 = vsel %vm699, %v771, 0.0
    %806 = vadd.xlane.f32.xlu0 %v805
    %v807 = vpop.xlane.xlu0 %806
    %v808 = vsel %vm699, %v773, 0.0
    %809 = vadd.xlane.f32.xlu0 %v808
    %v810 = vpop.xlane.xlu0 %809
    %v811 = vsel %vm699, %v775, 0.0
    %812 = vadd.xlane.f32.xlu0 %v811
    %v813 = vpop.xlane.xlu0 %812
    %v814 = vsel %vm699, %v777, 0.0
    %815 = vadd.xlane.f32.xlu0 %v814
    %v816 = vpop.xlane.xlu0 %815
    %v817 = vsel %vm699, %v779, 0.0
    %818 = vadd.xlane.f32.xlu0 %v817
    %v819 = vpop.xlane.xlu0 %818
    %v820 = vsel %vm699, %v781, 0.0
    %821 = vadd.xlane.f32.xlu0 %v820
    %v822 = vpop.xlane.xlu0 %821
    %v823 = vsel %vm699, %v783, 0.0
    %824 = vadd.xlane.f32.xlu0 %v823
    %v825 = vpop.xlane.xlu0 %824
    %v826 = vsel %vm699, %v785, 0.0
    %827 = vadd.xlane.f32.xlu0 %v826
    %v828 = vpop.xlane.xlu0 %827
    %v829 = vsel %vm699, %v787, 0.0
    %830 = vadd.xlane.f32.xlu0 %v829
    %v831 = vpop.xlane.xlu0 %830
    %v832 = vsel %vm699, %v789, 0.0
    %833 = vadd.xlane.f32.xlu0 %v832
    %v834 = vpop.xlane.xlu0 %833
    %v835 = vsel %vm699, %v791, 0.0
    %836 = vadd.xlane.f32.xlu0 %v835
    %v837 = vpop.xlane.xlu0 %836
    %v838 = vsel %vm699, %v793, 0.0
    %839 = vadd.xlane.f32.xlu0 %v838
    %v840 = vpop.xlane.xlu0 %839
    %v841 = vsel %vm699, %v795, 0.0
    %842 = vadd.xlane.f32.xlu0 %v841
    %v843 = vpop.xlane.xlu0 %842
    %v844 = vrcp.pop %v798
    %v845 = vmul.f32 %v765, %v844
    %v846 = vrcp.pop %v801
    %v847 = vmul.f32 %v767, %v846
    %v848 = vrcp.pop %v804
    %v849 = vmul.f32 %v769, %v848
    %v850 = vrcp.pop %v807
    %v851 = vmul.f32 %v771, %v850
    %v852 = vrcp.pop %v810
    %v853 = vmul.f32 %v773, %v852
    %v854 = vrcp.pop %v813
    %v855 = vmul.f32 %v775, %v854
    %v856 = vrcp.pop %v816
    %v857 = vmul.f32 %v777, %v856
    %v858 = vrcp.pop %v819
    %v859 = vmul.f32 %v779, %v858
    %v860 = vrcp.pop %v822
    %v861 = vmul.f32 %v781, %v860
    %v862 = vrcp.pop %v825
    %v863 = vmul.f32 %v783, %v862
    %v864 = vrcp.pop %v828
    %v865 = vmul.f32 %v785, %v864
    %v866 = vrcp.pop %v831
    %v867 = vmul.f32 %v787, %v866
    %v868 = vrcp.pop %v834
    %v869 = vmul.f32 %v789, %v868
    %v870 = vrcp.pop %v837
    %v871 = vmul.f32 %v791, %v870
    %v872 = vrcp.pop %v840
    %v873 = vmul.f32 %v793, %v872
    %v874 = vrcp.pop %v843
    %v875 = vmul.f32 %v795, %v874
    %v876 = vpack.c.bf16 %v847, %v845
    %v877 = vpack.c.bf16 %v851, %v849
    %v878 = vpack.c.bf16 %v855, %v853
    %v879 = vpack.c.bf16 %v859, %v857
    %v880 = vpack.c.bf16 %v863, %v861
    %v881 = vpack.c.bf16 %v867, %v865
    %v882 = vpack.c.bf16 %v871, %v869
    %v883 = vpack.c.bf16 %v875, %v873
    %v885 = vsel %vm699, %v876, 0
    %v888 = vsel %vm699, %v877, 0
    %v891 = vsel %vm699, %v878, 0
    %v894 = vsel %vm699, %v879, 0
    %896 = vmatprep.subr.bf16.mxu0 0
    %897 = vmatpush1.bf16.msra.mxu0 0
    %898 = vmatprep.subr.bf16.mxu0 0
    %899 = vmatpush1.bf16.msra.mxu0 0
    %900 = vmatprep.subr.bf16.mxu0 0
    %901 = vmatpush1.bf16.msra.mxu0 0
    %902 = vmatprep.subr.bf16.mxu0 0
    %903 = vmatpush1.bf16.msra.mxu0 0
    %904 = vmatprep.subr.bf16.mxu0 0
    %905 = vmatpush1.bf16.msra.mxu0 %v499
    %906 = vmatprep.subr.bf16.mxu0 0
    %907 = vmatpush1.bf16.msra.mxu0 %v498
    %908 = vmatprep.subr.bf16.mxu0 0
    %909 = vmatpush1.bf16.msra.mxu0 %v497
    %910 = vmatprep.subr.bf16.mxu0 0
    %911 = vmatpush1.bf16.msra.mxu0 %v496
    %912 = vmatprep.subr.bf16.mxu0 0
    %913 = vmatpush2.bf16.msra.mxu0 0
    %914 = vmatprep.subr.bf16.mxu0 0
    %915 = vmatpush2.bf16.msra.mxu0 0
    %916 = vmatprep.subr.bf16.mxu0 0
    %917 = vmatpush2.bf16.msra.mxu0 0
    %918 = vmatprep.subr.bf16.mxu0 0
    %919 = vmatpush2.bf16.msra.mxu0 0
    %920 = vmatprep.subr.bf16.mxu0 0
    %921 = vmatpush2.bf16.msra.mxu0 0
    %922 = vmatprep.subr.bf16.mxu0 0
    %923 = vmatpush2.bf16.msra.mxu0 0
    %924 = vmatprep.subr.bf16.mxu0 0
    %925 = vmatpush2.bf16.msra.mxu0 0
    %926 = vmatprep.subr.bf16.mxu0 0
    %927 = vmatpush2.bf16.msra.mxu0 0
    %928 = vmatprep.mubr.bf16.mxu0 0
    %929 = vmatmul.mubr.bf16.gmra.mxu0 %v885
    %v930 = vpop.f32.mrf.mxu0
    %v931 = vadd.f32 0.0, %v930
    %v932 = vpop.f32.mrf.mxu0
    %v933 = vpop.f32.mrf.mxu0
    %v934 = vadd.f32 0.0, %v933
    %v935 = vpop.f32.mrf.mxu0
    %936 = vmatprep.mubr.bf16.mxu0 0
    %937 = vmatmul.mubr.bf16.gmra.mxu0 %v888
    %v938 = vpop.f32.mrf.mxu0
    %v939 = vadd.f32 0.0, %v938
    %v940 = vpop.f32.mrf.mxu0
    %v941 = vpop.f32.mrf.mxu0
    %v942 = vadd.f32 0.0, %v941
    %v943 = vpop.f32.mrf.mxu0
    %944 = vmatprep.mubr.bf16.mxu0 0
    %945 = vmatmul.mubr.bf16.gmra.mxu0 %v891
    %v946 = vpop.f32.mrf.mxu0
    %v947 = vadd.f32 0.0, %v946
    %v948 = vpop.f32.mrf.mxu0
    %v949 = vpop.f32.mrf.mxu0
    %v950 = vadd.f32 0.0, %v949
    %v951 = vpop.f32.mrf.mxu0
    %952 = vmatprep.mubr.bf16.mxu0 0
    %953 = vmatmul.mubr.bf16.gmra.mxu0 %v894
    %v954 = vpop.f32.mrf.mxu0
    %v955 = vadd.f32 0.0, %v954
    %v956 = vpop.f32.mrf.mxu0
    %v957 = vpop.f32.mrf.mxu0
    %v958 = vadd.f32 0.0, %v957
    %v959 = vpop.f32.mrf.mxu0
    %960 = vdwg.mxu0
    %v962 = vsel %vm699, %v880, 0
    %v965 = vsel %vm699, %v881, 0
    %v968 = vsel %vm699, %v882, 0
    %v971 = vsel %vm699, %v883, 0
    %973 = vmatprep.subr.bf16.mxu0 0
    %974 = vmatpush1.bf16.msra.mxu0 0
    %975 = vmatprep.subr.bf16.mxu0 0
    %976 = vmatpush1.bf16.msra.mxu0 0
    %977 = vmatprep.subr.bf16.mxu0 0
    %978 = vmatpush1.bf16.msra.mxu0 0
    %979 = vmatprep.subr.bf16.mxu0 0
    %980 = vmatpush1.bf16.msra.mxu0 0
    %981 = vmatprep.subr.bf16.mxu0 0
    %982 = vmatpush1.bf16.msra.mxu0 %v503
    %983 = vmatprep.subr.bf16.mxu0 0
    %984 = vmatpush1.bf16.msra.mxu0 %v502
    %985 = vmatprep.subr.bf16.mxu0 0
    %986 = vmatpush1.bf16.msra.mxu0 %v501
    %987 = vmatprep.subr.bf16.mxu0 0
    %988 = vmatpush1.bf16.msra.mxu0 %v500
    %989 = vmatprep.subr.bf16.mxu0 0
    %990 = vmatpush2.bf16.msra.mxu0 0
    %991 = vmatprep.subr.bf16.mxu0 0
    %992 = vmatpush2.bf16.msra.mxu0 0
    %993 = vmatprep.subr.bf16.mxu0 0
    %994 = vmatpush2.bf16.msra.mxu0 0
    %995 = vmatprep.subr.bf16.mxu0 0
    %996 = vmatpush2.bf16.msra.mxu0 0
    %997 = vmatprep.subr.bf16.mxu0 0
    %998 = vmatpush2.bf16.msra.mxu0 0
    %999 = vmatprep.subr.bf16.mxu0 0
    %1000 = vmatpush2.bf16.msra.mxu0 0
    %1001 = vmatprep.subr.bf16.mxu0 0
    %1002 = vmatpush2.bf16.msra.mxu0 0
    %1003 = vmatprep.subr.bf16.mxu0 0
    %1004 = vmatpush2.bf16.msra.mxu0 0
    %1005 = vmatprep.mubr.bf16.mxu0 0
    %1006 = vmatmul.mubr.bf16.gmra.mxu0 %v962
    %v1007 = vpop.f32.mrf.mxu0
    %v1008 = vadd.f32 0.0, %v1007
    %v1009 = vpop.f32.mrf.mxu0
    %v1010 = vpop.f32.mrf.mxu0
    %v1011 = vadd.f32 0.0, %v1010
    %v1012 = vpop.f32.mrf.mxu0
    %1013 = vmatprep.mubr.bf16.mxu0 0
    %1014 = vmatmul.mubr.bf16.gmra.mxu0 %v965
    %v1015 = vpop.f32.mrf.mxu0
    %v1016 = vadd.f32 0.0, %v1015
    %v1017 = vpop.f32.mrf.mxu0
    %v1018 = vpop.f32.mrf.mxu0
    %v1019 = vadd.f32 0.0, %v1018
    %v1020 = vpop.f32.mrf.mxu0
    %1021 = vmatprep.mubr.bf16.mxu0 0
    %1022 = vmatmul.mubr.bf16.gmra.mxu0 %v968
    %v1023 = vpop.f32.mrf.mxu0
    %v1024 = vadd.f32 0.0, %v1023
    %v1025 = vpop.f32.mrf.mxu0
    %v1026 = vpop.f32.mrf.mxu0
    %v1027 = vadd.f32 0.0, %v1026
    %v1028 = vpop.f32.mrf.mxu0
    %1029 = vmatprep.mubr.bf16.mxu0 0
    %1030 = vmatmul.mubr.bf16.gmra.mxu0 %v971
    %v1031 = vpop.f32.mrf.mxu0
    %v1032 = vadd.f32 0.0, %v1031
    %v1033 = vpop.f32.mrf.mxu0
    %v1034 = vpop.f32.mrf.mxu0
    %v1035 = vadd.f32 0.0, %v1034
    %v1036 = vpop.f32.mrf.mxu0
    %1037 = vdwg.mxu0
    %1038 = vst.msk [vmem:[#allocation2] sm:$0xff] %vm504, %v931
    %1039 = vst.msk [vmem:[#allocation2 + $0x8] sm:$0xff] %vm504, %v934
    %1040 = vst.msk [vmem:[#allocation2 + $0x10] sm:$0xff] %vm504, %v939
    %1041 = vst.msk [vmem:[#allocation2 + $0x18] sm:$0xff] %vm504, %v942
    %1042 = vst.msk [vmem:[#allocation2 + $0x20] sm:$0xff] %vm504, %v947
    %1043 = vst.msk [vmem:[#allocation2 + $0x28] sm:$0xff] %vm504, %v950
    %1044 = vst.msk [vmem:[#allocation2 + $0x30] sm:$0xff] %vm504, %v955
    %1045 = vst.msk [vmem:[#allocation2 + $0x38] sm:$0xff] %vm504, %v958
    %1046 = vst.msk [vmem:[#allocation2 + $0x40] sm:$0xff] %vm504, %v1008
    %1047 = vst.msk [vmem:[#allocation2 + $0x48] sm:$0xff] %vm504, %v1011
    %1048 = vst.msk [vmem:[#allocation2 + $0x50] sm:$0xff] %vm504, %v1016
    %1049 = vst.msk [vmem:[#allocation2 + $0x58] sm:$0xff] %vm504, %v1019
    %1050 = vst.msk [vmem:[#allocation2 + $0x60] sm:$0xff] %vm504, %v1024
    %1051 = vst.msk [vmem:[#allocation2 + $0x68] sm:$0xff] %vm504, %v1027
    %1052 = vst.msk [vmem:[#allocation2 + $0x70] sm:$0xff] %vm504, %v1032
    %1053 = vst.msk [vmem:[#allocation2 + $0x78] sm:$0xff] %vm504, %v1035
    %1058 = vrot.lane.b32.xlu0 %v480, 96
    %v1059 = vpop.permute.xlu0 %1058
    %1060 = vrot.lane.b32.xlu0 %v481, 96
    %v1061 = vpop.permute.xlu0 %1060
    %1062 = vrot.lane.b32.xlu0 %v482, 96
    %v1063 = vpop.permute.xlu0 %1062
    %1064 = vrot.lane.b32.xlu0 %v483, 96
    %v1065 = vpop.permute.xlu0 %1064
    %1070 = vrot.lane.b32.xlu0 %v488, 96
    %v1071 = vpop.permute.xlu0 %1070
    %1072 = vrot.lane.b32.xlu0 %v489, 96
    %v1073 = vpop.permute.xlu0 %1072
    %1074 = vrot.lane.b32.xlu0 %v490, 96
    %v1075 = vpop.permute.xlu0 %1074
    %1076 = vrot.lane.b32.xlu0 %v491, 96
    %v1077 = vpop.permute.xlu0 %1076
    %v1079 = vsel %vm504, %v1059, 0
    %v1082 = vsel %vm504, %v1061, 0
    %v1085 = vsel %vm504, %v1063, 0
    %v1088 = vsel %vm504, %v1065, 0
    %v1091 = vsel %vm504, %v1071, 0
    %v1094 = vsel %vm504, %v1073, 0
    %v1097 = vsel %vm504, %v1075, 0
    %v1100 = vsel %vm504, %v1077, 0
    %1102 = vmatprep.subr.bf16.mxu0 0
    %1103 = vmatpush1.bf16.xpose.msra.mxu0 0
    %1104 = vmatprep.subr.bf16.mxu0 0
    %1105 = vmatpush1.bf16.xpose.msra.mxu0 0
    %1106 = vmatprep.subr.bf16.mxu0 0
    %1107 = vmatpush1.bf16.xpose.msra.mxu0 0
    %1108 = vmatprep.subr.bf16.mxu0 0
    %1109 = vmatpush1.bf16.xpose.msra.mxu0 0
    %1110 = vmatprep.subr.bf16.mxu0 0
    %1111 = vmatpush1.bf16.xpose.msra.mxu0 %v1100
    %1112 = vmatprep.subr.bf16.mxu0 0
    %1113 = vmatpush1.bf16.xpose.msra.mxu0 %v1097
    %1114 = vmatprep.subr.bf16.mxu0 0
    %1115 = vmatpush1.bf16.xpose.msra.mxu0 %v1094
    %1116 = vmatprep.subr.bf16.mxu0 0
    %1117 = vmatpush1.bf16.xpose.msra.mxu0 %v1091
    %1118 = vmatprep.subr.bf16.mxu0 0
    %1119 = vmatpush2.bf16.xpose.msra.mxu0 0
    %1120 = vmatprep.subr.bf16.mxu0 0
    %1121 = vmatpush2.bf16.xpose.msra.mxu0 0
    %1122 = vmatprep.subr.bf16.mxu0 0
    %1123 = vmatpush2.bf16.xpose.msra.mxu0 0
    %1124 = vmatprep.subr.bf16.mxu0 0
    %1125 = vmatpush2.bf16.xpose.msra.mxu0 0
    %1126 = vmatprep.subr.bf16.mxu0 0
    %1127 = vmatpush2.bf16.xpose.msra.mxu0 0
    %1128 = vmatprep.subr.bf16.mxu0 0
    %1129 = vmatpush2.bf16.xpose.msra.mxu0 0
    %1130 = vmatprep.subr.bf16.mxu0 0
    %1131 = vmatpush2.bf16.xpose.msra.mxu0 0
    %1132 = vmatprep.subr.bf16.mxu0 0
    %1133 = vmatpush2.bf16.xpose.msra.mxu0 0
    %1134 = vmatprep.mubr.bf16.mxu0 0
    %1135 = vmatmul.mubr.bf16.gmra.mxu0 %v1079
    %v1136 = vpop.f32.mrf.mxu0
    %v1137 = vadd.f32 0.0, %v1136
    %v1138 = vpop.f32.mrf.mxu0
    %v1139 = vpop.f32.mrf.mxu0
    %v1140 = vadd.f32 0.0, %v1139
    %v1141 = vpop.f32.mrf.mxu0
    %1142 = vmatprep.mubr.bf16.mxu0 0
    %1143 = vmatmul.mubr.bf16.gmra.mxu0 %v1082
    %v1144 = vpop.f32.mrf.mxu0
    %v1145 = vadd.f32 0.0, %v1144
    %v1146 = vpop.f32.mrf.mxu0
    %v1147 = vpop.f32.mrf.mxu0
    %v1148 = vadd.f32 0.0, %v1147
    %v1149 = vpop.f32.mrf.mxu0
    %1150 = vmatprep.mubr.bf16.mxu0 0
    %1151 = vmatmul.mubr.bf16.gmra.mxu0 %v1085
    %v1152 = vpop.f32.mrf.mxu0
    %v1153 = vadd.f32 0.0, %v1152
    %v1154 = vpop.f32.mrf.mxu0
    %v1155 = vpop.f32.mrf.mxu0
    %v1156 = vadd.f32 0.0, %v1155
    %v1157 = vpop.f32.mrf.mxu0
    %1158 = vmatprep.mubr.bf16.mxu0 0
    %1159 = vmatmul.mubr.bf16.gmra.mxu0 %v1088
    %v1160 = vpop.f32.mrf.mxu0
    %v1161 = vadd.f32 0.0, %v1160
    %v1162 = vpop.f32.mrf.mxu0
    %v1163 = vpop.f32.mrf.mxu0
    %v1164 = vadd.f32 0.0, %v1163
    %v1165 = vpop.f32.mrf.mxu0
    %1166 = vdwg.mxu0
    %1171 = vrot.lane.b32.xlu0 %v484, 96
    %v1172 = vpop.permute.xlu0 %1171
    %1173 = vrot.lane.b32.xlu0 %v485, 96
    %v1174 = vpop.permute.xlu0 %1173
    %1175 = vrot.lane.b32.xlu0 %v486, 96
    %v1176 = vpop.permute.xlu0 %1175
    %1177 = vrot.lane.b32.xlu0 %v487, 96
    %v1178 = vpop.permute.xlu0 %1177
    %1183 = vrot.lane.b32.xlu0 %v492, 96
    %v1184 = vpop.permute.xlu0 %1183
    %1185 = vrot.lane.b32.xlu0 %v493, 96
    %v1186 = vpop.permute.xlu0 %1185
    %1187 = vrot.lane.b32.xlu0 %v494, 96
    %v1188 = vpop.permute.xlu0 %1187
    %1189 = vrot.lane.b32.xlu0 %v495, 96
    %v1190 = vpop.permute.xlu0 %1189
    %v1192 = vsel %vm504, %v1172, 0
    %v1195 = vsel %vm504, %v1174, 0
    %v1198 = vsel %vm504, %v1176, 0
    %v1201 = vsel %vm504, %v1178, 0
    %v1204 = vsel %vm504, %v1184, 0
    %v1207 = vsel %vm504, %v1186, 0
    %v1210 = vsel %vm504, %v1188, 0
    %v1213 = vsel %vm504, %v1190, 0
    %1215 = vmatprep.subr.bf16.mxu0 0
    %1216 = vmatpush1.bf16.xpose.msra.mxu0 0
    %1217 = vmatprep.subr.bf16.mxu0 0
    %1218 = vmatpush1.bf16.xpose.msra.mxu0 0
    %1219 = vmatprep.subr.bf16.mxu0 0
    %1220 = vmatpush1.bf16.xpose.msra.mxu0 0
    %1221 = vmatprep.subr.bf16.mxu0 0
    %1222 = vmatpush1.bf16.xpose.msra.mxu0 0
    %1223 = vmatprep.subr.bf16.mxu0 0
    %1224 = vmatpush1.bf16.xpose.msra.mxu0 %v1213
    %1225 = vmatprep.subr.bf16.mxu0 0
    %1226 = vmatpush1.bf16.xpose.msra.mxu0 %v1210
    %1227 = vmatprep.subr.bf16.mxu0 0
    %1228 = vmatpush1.bf16.xpose.msra.mxu0 %v1207
    %1229 = vmatprep.subr.bf16.mxu0 0
    %1230 = vmatpush1.bf16.xpose.msra.mxu0 %v1204
    %1231 = vmatprep.subr.bf16.mxu0 0
    %1232 = vmatpush2.bf16.xpose.msra.mxu0 0
    %1233 = vmatprep.subr.bf16.mxu0 0
    %1234 = vmatpush2.bf16.xpose.msra.mxu0 0
    %1235 = vmatprep.subr.bf16.mxu0 0
    %1236 = vmatpush2.bf16.xpose.msra.mxu0 0
    %1237 = vmatprep.subr.bf16.mxu0 0
    %1238 = vmatpush2.bf16.xpose.msra.mxu0 0
    %1239 = vmatprep.subr.bf16.mxu0 0
    %1240 = vmatpush2.bf16.xpose.msra.mxu0 0
    %1241 = vmatprep.subr.bf16.mxu0 0
    %1242 = vmatpush2.bf16.xpose.msra.mxu0 0
    %1243 = vmatprep.subr.bf16.mxu0 0
    %1244 = vmatpush2.bf16.xpose.msra.mxu0 0
    %1245 = vmatprep.subr.bf16.mxu0 0
    %1246 = vmatpush2.bf16.xpose.msra.mxu0 0
    %1247 = vmatprep.mubr.bf16.mxu0 0
    %1248 = vmatmul.mubr.bf16.gmra.mxu0 %v1192
    %v1249 = vpop.f32.mrf.mxu0
    %v1250 = vadd.f32 0.0, %v1249
    %v1251 = vpop.f32.mrf.mxu0
    %v1252 = vpop.f32.mrf.mxu0
    %v1253 = vadd.f32 0.0, %v1252
    %v1254 = vpop.f32.mrf.mxu0
    %1255 = vmatprep.mubr.bf16.mxu0 0
    %1256 = vmatmul.mubr.bf16.gmra.mxu0 %v1195
    %v1257 = vpop.f32.mrf.mxu0
    %v1258 = vadd.f32 0.0, %v1257
    %v1259 = vpop.f32.mrf.mxu0
    %v1260 = vpop.f32.mrf.mxu0
    %v1261 = vadd.f32 0.0, %v1260
    %v1262 = vpop.f32.mrf.mxu0
    %1263 = vmatprep.mubr.bf16.mxu0 0
    %1264 = vmatmul.mubr.bf16.gmra.mxu0 %v1198
    %v1265 = vpop.f32.mrf.mxu0
    %v1266 = vadd.f32 0.0, %v1265
    %v1267 = vpop.f32.mrf.mxu0
    %v1268 = vpop.f32.mrf.mxu0
    %v1269 = vadd.f32 0.0, %v1268
    %v1270 = vpop.f32.mrf.mxu0
    %1271 = vmatprep.mubr.bf16.mxu0 0
    %1272 = vmatmul.mubr.bf16.gmra.mxu0 %v1201
    %v1273 = vpop.f32.mrf.mxu0
    %v1274 = vadd.f32 0.0, %v1273
    %v1275 = vpop.f32.mrf.mxu0
    %v1276 = vpop.f32.mrf.mxu0
    %v1277 = vadd.f32 0.0, %v1276
    %v1278 = vpop.f32.mrf.mxu0
    %1279 = vdwg.mxu0
    %v1280 = vmul.f32 %v1137, 0.17677669
    %v1281 = vmul.f32 %v1140, 0.17677669
    %v1282 = vmul.f32 %v1145, 0.17677669
    %v1283 = vmul.f32 %v1148, 0.17677669
    %v1284 = vmul.f32 %v1153, 0.17677669
    %v1285 = vmul.f32 %v1156, 0.17677669
    %v1286 = vmul.f32 %v1161, 0.17677669
    %v1287 = vmul.f32 %v1164, 0.17677669
    %v1288 = vmul.f32 %v1250, 0.17677669
    %v1289 = vmul.f32 %v1253, 0.17677669
    %v1290 = vmul.f32 %v1258, 0.17677669
    %v1291 = vmul.f32 %v1261, 0.17677669
    %v1292 = vmul.f32 %v1266, 0.17677669
    %v1293 = vmul.f32 %v1269, 0.17677669
    %v1294 = vmul.f32 %v1274, 0.17677669
    %v1295 = vmul.f32 %v1277, 0.17677669
    %v1296 = vsel %vm699, %v1280, -inf
    %1297 = vmax.xlane.f32.xlu0 %v1296
    %v1298 = vpop.xlane.xlu0 %1297
    %v1299 = vsel %vm699, %v1281, -inf
    %1300 = vmax.xlane.f32.xlu0 %v1299
    %v1301 = vpop.xlane.xlu0 %1300
    %v1302 = vsel %vm699, %v1282, -inf
    %1303 = vmax.xlane.f32.xlu0 %v1302
    %v1304 = vpop.xlane.xlu0 %1303
    %v1305 = vsel %vm699, %v1283, -inf
    %1306 = vmax.xlane.f32.xlu0 %v1305
    %v1307 = vpop.xlane.xlu0 %1306
    %v1308 = vsel %vm699, %v1284, -inf
    %1309 = vmax.xlane.f32.xlu0 %v1308
    %v1310 = vpop.xlane.xlu0 %1309
    %v1311 = vsel %vm699, %v1285, -inf
    %1312 = vmax.xlane.f32.xlu0 %v1311
    %v1313 = vpop.xlane.xlu0 %1312
    %v1314 = vsel %vm699, %v1286, -inf
    %1315 = vmax.xlane.f32.xlu0 %v1314
    %v1316 = vpop.xlane.xlu0 %1315
    %v1317 = vsel %vm699, %v1287, -inf
    %1318 = vmax.xlane.f32.xlu0 %v1317
    %v1319 = vpop.xlane.xlu0 %1318
    %v1320 = vsel %vm699, %v1288, -inf
    %1321 = vmax.xlane.f32.xlu0 %v1320
    %v1322 = vpop.xlane.xlu0 %1321
    %v1323 = vsel %vm699, %v1289, -inf
    %1324 = vmax.xlane.f32.xlu0 %v1323
    %v1325 = vpop.xlane.xlu0 %1324
    %v1326 = vsel %vm699, %v1290, -inf
    %1327 = vmax.xlane.f32.xlu0 %v1326
    %v1328 = vpop.xlane.xlu0 %1327
    %v1329 = vsel %vm699, %v1291, -inf
    %1330 = vmax.xlane.f32.xlu0 %v1329
    %v1331 = vpop.xlane.xlu0 %1330
    %v1332 = vsel %vm699, %v1292, -inf
    %1333 = vmax.xlane.f32.xlu0 %v1332
    %v1334 = vpop.xlane.xlu0 %1333
    %v1335 = vsel %vm699, %v1293, -inf
    %1336 = vmax.xlane.f32.xlu0 %v1335
    %v1337 = vpop.xlane.xlu0 %1336
    %v1338 = vsel %vm699, %v1294, -inf
    %1339 = vmax.xlane.f32.xlu0 %v1338
    %v1340 = vpop.xlane.xlu0 %1339
    %v1341 = vsel %vm699, %v1295, -inf
    %1342 = vmax.xlane.f32.xlu0 %v1341
    %v1343 = vpop.xlane.xlu0 %1342
    %v1344 = vsub.f32 %v1280, %v1298
    %v1345 = vsub.f32 %v1281, %v1301
    %v1346 = vsub.f32 %v1282, %v1304
    %v1347 = vsub.f32 %v1283, %v1307
    %v1348 = vsub.f32 %v1284, %v1310
    %v1349 = vsub.f32 %v1285, %v1313
    %v1350 = vsub.f32 %v1286, %v1316
    %v1351 = vsub.f32 %v1287, %v1319
    %v1352 = vsub.f32 %v1288, %v1322
    %v1353 = vsub.f32 %v1289, %v1325
    %v1354 = vsub.f32 %v1290, %v1328
    %v1355 = vsub.f32 %v1291, %v1331
    %v1356 = vsub.f32 %v1292, %v1334
    %v1357 = vsub.f32 %v1293, %v1337
    %v1358 = vsub.f32 %v1294, %v1340
    %v1359 = vsub.f32 %v1295, %v1343
    %v1360 = vmul.f32 %v1344, 1.442695
    %v1361 = vpow.pop %v1360
    %v1362 = vmul.f32 %v1345, 1.442695
    %v1363 = vpow.pop %v1362
    %v1364 = vmul.f32 %v1346, 1.442695
    %v1365 = vpow.pop %v1364
    %v1366 = vmul.f32 %v1347, 1.442695
    %v1367 = vpow.pop %v1366
    %v1368 = vmul.f32 %v1348, 1.442695
    %v1369 = vpow.pop %v1368
    %v1370 = vmul.f32 %v1349, 1.442695
    %v1371 = vpow.pop %v1370
    %v1372 = vmul.f32 %v1350, 1.442695
    %v1373 = vpow.pop %v1372
    %v1374 = vmul.f32 %v1351, 1.442695
    %v1375 = vpow.pop %v1374
    %v1376 = vmul.f32 %v1352, 1.442695
    %v1377 = vpow.pop %v1376
    %v1378 = vmul.f32 %v1353, 1.442695
    %v1379 = vpow.pop %v1378
    %v1380 = vmul.f32 %v1354, 1.442695
    %v1381 = vpow.pop %v1380
    %v1382 = vmul.f32 %v1355, 1.442695
    %v1383 = vpow.pop %v1382
    %v1384 = vmul.f32 %v1356, 1.442695
    %v1385 = vpow.pop %v1384
    %v1386 = vmul.f32 %v1357, 1.442695
    %v1387 = vpow.pop %v1386
    %v1388 = vmul.f32 %v1358, 1.442695
    %v1389 = vpow.pop %v1388
    %v1390 = vmul.f32 %v1359, 1.442695
    %v1391 = vpow.pop %v1390
    %v1392 = vsel %vm699, %v1361, 0.0
    %1393 = vadd.xlane.f32.xlu0 %v1392
    %v1394 = vpop.xlane.xlu0 %1393
    %v1395 = vsel %vm699, %v1363, 0.0
    %1396 = vadd.xlane.f32.xlu0 %v1395
    %v1397 = vpop.xlane.xlu0 %1396
    %v1398 = vsel %vm699, %v1365, 0.0
    %1399 = vadd.xlane.f32.xlu0 %v1398
    %v1400 = vpop.xlane.xlu0 %1399
    %v1401 = vsel %vm699, %v1367, 0.0
    %1402 = vadd.xlane.f32.xlu0 %v1401
    %v1403 = vpop.xlane.xlu0 %1402
    %v1404 = vsel %vm699, %v1369, 0.0
    %1405 = vadd.xlane.f32.xlu0 %v1404
    %v1406 = vpop.xlane.xlu0 %1405
    %v1407 = vsel %vm699, %v1371, 0.0
    %1408 = vadd.xlane.f32.xlu0 %v1407
    %v1409 = vpop.xlane.xlu0 %1408
    %v1410 = vsel %vm699, %v1373, 0.0
    %1411 = vadd.xlane.f32.xlu0 %v1410
    %v1412 = vpop.xlane.xlu0 %1411
    %v1413 = vsel %vm699, %v1375, 0.0
    %1414 = vadd.xlane.f32.xlu0 %v1413
    %v1415 = vpop.xlane.xlu0 %1414
    %v1416 = vsel %vm699, %v1377, 0.0
    %1417 = vadd.xlane.f32.xlu0 %v1416
    %v1418 = vpop.xlane.xlu0 %1417
    %v1419 = vsel %vm699, %v1379, 0.0
    %1420 = vadd.xlane.f32.xlu0 %v1419
    %v1421 = vpop.xlane.xlu0 %1420
    %v1422 = vsel %vm699, %v1381, 0.0
    %1423 = vadd.xlane.f32.xlu0 %v1422
    %v1424 = vpop.xlane.xlu0 %1423
    %v1425 = vsel %vm699, %v1383, 0.0
    %1426 = vadd.xlane.f32.xlu0 %v1425
    %v1427 = vpop.xlane.xlu0 %1426
    %v1428 = vsel %vm699, %v1385, 0.0
    %1429 = vadd.xlane.f32.xlu0 %v1428
    %v1430 = vpop.xlane.xlu0 %1429
    %v1431 = vsel %vm699, %v1387, 0.0
    %1432 = vadd.xlane.f32.xlu0 %v1431
    %v1433 = vpop.xlane.xlu0 %1432
    %v1434 = vsel %vm699, %v1389, 0.0
    %1435 = vadd.xlane.f32.xlu0 %v1434
    %v1436 = vpop.xlane.xlu0 %1435
    %v1437 = vsel %vm699, %v1391, 0.0
    %1438 = vadd.xlane.f32.xlu0 %v1437
    %v1439 = vpop.xlane.xlu0 %1438
    %v1440 = vrcp.pop %v1394
    %v1441 = vmul.f32 %v1361, %v1440
    %v1442 = vrcp.pop %v1397
    %v1443 = vmul.f32 %v1363, %v1442
    %v1444 = vrcp.pop %v1400
    %v1445 = vmul.f32 %v1365, %v1444
    %v1446 = vrcp.pop %v1403
    %v1447 = vmul.f32 %v1367, %v1446
    %v1448 = vrcp.pop %v1406
    %v1449 = vmul.f32 %v1369, %v1448
    %v1450 = vrcp.pop %v1409
    %v1451 = vmul.f32 %v1371, %v1450
    %v1452 = vrcp.pop %v1412
    %v1453 = vmul.f32 %v1373, %v1452
    %v1454 = vrcp.pop %v1415
    %v1455 = vmul.f32 %v1375, %v1454
    %v1456 = vrcp.pop %v1418
    %v1457 = vmul.f32 %v1377, %v1456
    %v1458 = vrcp.pop %v1421
    %v1459 = vmul.f32 %v1379, %v1458
    %v1460 = vrcp.pop %v1424
    %v1461 = vmul.f32 %v1381, %v1460
    %v1462 = vrcp.pop %v1427
    %v1463 = vmul.f32 %v1383, %v1462
    %v1464 = vrcp.pop %v1430
    %v1465 = vmul.f32 %v1385, %v1464
    %v1466 = vrcp.pop %v1433
    %v1467 = vmul.f32 %v1387, %v1466
    %v1468 = vrcp.pop %v1436
    %v1469 = vmul.f32 %v1389, %v1468
    %v1470 = vrcp.pop %v1439
    %v1471 = vmul.f32 %v1391, %v1470
    %v1472 = vpack.c.bf16 %v1443, %v1441
    %v1473 = vpack.c.bf16 %v1447, %v1445
    %v1474 = vpack.c.bf16 %v1451, %v1449
    %v1475 = vpack.c.bf16 %v1455, %v1453
    %v1476 = vpack.c.bf16 %v1459, %v1457
    %v1477 = vpack.c.bf16 %v1463, %v1461
    %v1478 = vpack.c.bf16 %v1467, %v1465
    %v1479 = vpack.c.bf16 %v1471, %v1469
    %1484 = vrot.lane.b32.xlu0 %v496, 96
    %v1485 = vpop.permute.xlu0 %1484
    %1486 = vrot.lane.b32.xlu0 %v497, 96
    %v1487 = vpop.permute.xlu0 %1486
    %1488 = vrot.lane.b32.xlu0 %v498, 96
    %v1489 = vpop.permute.xlu0 %1488
    %1490 = vrot.lane.b32.xlu0 %v499, 96
    %v1491 = vpop.permute.xlu0 %1490
    %v1497 = vsel %vm699, %v1472, 0
    %v1500 = vsel %vm699, %v1473, 0
    %v1503 = vsel %vm699, %v1474, 0
    %v1506 = vsel %vm699, %v1475, 0
    %1508 = vmatprep.subr.bf16.mxu0 0
    %1509 = vmatpush1.bf16.msra.mxu0 0
    %1510 = vmatprep.subr.bf16.mxu0 0
    %1511 = vmatpush1.bf16.msra.mxu0 0
    %1512 = vmatprep.subr.bf16.mxu0 0
    %1513 = vmatpush1.bf16.msra.mxu0 0
    %1514 = vmatprep.subr.bf16.mxu0 0
    %1515 = vmatpush1.bf16.msra.mxu0 0
    %1516 = vmatprep.subr.bf16.mxu0 0
    %1517 = vmatpush1.bf16.msra.mxu0 %v1491
    %1518 = vmatprep.subr.bf16.mxu0 0
    %1519 = vmatpush1.bf16.msra.mxu0 %v1489
    %1520 = vmatprep.subr.bf16.mxu0 0
    %1521 = vmatpush1.bf16.msra.mxu0 %v1487
    %1522 = vmatprep.subr.bf16.mxu0 0
    %1523 = vmatpush1.bf16.msra.mxu0 %v1485
    %1524 = vmatprep.subr.bf16.mxu0 0
    %1525 = vmatpush2.bf16.msra.mxu0 0
    %1526 = vmatprep.subr.bf16.mxu0 0
    %1527 = vmatpush2.bf16.msra.mxu0 0
    %1528 = vmatprep.subr.bf16.mxu0 0
    %1529 = vmatpush2.bf16.msra.mxu0 0
    %1530 = vmatprep.subr.bf16.mxu0 0
    %1531 = vmatpush2.bf16.msra.mxu0 0
    %1532 = vmatprep.subr.bf16.mxu0 0
    %1533 = vmatpush2.bf16.msra.mxu0 0
    %1534 = vmatprep.subr.bf16.mxu0 0
    %1535 = vmatpush2.bf16.msra.mxu0 0
    %1536 = vmatprep.subr.bf16.mxu0 0
    %1537 = vmatpush2.bf16.msra.mxu0 0
    %1538 = vmatprep.subr.bf16.mxu0 0
    %1539 = vmatpush2.bf16.msra.mxu0 0
    %1540 = vmatprep.mubr.bf16.mxu0 0
    %1541 = vmatmul.mubr.bf16.gmra.mxu0 %v1497
    %v1542 = vpop.f32.mrf.mxu0
    %v1543 = vadd.f32 0.0, %v1542
    %v1544 = vpop.f32.mrf.mxu0
    %v1545 = vpop.f32.mrf.mxu0
    %v1546 = vadd.f32 0.0, %v1545
    %v1547 = vpop.f32.mrf.mxu0
    %1548 = vmatprep.mubr.bf16.mxu0 0
    %1549 = vmatmul.mubr.bf16.gmra.mxu0 %v1500
    %v1550 = vpop.f32.mrf.mxu0
    %v1551 = vadd.f32 0.0, %v1550
    %v1552 = vpop.f32.mrf.mxu0
    %v1553 = vpop.f32.mrf.mxu0
    %v1554 = vadd.f32 0.0, %v1553
    %v1555 = vpop.f32.mrf.mxu0
    %1556 = vmatprep.mubr.bf16.mxu0 0
    %1557 = vmatmul.mubr.bf16.gmra.mxu0 %v1503
    %v1558 = vpop.f32.mrf.mxu0
    %v1559 = vadd.f32 0.0, %v1558
    %v1560 = vpop.f32.mrf.mxu0
    %v1561 = vpop.f32.mrf.mxu0
    %v1562 = vadd.f32 0.0, %v1561
    %v1563 = vpop.f32.mrf.mxu0
    %1564 = vmatprep.mubr.bf16.mxu0 0
    %1565 = vmatmul.mubr.bf16.gmra.mxu0 %v1506
    %v1566 = vpop.f32.mrf.mxu0
    %v1567 = vadd.f32 0.0, %v1566
    %v1568 = vpop.f32.mrf.mxu0
    %v1569 = vpop.f32.mrf.mxu0
    %v1570 = vadd.f32 0.0, %v1569
    %v1571 = vpop.f32.mrf.mxu0
    %1572 = vdwg.mxu0
    %1577 = vrot.lane.b32.xlu0 %v500, 96
    %v1578 = vpop.permute.xlu0 %1577
    %1579 = vrot.lane.b32.xlu0 %v501, 96
    %v1580 = vpop.permute.xlu0 %1579
    %1581 = vrot.lane.b32.xlu0 %v502, 96
    %v1582 = vpop.permute.xlu0 %1581
    %1583 = vrot.lane.b32.xlu0 %v503, 96
    %v1584 = vpop.permute.xlu0 %1583
    %v1590 = vsel %vm699, %v1476, 0
    %v1593 = vsel %vm699, %v1477, 0
    %v1596 = vsel %vm699, %v1478, 0
    %v1599 = vsel %vm699, %v1479, 0
    %1601 = vmatprep.subr.bf16.mxu0 0
    %1602 = vmatpush1.bf16.msra.mxu0 0
    %1603 = vmatprep.subr.bf16.mxu0 0
    %1604 = vmatpush1.bf16.msra.mxu0 0
    %1605 = vmatprep.subr.bf16.mxu0 0
    %1606 = vmatpush1.bf16.msra.mxu0 0
    %1607 = vmatprep.subr.bf16.mxu0 0
    %1608 = vmatpush1.bf16.msra.mxu0 0
    %1609 = vmatprep.subr.bf16.mxu0 0
    %1610 = vmatpush1.bf16.msra.mxu0 %v1584
    %1611 = vmatprep.subr.bf16.mxu0 0
    %1612 = vmatpush1.bf16.msra.mxu0 %v1582
    %1613 = vmatprep.subr.bf16.mxu0 0
    %1614 = vmatpush1.bf16.msra.mxu0 %v1580
    %1615 = vmatprep.subr.bf16.mxu0 0
    %1616 = vmatpush1.bf16.msra.mxu0 %v1578
    %1617 = vmatprep.subr.bf16.mxu0 0
    %1618 = vmatpush2.bf16.msra.mxu0 0
    %1619 = vmatprep.subr.bf16.mxu0 0
    %1620 = vmatpush2.bf16.msra.mxu0 0
    %1621 = vmatprep.subr.bf16.mxu0 0
    %1622 = vmatpush2.bf16.msra.mxu0 0
    %1623 = vmatprep.subr.bf16.mxu0 0
    %1624 = vmatpush2.bf16.msra.mxu0 0
    %1625 = vmatprep.subr.bf16.mxu0 0
    %1626 = vmatpush2.bf16.msra.mxu0 0
    %1627 = vmatprep.subr.bf16.mxu0 0
    %1628 = vmatpush2.bf16.msra.mxu0 0
    %1629 = vmatprep.subr.bf16.mxu0 0
    %1630 = vmatpush2.bf16.msra.mxu0 0
    %1631 = vmatprep.subr.bf16.mxu0 0
    %1632 = vmatpush2.bf16.msra.mxu0 0
    %1633 = vmatprep.mubr.bf16.mxu0 0
    %1634 = vmatmul.mubr.bf16.gmra.mxu0 %v1590
    %v1635 = vpop.f32.mrf.mxu0
    %v1636 = vadd.f32 0.0, %v1635
    %v1637 = vpop.f32.mrf.mxu0
    %v1638 = vpop.f32.mrf.mxu0
    %v1639 = vadd.f32 0.0, %v1638
    %v1640 = vpop.f32.mrf.mxu0
    %1641 = vmatprep.mubr.bf16.mxu0 0
    %1642 = vmatmul.mubr.bf16.gmra.mxu0 %v1593
    %v1643 = vpop.f32.mrf.mxu0
    %v1644 = vadd.f32 0.0, %v1643
    %v1645 = vpop.f32.mrf.mxu0
    %v1646 = vpop.f32.mrf.mxu0
    %v1647 = vadd.f32 0.0, %v1646
    %v1648 = vpop.f32.mrf.mxu0
    %1649 = vmatprep.mubr.bf16.mxu0 0
    %1650 = vmatmul.mubr.bf16.gmra.mxu0 %v1596
    %v1651 = vpop.f32.mrf.mxu0
    %v1652 = vadd.f32 0.0, %v1651
    %v1653 = vpop.f32.mrf.mxu0
    %v1654 = vpop.f32.mrf.mxu0
    %v1655 = vadd.f32 0.0, %v1654
    %v1656 = vpop.f32.mrf.mxu0
    %1657 = vmatprep.mubr.bf16.mxu0 0
    %1658 = vmatmul.mubr.bf16.gmra.mxu0 %v1599
    %v1659 = vpop.f32.mrf.mxu0
    %v1660 = vadd.f32 0.0, %v1659
    %v1661 = vpop.f32.mrf.mxu0
    %v1662 = vpop.f32.mrf.mxu0
    %v1663 = vadd.f32 0.0, %v1662
    %v1664 = vpop.f32.mrf.mxu0
    %1665 = vdwg.mxu0
    %1682 = vrot.lane.b32.xlu0 %v1543, 32
    %v1683 = vpop.permute.xlu0 %1682
    %1684 = vrot.lane.b32.xlu0 %v1546, 32
    %v1685 = vpop.permute.xlu0 %1684
    %1686 = vrot.lane.b32.xlu0 %v1551, 32
    %v1687 = vpop.permute.xlu0 %1686
    %1688 = vrot.lane.b32.xlu0 %v1554, 32
    %v1689 = vpop.permute.xlu0 %1688
    %1690 = vrot.lane.b32.xlu0 %v1559, 32
    %v1691 = vpop.permute.xlu0 %1690
    %1692 = vrot.lane.b32.xlu0 %v1562, 32
    %v1693 = vpop.permute.xlu0 %1692
    %1694 = vrot.lane.b32.xlu0 %v1567, 32
    %v1695 = vpop.permute.xlu0 %1694
    %1696 = vrot.lane.b32.xlu0 %v1570, 32
    %v1697 = vpop.permute.xlu0 %1696
    %1698 = vrot.lane.b32.xlu0 %v1636, 32
    %v1699 = vpop.permute.xlu0 %1698
    %1700 = vrot.lane.b32.xlu0 %v1639, 32
    %v1701 = vpop.permute.xlu0 %1700
    %1702 = vrot.lane.b32.xlu0 %v1644, 32
    %v1703 = vpop.permute.xlu0 %1702
    %1704 = vrot.lane.b32.xlu0 %v1647, 32
    %v1705 = vpop.permute.xlu0 %1704
    %1706 = vrot.lane.b32.xlu0 %v1652, 32
    %v1707 = vpop.permute.xlu0 %1706
    %1708 = vrot.lane.b32.xlu0 %v1655, 32
    %v1709 = vpop.permute.xlu0 %1708
    %1710 = vrot.lane.b32.xlu0 %v1660, 32
    %v1711 = vpop.permute.xlu0 %1710
    %1712 = vrot.lane.b32.xlu0 %v1663, 32
    %v1713 = vpop.permute.xlu0 %1712
    %vm1730 = vcmask 523520
    %1731 = vst.msk [vmem:[#allocation2] sm:$0xff] %vm1730, %v1683
    %1732 = vst.msk [vmem:[#allocation2 + $0x8] sm:$0xff] %vm1730, %v1685
    %1733 = vst.msk [vmem:[#allocation2 + $0x10] sm:$0xff] %vm1730, %v1687
    %1734 = vst.msk [vmem:[#allocation2 + $0x18] sm:$0xff] %vm1730, %v1689
    %1735 = vst.msk [vmem:[#allocation2 + $0x20] sm:$0xff] %vm1730, %v1691
    %1736 = vst.msk [vmem:[#allocation2 + $0x28] sm:$0xff] %vm1730, %v1693
    %1737 = vst.msk [vmem:[#allocation2 + $0x30] sm:$0xff] %vm1730, %v1695
    %1738 = vst.msk [vmem:[#allocation2 + $0x38] sm:$0xff] %vm1730, %v1697
    %1739 = vst.msk [vmem:[#allocation2 + $0x40] sm:$0xff] %vm1730, %v1699
    %1740 = vst.msk [vmem:[#allocation2 + $0x48] sm:$0xff] %vm1730, %v1701
    %1741 = vst.msk [vmem:[#allocation2 + $0x50] sm:$0xff] %vm1730, %v1703
    %1742 = vst.msk [vmem:[#allocation2 + $0x58] sm:$0xff] %vm1730, %v1705
    %1743 = vst.msk [vmem:[#allocation2 + $0x60] sm:$0xff] %vm1730, %v1707
    %1744 = vst.msk [vmem:[#allocation2 + $0x68] sm:$0xff] %vm1730, %v1709
    %1745 = vst.msk [vmem:[#allocation2 + $0x70] sm:$0xff] %vm1730, %v1711
    %1746 = vst.msk [vmem:[#allocation2 + $0x78] sm:$0xff] %vm1730, %v1713
    %1747 = vrot.lane.b32.xlu0 %v480, 64
    %v1748 = vpop.permute.xlu0 %1747
    %1749 = vrot.lane.b32.xlu0 %v481, 64
    %v1750 = vpop.permute.xlu0 %1749
    %1751 = vrot.lane.b32.xlu0 %v482, 64
    %v1752 = vpop.permute.xlu0 %1751
    %1753 = vrot.lane.b32.xlu0 %v483, 64
    %v1754 = vpop.permute.xlu0 %1753
    %1755 = vrot.lane.b32.xlu0 %v488, 64
    %v1756 = vpop.permute.xlu0 %1755
    %1757 = vrot.lane.b32.xlu0 %v489, 64
    %v1758 = vpop.permute.xlu0 %1757
    %1759 = vrot.lane.b32.xlu0 %v490, 64
    %v1760 = vpop.permute.xlu0 %1759
    %1761 = vrot.lane.b32.xlu0 %v491, 64
    %v1762 = vpop.permute.xlu0 %1761
    %v1764 = vsel %vm504, %v1748, 0
    %v1767 = vsel %vm504, %v1750, 0
    %v1770 = vsel %vm504, %v1752, 0
    %v1773 = vsel %vm504, %v1754, 0
    %v1776 = vsel %vm504, %v1756, 0
    %v1779 = vsel %vm504, %v1758, 0
    %v1782 = vsel %vm504, %v1760, 0
    %v1785 = vsel %vm504, %v1762, 0
    %1787 = vmatprep.subr.bf16.mxu0 0
    %1788 = vmatpush1.bf16.xpose.msra.mxu0 0
    %1789 = vmatprep.subr.bf16.mxu0 0
    %1790 = vmatpush1.bf16.xpose.msra.mxu0 0
    %1791 = vmatprep.subr.bf16.mxu0 0
    %1792 = vmatpush1.bf16.xpose.msra.mxu0 0
    %1793 = vmatprep.subr.bf16.mxu0 0
    %1794 = vmatpush1.bf16.xpose.msra.mxu0 0
    %1795 = vmatprep.subr.bf16.mxu0 0
    %1796 = vmatpush1.bf16.xpose.msra.mxu0 %v1785
    %1797 = vmatprep.subr.bf16.mxu0 0
    %1798 = vmatpush1.bf16.xpose.msra.mxu0 %v1782
    %1799 = vmatprep.subr.bf16.mxu0 0
    %1800 = vmatpush1.bf16.xpose.msra.mxu0 %v1779
    %1801 = vmatprep.subr.bf16.mxu0 0
    %1802 = vmatpush1.bf16.xpose.msra.mxu0 %v1776
    %1803 = vmatprep.subr.bf16.mxu0 0
    %1804 = vmatpush2.bf16.xpose.msra.mxu0 0
    %1805 = vmatprep.subr.bf16.mxu0 0
    %1806 = vmatpush2.bf16.xpose.msra.mxu0 0
    %1807 = vmatprep.subr.bf16.mxu0 0
    %1808 = vmatpush2.bf16.xpose.msra.mxu0 0
    %1809 = vmatprep.subr.bf16.mxu0 0
    %1810 = vmatpush2.bf16.xpose.msra.mxu0 0
    %1811 = vmatprep.subr.bf16.mxu0 0
    %1812 = vmatpush2.bf16.xpose.msra.mxu0 0
    %1813 = vmatprep.subr.bf16.mxu0 0
    %1814 = vmatpush2.bf16.xpose.msra.mxu0 0
    %1815 = vmatprep.subr.bf16.mxu0 0
    %1816 = vmatpush2.bf16.xpose.msra.mxu0 0
    %1817 = vmatprep.subr.bf16.mxu0 0
    %1818 = vmatpush2.bf16.xpose.msra.mxu0 0
    %1819 = vmatprep.mubr.bf16.mxu0 0
    %1820 = vmatmul.mubr.bf16.gmra.mxu0 %v1764
    %v1821 = vpop.f32.mrf.mxu0
    %v1822 = vadd.f32 0.0, %v1821
    %v1823 = vpop.f32.mrf.mxu0
    %v1824 = vpop.f32.mrf.mxu0
    %v1825 = vadd.f32 0.0, %v1824
    %v1826 = vpop.f32.mrf.mxu0
    %1827 = vmatprep.mubr.bf16.mxu0 0
    %1828 = vmatmul.mubr.bf16.gmra.mxu0 %v1767
    %v1829 = vpop.f32.mrf.mxu0
    %v1830 = vadd.f32 0.0, %v1829
    %v1831 = vpop.f32.mrf.mxu0
    %v1832 = vpop.f32.mrf.mxu0
    %v1833 = vadd.f32 0.0, %v1832
    %v1834 = vpop.f32.mrf.mxu0
    %1835 = vmatprep.mubr.bf16.mxu0 0
    %1836 = vmatmul.mubr.bf16.gmra.mxu0 %v1770
    %v1837 = vpop.f32.mrf.mxu0
    %v1838 = vadd.f32 0.0, %v1837
    %v1839 = vpop.f32.mrf.mxu0
    %v1840 = vpop.f32.mrf.mxu0
    %v1841 = vadd.f32 0.0, %v1840
    %v1842 = vpop.f32.mrf.mxu0
    %1843 = vmatprep.mubr.bf16.mxu0 0
    %1844 = vmatmul.mubr.bf16.gmra.mxu0 %v1773
    %v1845 = vpop.f32.mrf.mxu0
    %v1846 = vadd.f32 0.0, %v1845
    %v1847 = vpop.f32.mrf.mxu0
    %v1848 = vpop.f32.mrf.mxu0
    %v1849 = vadd.f32 0.0, %v1848
    %v1850 = vpop.f32.mrf.mxu0
    %1851 = vdwg.mxu0
    %1852 = vrot.lane.b32.xlu0 %v484, 64
    %v1853 = vpop.permute.xlu0 %1852
    %1854 = vrot.lane.b32.xlu0 %v485, 64
    %v1855 = vpop.permute.xlu0 %1854
    %1856 = vrot.lane.b32.xlu0 %v486, 64
    %v1857 = vpop.permute.xlu0 %1856
    %1858 = vrot.lane.b32.xlu0 %v487, 64
    %v1859 = vpop.permute.xlu0 %1858
    %1860 = vrot.lane.b32.xlu0 %v492, 64
    %v1861 = vpop.permute.xlu0 %1860
    %1862 = vrot.lane.b32.xlu0 %v493, 64
    %v1863 = vpop.permute.xlu0 %1862
    %1864 = vrot.lane.b32.xlu0 %v494, 64
    %v1865 = vpop.permute.xlu0 %1864
    %1866 = vrot.lane.b32.xlu0 %v495, 64
    %v1867 = vpop.permute.xlu0 %1866
    %v1869 = vsel %vm504, %v1853, 0
    %v1872 = vsel %vm504, %v1855, 0
    %v1875 = vsel %vm504, %v1857, 0
    %v1878 = vsel %vm504, %v1859, 0
    %v1881 = vsel %vm504, %v1861, 0
    %v1884 = vsel %vm504, %v1863, 0
    %v1887 = vsel %vm504, %v1865, 0
    %v1890 = vsel %vm504, %v1867, 0
    %1892 = vmatprep.subr.bf16.mxu0 0
    %1893 = vmatpush1.bf16.xpose.msra.mxu0 0
    %1894 = vmatprep.subr.bf16.mxu0 0
    %1895 = vmatpush1.bf16.xpose.msra.mxu0 0
    %1896 = vmatprep.subr.bf16.mxu0 0
    %1897 = vmatpush1.bf16.xpose.msra.mxu0 0
    %1898 = vmatprep.subr.bf16.mxu0 0
    %1899 = vmatpush1.bf16.xpose.msra.mxu0 0
    %1900 = vmatprep.subr.bf16.mxu0 0
    %1901 = vmatpush1.bf16.xpose.msra.mxu0 %v1890
    %1902 = vmatprep.subr.bf16.mxu0 0
    %1903 = vmatpush1.bf16.xpose.msra.mxu0 %v1887
    %1904 = vmatprep.subr.bf16.mxu0 0
    %1905 = vmatpush1.bf16.xpose.msra.mxu0 %v1884
    %1906 = vmatprep.subr.bf16.mxu0 0
    %1907 = vmatpush1.bf16.xpose.msra.mxu0 %v1881
    %1908 = vmatprep.subr.bf16.mxu0 0
    %1909 = vmatpush2.bf16.xpose.msra.mxu0 0
    %1910 = vmatprep.subr.bf16.mxu0 0
    %1911 = vmatpush2.bf16.xpose.msra.mxu0 0
    %1912 = vmatprep.subr.bf16.mxu0 0
    %1913 = vmatpush2.bf16.xpose.msra.mxu0 0
    %1914 = vmatprep.subr.bf16.mxu0 0
    %1915 = vmatpush2.bf16.xpose.msra.mxu0 0
    %1916 = vmatprep.subr.bf16.mxu0 0
    %1917 = vmatpush2.bf16.xpose.msra.mxu0 0
    %1918 = vmatprep.subr.bf16.mxu0 0
    %1919 = vmatpush2.bf16.xpose.msra.mxu0 0
    %1920 = vmatprep.subr.bf16.mxu0 0
    %1921 = vmatpush2.bf16.xpose.msra.mxu0 0
    %1922 = vmatprep.subr.bf16.mxu0 0
    %1923 = vmatpush2.bf16.xpose.msra.mxu0 0
    %1924 = vmatprep.mubr.bf16.mxu0 0
    %1925 = vmatmul.mubr.bf16.gmra.mxu0 %v1869
    %v1926 = vpop.f32.mrf.mxu0
    %v1927 = vadd.f32 0.0, %v1926
    %v1928 = vpop.f32.mrf.mxu0
    %v1929 = vpop.f32.mrf.mxu0
    %v1930 = vadd.f32 0.0, %v1929
    %v1931 = vpop.f32.mrf.mxu0
    %1932 = vmatprep.mubr.bf16.mxu0 0
    %1933 = vmatmul.mubr.bf16.gmra.mxu0 %v1872
    %v1934 = vpop.f32.mrf.mxu0
    %v1935 = vadd.f32 0.0, %v1934
    %v1936 = vpop.f32.mrf.mxu0
    %v1937 = vpop.f32.mrf.mxu0
    %v1938 = vadd.f32 0.0, %v1937
    %v1939 = vpop.f32.mrf.mxu0
    %1940 = vmatprep.mubr.bf16.mxu0 0
    %1941 = vmatmul.mubr.bf16.gmra.mxu0 %v1875
    %v1942 = vpop.f32.mrf.mxu0
    %v1943 = vadd.f32 0.0, %v1942
    %v1944 = vpop.f32.mrf.mxu0
    %v1945 = vpop.f32.mrf.mxu0
    %v1946 = vadd.f32 0.0, %v1945
    %v1947 = vpop.f32.mrf.mxu0
    %1948 = vmatprep.mubr.bf16.mxu0 0
    %1949 = vmatmul.mubr.bf16.gmra.mxu0 %v1878
    %v1950 = vpop.f32.mrf.mxu0
    %v1951 = vadd.f32 0.0, %v1950
    %v1952 = vpop.f32.mrf.mxu0
    %v1953 = vpop.f32.mrf.mxu0
    %v1954 = vadd.f32 0.0, %v1953
    %v1955 = vpop.f32.mrf.mxu0
    %1956 = vdwg.mxu0
    %v1957 = vmul.f32 %v1822, 0.17677669
    %v1958 = vmul.f32 %v1825, 0.17677669
    %v1959 = vmul.f32 %v1830, 0.17677669
    %v1960 = vmul.f32 %v1833, 0.17677669
    %v1961 = vmul.f32 %v1838, 0.17677669
    %v1962 = vmul.f32 %v1841, 0.17677669
    %v1963 = vmul.f32 %v1846, 0.17677669
    %v1964 = vmul.f32 %v1849, 0.17677669
    %v1965 = vmul.f32 %v1927, 0.17677669
    %v1966 = vmul.f32 %v1930, 0.17677669
    %v1967 = vmul.f32 %v1935, 0.17677669
    %v1968 = vmul.f32 %v1938, 0.17677669
    %v1969 = vmul.f32 %v1943, 0.17677669
    %v1970 = vmul.f32 %v1946, 0.17677669
    %v1971 = vmul.f32 %v1951, 0.17677669
    %v1972 = vmul.f32 %v1954, 0.17677669
    %v1973 = vsel %vm699, %v1957, -inf
    %1974 = vmax.xlane.f32.xlu0 %v1973
    %v1975 = vpop.xlane.xlu0 %1974
    %v1976 = vsel %vm699, %v1958, -inf
    %1977 = vmax.xlane.f32.xlu0 %v1976
    %v1978 = vpop.xlane.xlu0 %1977
    %v1979 = vsel %vm699, %v1959, -inf
    %1980 = vmax.xlane.f32.xlu0 %v1979
    %v1981 = vpop.xlane.xlu0 %1980
    %v1982 = vsel %vm699, %v1960, -inf
    %1983 = vmax.xlane.f32.xlu0 %v1982
    %v1984 = vpop.xlane.xlu0 %1983
    %v1985 = vsel %vm699, %v1961, -inf
    %1986 = vmax.xlane.f32.xlu0 %v1985
    %v1987 = vpop.xlane.xlu0 %1986
    %v1988 = vsel %vm699, %v1962, -inf
    %1989 = vmax.xlane.f32.xlu0 %v1988
    %v1990 = vpop.xlane.xlu0 %1989
    %v1991 = vsel %vm699, %v1963, -inf
    %1992 = vmax.xlane.f32.xlu0 %v1991
    %v1993 = vpop.xlane.xlu0 %1992
    %v1994 = vsel %vm699, %v1964, -inf
    %1995 = vmax.xlane.f32.xlu0 %v1994
    %v1996 = vpop.xlane.xlu0 %1995
    %v1997 = vsel %vm699, %v1965, -inf
    %1998 = vmax.xlane.f32.xlu0 %v1997
    %v1999 = vpop.xlane.xlu0 %1998
    %v2000 = vsel %vm699, %v1966, -inf
    %2001 = vmax.xlane.f32.xlu0 %v2000
    %v2002 = vpop.xlane.xlu0 %2001
    %v2003 = vsel %vm699, %v1967, -inf
    %2004 = vmax.xlane.f32.xlu0 %v2003
    %v2005 = vpop.xlane.xlu0 %2004
    %v2006 = vsel %vm699, %v1968, -inf
    %2007 = vmax.xlane.f32.xlu0 %v2006
    %v2008 = vpop.xlane.xlu0 %2007
    %v2009 = vsel %vm699, %v1969, -inf
    %2010 = vmax.xlane.f32.xlu0 %v2009
    %v2011 = vpop.xlane.xlu0 %2010
    %v2012 = vsel %vm699, %v1970, -inf
    %2013 = vmax.xlane.f32.xlu0 %v2012
    %v2014 = vpop.xlane.xlu0 %2013
    %v2015 = vsel %vm699, %v1971, -inf
    %2016 = vmax.xlane.f32.xlu0 %v2015
    %v2017 = vpop.xlane.xlu0 %2016
    %v2018 = vsel %vm699, %v1972, -inf
    %2019 = vmax.xlane.f32.xlu0 %v2018
    %v2020 = vpop.xlane.xlu0 %2019
    %v2021 = vsub.f32 %v1957, %v1975
    %v2022 = vsub.f32 %v1958, %v1978
    %v2023 = vsub.f32 %v1959, %v1981
    %v2024 = vsub.f32 %v1960, %v1984
    %v2025 = vsub.f32 %v1961, %v1987
    %v2026 = vsub.f32 %v1962, %v1990
    %v2027 = vsub.f32 %v1963, %v1993
    %v2028 = vsub.f32 %v1964, %v1996
    %v2029 = vsub.f32 %v1965, %v1999
    %v2030 = vsub.f32 %v1966, %v2002
    %v2031 = vsub.f32 %v1967, %v2005
    %v2032 = vsub.f32 %v1968, %v2008
    %v2033 = vsub.f32 %v1969, %v2011
    %v2034 = vsub.f32 %v1970, %v2014
    %v2035 = vsub.f32 %v1971, %v2017
    %v2036 = vsub.f32 %v1972, %v2020
    %v2037 = vmul.f32 %v2021, 1.442695
    %v2038 = vpow.pop %v2037
    %v2039 = vmul.f32 %v2022, 1.442695
    %v2040 = vpow.pop %v2039
    %v2041 = vmul.f32 %v2023, 1.442695
    %v2042 = vpow.pop %v2041
    %v2043 = vmul.f32 %v2024, 1.442695
    %v2044 = vpow.pop %v2043
    %v2045 = vmul.f32 %v2025, 1.442695
    %v2046 = vpow.pop %v2045
    %v2047 = vmul.f32 %v2026, 1.442695
    %v2048 = vpow.pop %v2047
    %v2049 = vmul.f32 %v2027, 1.442695
    %v2050 = vpow.pop %v2049
    %v2051 = vmul.f32 %v2028, 1.442695
    %v2052 = vpow.pop %v2051
    %v2053 = vmul.f32 %v2029, 1.442695
    %v2054 = vpow.pop %v2053
    %v2055 = vmul.f32 %v2030, 1.442695
    %v2056 = vpow.pop %v2055
    %v2057 = vmul.f32 %v2031, 1.442695
    %v2058 = vpow.pop %v2057
    %v2059 = vmul.f32 %v2032, 1.442695
    %v2060 = vpow.pop %v2059
    %v2061 = vmul.f32 %v2033, 1.442695
    %v2062 = vpow.pop %v2061
    %v2063 = vmul.f32 %v2034, 1.442695
    %v2064 = vpow.pop %v2063
    %v2065 = vmul.f32 %v2035, 1.442695
    %v2066 = vpow.pop %v2065
    %v2067 = vmul.f32 %v2036, 1.442695
    %v2068 = vpow.pop %v2067
    %v2069 = vsel %vm699, %v2038, 0.0
    %2070 = vadd.xlane.f32.xlu0 %v2069
    %v2071 = vpop.xlane.xlu0 %2070
    %v2072 = vsel %vm699, %v2040, 0.0
    %2073 = vadd.xlane.f32.xlu0 %v2072
    %v2074 = vpop.xlane.xlu0 %2073
    %v2075 = vsel %vm699, %v2042, 0.0
    %2076 = vadd.xlane.f32.xlu0 %v2075
    %v2077 = vpop.xlane.xlu0 %2076
    %v2078 = vsel %vm699, %v2044, 0.0
    %2079 = vadd.xlane.f32.xlu0 %v2078
    %v2080 = vpop.xlane.xlu0 %2079
    %v2081 = vsel %vm699, %v2046, 0.0
    %2082 = vadd.xlane.f32.xlu0 %v2081
    %v2083 = vpop.xlane.xlu0 %2082
    %v2084 = vsel %vm699, %v2048, 0.0
    %2085 = vadd.xlane.f32.xlu0 %v2084
    %v2086 = vpop.xlane.xlu0 %2085
    %v2087 = vsel %vm699, %v2050, 0.0
    %2088 = vadd.xlane.f32.xlu0 %v2087
    %v2089 = vpop.xlane.xlu0 %2088
    %v2090 = vsel %vm699, %v2052, 0.0
    %2091 = vadd.xlane.f32.xlu0 %v2090
    %v2092 = vpop.xlane.xlu0 %2091
    %v2093 = vsel %vm699, %v2054, 0.0
    %2094 = vadd.xlane.f32.xlu0 %v2093
    %v2095 = vpop.xlane.xlu0 %2094
    %v2096 = vsel %vm699, %v2056, 0.0
    %2097 = vadd.xlane.f32.xlu0 %v2096
    %v2098 = vpop.xlane.xlu0 %2097
    %v2099 = vsel %vm699, %v2058, 0.0
    %2100 = vadd.xlane.f32.xlu0 %v2099
    %v2101 = vpop.xlane.xlu0 %2100
    %v2102 = vsel %vm699, %v2060, 0.0
    %2103 = vadd.xlane.f32.xlu0 %v2102
    %v2104 = vpop.xlane.xlu0 %2103
    %v2105 = vsel %vm699, %v2062, 0.0
    %2106 = vadd.xlane.f32.xlu0 %v2105
    %v2107 = vpop.xlane.xlu0 %2106
    %v2108 = vsel %vm699, %v2064, 0.0
    %2109 = vadd.xlane.f32.xlu0 %v2108
    %v2110 = vpop.xlane.xlu0 %2109
    %v2111 = vsel %vm699, %v2066, 0.0
    %2112 = vadd.xlane.f32.xlu0 %v2111
    %v2113 = vpop.xlane.xlu0 %2112
    %v2114 = vsel %vm699, %v2068, 0.0
    %2115 = vadd.xlane.f32.xlu0 %v2114
    %v2116 = vpop.xlane.xlu0 %2115
    %v2117 = vrcp.pop %v2071
    %v2118 = vmul.f32 %v2038, %v2117
    %v2119 = vrcp.pop %v2074
    %v2120 = vmul.f32 %v2040, %v2119
    %v2121 = vrcp.pop %v2077
    %v2122 = vmul.f32 %v2042, %v2121
    %v2123 = vrcp.pop %v2080
    %v2124 = vmul.f32 %v2044, %v2123
    %v2125 = vrcp.pop %v2083
    %v2126 = vmul.f32 %v2046, %v2125
    %v2127 = vrcp.pop %v2086
    %v2128 = vmul.f32 %v2048, %v2127
    %v2129 = vrcp.pop %v2089
    %v2130 = vmul.f32 %v2050, %v2129
    %v2131 = vrcp.pop %v2092
    %v2132 = vmul.f32 %v2052, %v2131
    %v2133 = vrcp.pop %v2095
    %v2134 = vmul.f32 %v2054, %v2133
    %v2135 = vrcp.pop %v2098
    %v2136 = vmul.f32 %v2056, %v2135
    %v2137 = vrcp.pop %v2101
    %v2138 = vmul.f32 %v2058, %v2137
    %v2139 = vrcp.pop %v2104
    %v2140 = vmul.f32 %v2060, %v2139
    %v2141 = vrcp.pop %v2107
    %v2142 = vmul.f32 %v2062, %v2141
    %v2143 = vrcp.pop %v2110
    %v2144 = vmul.f32 %v2064, %v2143
    %v2145 = vrcp.pop %v2113
    %v2146 = vmul.f32 %v2066, %v2145
    %v2147 = vrcp.pop %v2116
    %v2148 = vmul.f32 %v2068, %v2147
    %v2149 = vpack.c.bf16 %v2120, %v2118
    %v2150 = vpack.c.bf16 %v2124, %v2122
    %v2151 = vpack.c.bf16 %v2128, %v2126
    %v2152 = vpack.c.bf16 %v2132, %v2130
    %v2153 = vpack.c.bf16 %v2136, %v2134
    %v2154 = vpack.c.bf16 %v2140, %v2138
    %v2155 = vpack.c.bf16 %v2144, %v2142
    %v2156 = vpack.c.bf16 %v2148, %v2146
    %2157 = vrot.lane.b32.xlu0 %v496, 64
    %v2158 = vpop.permute.xlu0 %2157
    %2159 = vrot.lane.b32.xlu0 %v497, 64
    %v2160 = vpop.permute.xlu0 %2159
    %2161 = vrot.lane.b32.xlu0 %v498, 64
    %v2162 = vpop.permute.xlu0 %2161
    %2163 = vrot.lane.b32.xlu0 %v499, 64
    %v2164 = vpop.permute.xlu0 %2163
    %v2170 = vsel %vm699, %v2149, 0
    %v2173 = vsel %vm699, %v2150, 0
    %v2176 = vsel %vm699, %v2151, 0
    %v2179 = vsel %vm699, %v2152, 0
    %2181 = vmatprep.subr.bf16.mxu0 0
    %2182 = vmatpush1.bf16.msra.mxu0 0
    %2183 = vmatprep.subr.bf16.mxu0 0
    %2184 = vmatpush1.bf16.msra.mxu0 0
    %2185 = vmatprep.subr.bf16.mxu0 0
    %2186 = vmatpush1.bf16.msra.mxu0 0
    %2187 = vmatprep.subr.bf16.mxu0 0
    %2188 = vmatpush1.bf16.msra.mxu0 0
    %2189 = vmatprep.subr.bf16.mxu0 0
    %2190 = vmatpush1.bf16.msra.mxu0 %v2164
    %2191 = vmatprep.subr.bf16.mxu0 0
    %2192 = vmatpush1.bf16.msra.mxu0 %v2162
    %2193 = vmatprep.subr.bf16.mxu0 0
    %2194 = vmatpush1.bf16.msra.mxu0 %v2160
    %2195 = vmatprep.subr.bf16.mxu0 0
    %2196 = vmatpush1.bf16.msra.mxu0 %v2158
    %2197 = vmatprep.subr.bf16.mxu0 0
    %2198 = vmatpush2.bf16.msra.mxu0 0
    %2199 = vmatprep.subr.bf16.mxu0 0
    %2200 = vmatpush2.bf16.msra.mxu0 0
    %2201 = vmatprep.subr.bf16.mxu0 0
    %2202 = vmatpush2.bf16.msra.mxu0 0
    %2203 = vmatprep.subr.bf16.mxu0 0
    %2204 = vmatpush2.bf16.msra.mxu0 0
    %2205 = vmatprep.subr.bf16.mxu0 0
    %2206 = vmatpush2.bf16.msra.mxu0 0
    %2207 = vmatprep.subr.bf16.mxu0 0
    %2208 = vmatpush2.bf16.msra.mxu0 0
    %2209 = vmatprep.subr.bf16.mxu0 0
    %2210 = vmatpush2.bf16.msra.mxu0 0
    %2211 = vmatprep.subr.bf16.mxu0 0
    %2212 = vmatpush2.bf16.msra.mxu0 0
    %2213 = vmatprep.mubr.bf16.mxu0 0
    %2214 = vmatmul.mubr.bf16.gmra.mxu0 %v2170
    %v2215 = vpop.f32.mrf.mxu0
    %v2216 = vadd.f32 0.0, %v2215
    %v2217 = vpop.f32.mrf.mxu0
    %v2218 = vpop.f32.mrf.mxu0
    %v2219 = vadd.f32 0.0, %v2218
    %v2220 = vpop.f32.mrf.mxu0
    %2221 = vmatprep.mubr.bf16.mxu0 0
    %2222 = vmatmul.mubr.bf16.gmra.mxu0 %v2173
    %v2223 = vpop.f32.mrf.mxu0
    %v2224 = vadd.f32 0.0, %v2223
    %v2225 = vpop.f32.mrf.mxu0
    %v2226 = vpop.f32.mrf.mxu0
    %v2227 = vadd.f32 0.0, %v2226
    %v2228 = vpop.f32.mrf.mxu0
    %2229 = vmatprep.mubr.bf16.mxu0 0
    %2230 = vmatmul.mubr.bf16.gmra.mxu0 %v2176
    %v2231 = vpop.f32.mrf.mxu0
    %v2232 = vadd.f32 0.0, %v2231
    %v2233 = vpop.f32.mrf.mxu0
    %v2234 = vpop.f32.mrf.mxu0
    %v2235 = vadd.f32 0.0, %v2234
    %v2236 = vpop.f32.mrf.mxu0
    %2237 = vmatprep.mubr.bf16.mxu0 0
    %2238 = vmatmul.mubr.bf16.gmra.mxu0 %v2179
    %v2239 = vpop.f32.mrf.mxu0
    %v2240 = vadd.f32 0.0, %v2239
    %v2241 = vpop.f32.mrf.mxu0
    %v2242 = vpop.f32.mrf.mxu0
    %v2243 = vadd.f32 0.0, %v2242
    %v2244 = vpop.f32.mrf.mxu0
    %2245 = vdwg.mxu0
    %2246 = vrot.lane.b32.xlu0 %v500, 64
    %v2247 = vpop.permute.xlu0 %2246
    %2248 = vrot.lane.b32.xlu0 %v501, 64
    %v2249 = vpop.permute.xlu0 %2248
    %2250 = vrot.lane.b32.xlu0 %v502, 64
    %v2251 = vpop.permute.xlu0 %2250
    %2252 = vrot.lane.b32.xlu0 %v503, 64
    %v2253 = vpop.permute.xlu0 %2252
    %v2259 = vsel %vm699, %v2153, 0
    %v2262 = vsel %vm699, %v2154, 0
    %v2265 = vsel %vm699, %v2155, 0
    %v2268 = vsel %vm699, %v2156, 0
    %2270 = vmatprep.subr.bf16.mxu0 0
    %2271 = vmatpush1.bf16.msra.mxu0 0
    %2272 = vmatprep.subr.bf16.mxu0 0
    %2273 = vmatpush1.bf16.msra.mxu0 0
    %2274 = vmatprep.subr.bf16.mxu0 0
    %2275 = vmatpush1.bf16.msra.mxu0 0
    %2276 = vmatprep.subr.bf16.mxu0 0
    %2277 = vmatpush1.bf16.msra.mxu0 0
    %2278 = vmatprep.subr.bf16.mxu0 0
    %2279 = vmatpush1.bf16.msra.mxu0 %v2253
    %2280 = vmatprep.subr.bf16.mxu0 0
    %2281 = vmatpush1.bf16.msra.mxu0 %v2251
    %2282 = vmatprep.subr.bf16.mxu0 0
    %2283 = vmatpush1.bf16.msra.mxu0 %v2249
    %2284 = vmatprep.subr.bf16.mxu0 0
    %2285 = vmatpush1.bf16.msra.mxu0 %v2247
    %2286 = vmatprep.subr.bf16.mxu0 0
    %2287 = vmatpush2.bf16.msra.mxu0 0
    %2288 = vmatprep.subr.bf16.mxu0 0
    %2289 = vmatpush2.bf16.msra.mxu0 0
    %2290 = vmatprep.subr.bf16.mxu0 0
    %2291 = vmatpush2.bf16.msra.mxu0 0
    %2292 = vmatprep.subr.bf16.mxu0 0
    %2293 = vmatpush2.bf16.msra.mxu0 0
    %2294 = vmatprep.subr.bf16.mxu0 0
    %2295 = vmatpush2.bf16.msra.mxu0 0
    %2296 = vmatprep.subr.bf16.mxu0 0
    %2297 = vmatpush2.bf16.msra.mxu0 0
    %2298 = vmatprep.subr.bf16.mxu0 0
    %2299 = vmatpush2.bf16.msra.mxu0 0
    %2300 = vmatprep.subr.bf16.mxu0 0
    %2301 = vmatpush2.bf16.msra.mxu0 0
    %2302 = vmatprep.mubr.bf16.mxu0 0
    %2303 = vmatmul.mubr.bf16.gmra.mxu0 %v2259
    %v2304 = vpop.f32.mrf.mxu0
    %v2305 = vadd.f32 0.0, %v2304
    %v2306 = vpop.f32.mrf.mxu0
    %v2307 = vpop.f32.mrf.mxu0
    %v2308 = vadd.f32 0.0, %v2307
    %v2309 = vpop.f32.mrf.mxu0
    %2310 = vmatprep.mubr.bf16.mxu0 0
    %2311 = vmatmul.mubr.bf16.gmra.mxu0 %v2262
    %v2312 = vpop.f32.mrf.mxu0
    %v2313 = vadd.f32 0.0, %v2312
    %v2314 = vpop.f32.mrf.mxu0
    %v2315 = vpop.f32.mrf.mxu0
    %v2316 = vadd.f32 0.0, %v2315
    %v2317 = vpop.f32.mrf.mxu0
    %2318 = vmatprep.mubr.bf16.mxu0 0
    %2319 = vmatmul.mubr.bf16.gmra.mxu0 %v2265
    %v2320 = vpop.f32.mrf.mxu0
    %v2321 = vadd.f32 0.0, %v2320
    %v2322 = vpop.f32.mrf.mxu0
    %v2323 = vpop.f32.mrf.mxu0
    %v2324 = vadd.f32 0.0, %v2323
    %v2325 = vpop.f32.mrf.mxu0
    %2326 = vmatprep.mubr.bf16.mxu0 0
    %2327 = vmatmul.mubr.bf16.gmra.mxu0 %v2268
    %v2328 = vpop.f32.mrf.mxu0
    %v2329 = vadd.f32 0.0, %v2328
    %v2330 = vpop.f32.mrf.mxu0
    %v2331 = vpop.f32.mrf.mxu0
    %v2332 = vadd.f32 0.0, %v2331
    %v2333 = vpop.f32.mrf.mxu0
    %2334 = vdwg.mxu0
    %2351 = vrot.lane.b32.xlu0 %v2216, 64
    %v2352 = vpop.permute.xlu0 %2351
    %2353 = vrot.lane.b32.xlu0 %v2219, 64
    %v2354 = vpop.permute.xlu0 %2353
    %2355 = vrot.lane.b32.xlu0 %v2224, 64
    %v2356 = vpop.permute.xlu0 %2355
    %2357 = vrot.lane.b32.xlu0 %v2227, 64
    %v2358 = vpop.permute.xlu0 %2357
    %2359 = vrot.lane.b32.xlu0 %v2232, 64
    %v2360 = vpop.permute.xlu0 %2359
    %2361 = vrot.lane.b32.xlu0 %v2235, 64
    %v2362 = vpop.permute.xlu0 %2361
    %2363 = vrot.lane.b32.xlu0 %v2240, 64
    %v2364 = vpop.permute.xlu0 %2363
    %2365 = vrot.lane.b32.xlu0 %v2243, 64
    %v2366 = vpop.permute.xlu0 %2365
    %2367 = vrot.lane.b32.xlu0 %v2305, 64
    %v2368 = vpop.permute.xlu0 %2367
    %2369 = vrot.lane.b32.xlu0 %v2308, 64
    %v2370 = vpop.permute.xlu0 %2369
    %2371 = vrot.lane.b32.xlu0 %v2313, 64
    %v2372 = vpop.permute.xlu0 %2371
    %2373 = vrot.lane.b32.xlu0 %v2316, 64
    %v2374 = vpop.permute.xlu0 %2373
    %2375 = vrot.lane.b32.xlu0 %v2321, 64
    %v2376 = vpop.permute.xlu0 %2375
    %2377 = vrot.lane.b32.xlu0 %v2324, 64
    %v2378 = vpop.permute.xlu0 %2377
    %2379 = vrot.lane.b32.xlu0 %v2329, 64
    %v2380 = vpop.permute.xlu0 %2379
    %2381 = vrot.lane.b32.xlu0 %v2332, 64
    %v2382 = vpop.permute.xlu0 %2381
    %vm2399 = vcmask 785920
    %2400 = vst.msk [vmem:[#allocation2] sm:$0xff] %vm2399, %v2352
    %2401 = vst.msk [vmem:[#allocation2 + $0x8] sm:$0xff] %vm2399, %v2354
    %2402 = vst.msk [vmem:[#allocation2 + $0x10] sm:$0xff] %vm2399, %v2356
    %2403 = vst.msk [vmem:[#allocation2 + $0x18] sm:$0xff] %vm2399, %v2358
    %2404 = vst.msk [vmem:[#allocation2 + $0x20] sm:$0xff] %vm2399, %v2360
    %2405 = vst.msk [vmem:[#allocation2 + $0x28] sm:$0xff] %vm2399, %v2362
    %2406 = vst.msk [vmem:[#allocation2 + $0x30] sm:$0xff] %vm2399, %v2364
    %2407 = vst.msk [vmem:[#allocation2 + $0x38] sm:$0xff] %vm2399, %v2366
    %2408 = vst.msk [vmem:[#allocation2 + $0x40] sm:$0xff] %vm2399, %v2368
    %2409 = vst.msk [vmem:[#allocation2 + $0x48] sm:$0xff] %vm2399, %v2370
    %2410 = vst.msk [vmem:[#allocation2 + $0x50] sm:$0xff] %vm2399, %v2372
    %2411 = vst.msk [vmem:[#allocation2 + $0x58] sm:$0xff] %vm2399, %v2374
    %2412 = vst.msk [vmem:[#allocation2 + $0x60] sm:$0xff] %vm2399, %v2376
    %2413 = vst.msk [vmem:[#allocation2 + $0x68] sm:$0xff] %vm2399, %v2378
    %2414 = vst.msk [vmem:[#allocation2 + $0x70] sm:$0xff] %vm2399, %v2380
    %2415 = vst.msk [vmem:[#allocation2 + $0x78] sm:$0xff] %vm2399, %v2382
    %2416 = vrot.lane.b32.xlu0 %v480, 32
    %v2417 = vpop.permute.xlu0 %2416
    %2418 = vrot.lane.b32.xlu0 %v481, 32
    %v2419 = vpop.permute.xlu0 %2418
    %2420 = vrot.lane.b32.xlu0 %v482, 32
    %v2421 = vpop.permute.xlu0 %2420
    %2422 = vrot.lane.b32.xlu0 %v483, 32
    %v2423 = vpop.permute.xlu0 %2422
    %2424 = vrot.lane.b32.xlu0 %v488, 32
    %v2425 = vpop.permute.xlu0 %2424
    %2426 = vrot.lane.b32.xlu0 %v489, 32
    %v2427 = vpop.permute.xlu0 %2426
    %2428 = vrot.lane.b32.xlu0 %v490, 32
    %v2429 = vpop.permute.xlu0 %2428
    %2430 = vrot.lane.b32.xlu0 %v491, 32
    %v2431 = vpop.permute.xlu0 %2430
    %v2433 = vsel %vm504, %v2417, 0
    %v2436 = vsel %vm504, %v2419, 0
    %v2439 = vsel %vm504, %v2421, 0
    %v2442 = vsel %vm504, %v2423, 0
    %v2445 = vsel %vm504, %v2425, 0
    %v2448 = vsel %vm504, %v2427, 0
    %v2451 = vsel %vm504, %v2429, 0
    %v2454 = vsel %vm504, %v2431, 0
    %2456 = vmatprep.subr.bf16.mxu0 0
    %2457 = vmatpush1.bf16.xpose.msra.mxu0 0
    %2458 = vmatprep.subr.bf16.mxu0 0
    %2459 = vmatpush1.bf16.xpose.msra.mxu0 0
    %2460 = vmatprep.subr.bf16.mxu0 0
    %2461 = vmatpush1.bf16.xpose.msra.mxu0 0
    %2462 = vmatprep.subr.bf16.mxu0 0
    %2463 = vmatpush1.bf16.xpose.msra.mxu0 0
    %2464 = vmatprep.subr.bf16.mxu0 0
    %2465 = vmatpush1.bf16.xpose.msra.mxu0 %v2454
    %2466 = vmatprep.subr.bf16.mxu0 0
    %2467 = vmatpush1.bf16.xpose.msra.mxu0 %v2451
    %2468 = vmatprep.subr.bf16.mxu0 0
    %2469 = vmatpush1.bf16.xpose.msra.mxu0 %v2448
    %2470 = vmatprep.subr.bf16.mxu0 0
    %2471 = vmatpush1.bf16.xpose.msra.mxu0 %v2445
    %2472 = vmatprep.subr.bf16.mxu0 0
    %2473 = vmatpush2.bf16.xpose.msra.mxu0 0
    %2474 = vmatprep.subr.bf16.mxu0 0
    %2475 = vmatpush2.bf16.xpose.msra.mxu0 0
    %2476 = vmatprep.subr.bf16.mxu0 0
    %2477 = vmatpush2.bf16.xpose.msra.mxu0 0
    %2478 = vmatprep.subr.bf16.mxu0 0
    %2479 = vmatpush2.bf16.xpose.msra.mxu0 0
    %2480 = vmatprep.subr.bf16.mxu0 0
    %2481 = vmatpush2.bf16.xpose.msra.mxu0 0
    %2482 = vmatprep.subr.bf16.mxu0 0
    %2483 = vmatpush2.bf16.xpose.msra.mxu0 0
    %2484 = vmatprep.subr.bf16.mxu0 0
    %2485 = vmatpush2.bf16.xpose.msra.mxu0 0
    %2486 = vmatprep.subr.bf16.mxu0 0
    %2487 = vmatpush2.bf16.xpose.msra.mxu0 0
    %2488 = vmatprep.mubr.bf16.mxu0 0
    %2489 = vmatmul.mubr.bf16.gmra.mxu0 %v2433
    %v2490 = vpop.f32.mrf.mxu0
    %v2491 = vadd.f32 0.0, %v2490
    %v2492 = vpop.f32.mrf.mxu0
    %v2493 = vpop.f32.mrf.mxu0
    %v2494 = vadd.f32 0.0, %v2493
    %v2495 = vpop.f32.mrf.mxu0
    %2496 = vmatprep.mubr.bf16.mxu0 0
    %2497 = vmatmul.mubr.bf16.gmra.mxu0 %v2436
    %v2498 = vpop.f32.mrf.mxu0
    %v2499 = vadd.f32 0.0, %v2498
    %v2500 = vpop.f32.mrf.mxu0
    %v2501 = vpop.f32.mrf.mxu0
    %v2502 = vadd.f32 0.0, %v2501
    %v2503 = vpop.f32.mrf.mxu0
    %2504 = vmatprep.mubr.bf16.mxu0 0
    %2505 = vmatmul.mubr.bf16.gmra.mxu0 %v2439
    %v2506 = vpop.f32.mrf.mxu0
    %v2507 = vadd.f32 0.0, %v2506
    %v2508 = vpop.f32.mrf.mxu0
    %v2509 = vpop.f32.mrf.mxu0
    %v2510 = vadd.f32 0.0, %v2509
    %v2511 = vpop.f32.mrf.mxu0
    %2512 = vmatprep.mubr.bf16.mxu0 0
    %2513 = vmatmul.mubr.bf16.gmra.mxu0 %v2442
    %v2514 = vpop.f32.mrf.mxu0
    %v2515 = vadd.f32 0.0, %v2514
    %v2516 = vpop.f32.mrf.mxu0
    %v2517 = vpop.f32.mrf.mxu0
    %v2518 = vadd.f32 0.0, %v2517
    %v2519 = vpop.f32.mrf.mxu0
    %2520 = vdwg.mxu0
    %2521 = vrot.lane.b32.xlu0 %v484, 32
    %v2522 = vpop.permute.xlu0 %2521
    %2523 = vrot.lane.b32.xlu0 %v485, 32
    %v2524 = vpop.permute.xlu0 %2523
    %2525 = vrot.lane.b32.xlu0 %v486, 32
    %v2526 = vpop.permute.xlu0 %2525
    %2527 = vrot.lane.b32.xlu0 %v487, 32
    %v2528 = vpop.permute.xlu0 %2527
    %2529 = vrot.lane.b32.xlu0 %v492, 32
    %v2530 = vpop.permute.xlu0 %2529
    %2531 = vrot.lane.b32.xlu0 %v493, 32
    %v2532 = vpop.permute.xlu0 %2531
    %2533 = vrot.lane.b32.xlu0 %v494, 32
    %v2534 = vpop.permute.xlu0 %2533
    %2535 = vrot.lane.b32.xlu0 %v495, 32
    %v2536 = vpop.permute.xlu0 %2535
    %v2538 = vsel %vm504, %v2522, 0
    %v2541 = vsel %vm504, %v2524, 0
    %v2544 = vsel %vm504, %v2526, 0
    %v2547 = vsel %vm504, %v2528, 0
    %v2550 = vsel %vm504, %v2530, 0
    %v2553 = vsel %vm504, %v2532, 0
    %v2556 = vsel %vm504, %v2534, 0
    %v2559 = vsel %vm504, %v2536, 0
    %2561 = vmatprep.subr.bf16.mxu0 0
    %2562 = vmatpush1.bf16.xpose.msra.mxu0 0
    %2563 = vmatprep.subr.bf16.mxu0 0
    %2564 = vmatpush1.bf16.xpose.msra.mxu0 0
    %2565 = vmatprep.subr.bf16.mxu0 0
    %2566 = vmatpush1.bf16.xpose.msra.mxu0 0
    %2567 = vmatprep.subr.bf16.mxu0 0
    %2568 = vmatpush1.bf16.xpose.msra.mxu0 0
    %2569 = vmatprep.subr.bf16.mxu0 0
    %2570 = vmatpush1.bf16.xpose.msra.mxu0 %v2559
    %2571 = vmatprep.subr.bf16.mxu0 0
    %2572 = vmatpush1.bf16.xpose.msra.mxu0 %v2556
    %2573 = vmatprep.subr.bf16.mxu0 0
    %2574 = vmatpush1.bf16.xpose.msra.mxu0 %v2553
    %2575 = vmatprep.subr.bf16.mxu0 0
    %2576 = vmatpush1.bf16.xpose.msra.mxu0 %v2550
    %2577 = vmatprep.subr.bf16.mxu0 0
    %2578 = vmatpush2.bf16.xpose.msra.mxu0 0
    %2579 = vmatprep.subr.bf16.mxu0 0
    %2580 = vmatpush2.bf16.xpose.msra.mxu0 0
    %2581 = vmatprep.subr.bf16.mxu0 0
    %2582 = vmatpush2.bf16.xpose.msra.mxu0 0
    %2583 = vmatprep.subr.bf16.mxu0 0
    %2584 = vmatpush2.bf16.xpose.msra.mxu0 0
    %2585 = vmatprep.subr.bf16.mxu0 0
    %2586 = vmatpush2.bf16.xpose.msra.mxu0 0
    %2587 = vmatprep.subr.bf16.mxu0 0
    %2588 = vmatpush2.bf16.xpose.msra.mxu0 0
    %2589 = vmatprep.subr.bf16.mxu0 0
    %2590 = vmatpush2.bf16.xpose.msra.mxu0 0
    %2591 = vmatprep.subr.bf16.mxu0 0
    %2592 = vmatpush2.bf16.xpose.msra.mxu0 0
    %2593 = vmatprep.mubr.bf16.mxu0 0
    %2594 = vmatmul.mubr.bf16.gmra.mxu0 %v2538
    %v2595 = vpop.f32.mrf.mxu0
    %v2596 = vadd.f32 0.0, %v2595
    %v2597 = vpop.f32.mrf.mxu0
    %v2598 = vpop.f32.mrf.mxu0
    %v2599 = vadd.f32 0.0, %v2598
    %v2600 = vpop.f32.mrf.mxu0
    %2601 = vmatprep.mubr.bf16.mxu0 0
    %2602 = vmatmul.mubr.bf16.gmra.mxu0 %v2541
    %v2603 = vpop.f32.mrf.mxu0
    %v2604 = vadd.f32 0.0, %v2603
    %v2605 = vpop.f32.mrf.mxu0
    %v2606 = vpop.f32.mrf.mxu0
    %v2607 = vadd.f32 0.0, %v2606
    %v2608 = vpop.f32.mrf.mxu0
    %2609 = vmatprep.mubr.bf16.mxu0 0
    %2610 = vmatmul.mubr.bf16.gmra.mxu0 %v2544
    %v2611 = vpop.f32.mrf.mxu0
    %v2612 = vadd.f32 0.0, %v2611
    %v2613 = vpop.f32.mrf.mxu0
    %v2614 = vpop.f32.mrf.mxu0
    %v2615 = vadd.f32 0.0, %v2614
    %v2616 = vpop.f32.mrf.mxu0
    %2617 = vmatprep.mubr.bf16.mxu0 0
    %2618 = vmatmul.mubr.bf16.gmra.mxu0 %v2547
    %v2619 = vpop.f32.mrf.mxu0
    %v2620 = vadd.f32 0.0, %v2619
    %v2621 = vpop.f32.mrf.mxu0
    %v2622 = vpop.f32.mrf.mxu0
    %v2623 = vadd.f32 0.0, %v2622
    %v2624 = vpop.f32.mrf.mxu0
    %2625 = vdwg.mxu0
    %v2626 = vmul.f32 %v2491, 0.17677669
    %v2627 = vmul.f32 %v2494, 0.17677669
    %v2628 = vmul.f32 %v2499, 0.17677669
    %v2629 = vmul.f32 %v2502, 0.17677669
    %v2630 = vmul.f32 %v2507, 0.17677669
    %v2631 = vmul.f32 %v2510, 0.17677669
    %v2632 = vmul.f32 %v2515, 0.17677669
    %v2633 = vmul.f32 %v2518, 0.17677669
    %v2634 = vmul.f32 %v2596, 0.17677669
    %v2635 = vmul.f32 %v2599, 0.17677669
    %v2636 = vmul.f32 %v2604, 0.17677669
    %v2637 = vmul.f32 %v2607, 0.17677669
    %v2638 = vmul.f32 %v2612, 0.17677669
    %v2639 = vmul.f32 %v2615, 0.17677669
    %v2640 = vmul.f32 %v2620, 0.17677669
    %v2641 = vmul.f32 %v2623, 0.17677669
    %v2642 = vsel %vm699, %v2626, -inf
    %2643 = vmax.xlane.f32.xlu0 %v2642
    %v2644 = vpop.xlane.xlu0 %2643
    %v2645 = vsel %vm699, %v2627, -inf
    %2646 = vmax.xlane.f32.xlu0 %v2645
    %v2647 = vpop.xlane.xlu0 %2646
    %v2648 = vsel %vm699, %v2628, -inf
    %2649 = vmax.xlane.f32.xlu0 %v2648
    %v2650 = vpop.xlane.xlu0 %2649
    %v2651 = vsel %vm699, %v2629, -inf
    %2652 = vmax.xlane.f32.xlu0 %v2651
    %v2653 = vpop.xlane.xlu0 %2652
    %v2654 = vsel %vm699, %v2630, -inf
    %2655 = vmax.xlane.f32.xlu0 %v2654
    %v2656 = vpop.xlane.xlu0 %2655
    %v2657 = vsel %vm699, %v2631, -inf
    %2658 = vmax.xlane.f32.xlu0 %v2657
    %v2659 = vpop.xlane.xlu0 %2658
    %v2660 = vsel %vm699, %v2632, -inf
    %2661 = vmax.xlane.f32.xlu0 %v2660
    %v2662 = vpop.xlane.xlu0 %2661
    %v2663 = vsel %vm699, %v2633, -inf
    %2664 = vmax.xlane.f32.xlu0 %v2663
    %v2665 = vpop.xlane.xlu0 %2664
    %v2666 = vsel %vm699, %v2634, -inf
    %2667 = vmax.xlane.f32.xlu0 %v2666
    %v2668 = vpop.xlane.xlu0 %2667
    %v2669 = vsel %vm699, %v2635, -inf
    %2670 = vmax.xlane.f32.xlu0 %v2669
    %v2671 = vpop.xlane.xlu0 %2670
    %v2672 = vsel %vm699, %v2636, -inf
    %2673 = vmax.xlane.f32.xlu0 %v2672
    %v2674 = vpop.xlane.xlu0 %2673
    %v2675 = vsel %vm699, %v2637, -inf
    %2676 = vmax.xlane.f32.xlu0 %v2675
    %v2677 = vpop.xlane.xlu0 %2676
    %v2678 = vsel %vm699, %v2638, -inf
    %2679 = vmax.xlane.f32.xlu0 %v2678
    %v2680 = vpop.xlane.xlu0 %2679
    %v2681 = vsel %vm699, %v2639, -inf
    %2682 = vmax.xlane.f32.xlu0 %v2681
    %v2683 = vpop.xlane.xlu0 %2682
    %v2684 = vsel %vm699, %v2640, -inf
    %2685 = vmax.xlane.f32.xlu0 %v2684
    %v2686 = vpop.xlane.xlu0 %2685
    %v2687 = vsel %vm699, %v2641, -inf
    %2688 = vmax.xlane.f32.xlu0 %v2687
    %v2689 = vpop.xlane.xlu0 %2688
    %v2690 = vsub.f32 %v2626, %v2644
    %v2691 = vsub.f32 %v2627, %v2647
    %v2692 = vsub.f32 %v2628, %v2650
    %v2693 = vsub.f32 %v2629, %v2653
    %v2694 = vsub.f32 %v2630, %v2656
    %v2695 = vsub.f32 %v2631, %v2659
    %v2696 = vsub.f32 %v2632, %v2662
    %v2697 = vsub.f32 %v2633, %v2665
    %v2698 = vsub.f32 %v2634, %v2668
    %v2699 = vsub.f32 %v2635, %v2671
    %v2700 = vsub.f32 %v2636, %v2674
    %v2701 = vsub.f32 %v2637, %v2677
    %v2702 = vsub.f32 %v2638, %v2680
    %v2703 = vsub.f32 %v2639, %v2683
    %v2704 = vsub.f32 %v2640, %v2686
    %v2705 = vsub.f32 %v2641, %v2689
    %v2706 = vmul.f32 %v2690, 1.442695
    %v2707 = vpow.pop %v2706
    %v2708 = vmul.f32 %v2691, 1.442695
    %v2709 = vpow.pop %v2708
    %v2710 = vmul.f32 %v2692, 1.442695
    %v2711 = vpow.pop %v2710
    %v2712 = vmul.f32 %v2693, 1.442695
    %v2713 = vpow.pop %v2712
    %v2714 = vmul.f32 %v2694, 1.442695
    %v2715 = vpow.pop %v2714
    %v2716 = vmul.f32 %v2695, 1.442695
    %v2717 = vpow.pop %v2716
    %v2718 = vmul.f32 %v2696, 1.442695
    %v2719 = vpow.pop %v2718
    %v2720 = vmul.f32 %v2697, 1.442695
    %v2721 = vpow.pop %v2720
    %v2722 = vmul.f32 %v2698, 1.442695
    %v2723 = vpow.pop %v2722
    %v2724 = vmul.f32 %v2699, 1.442695
    %v2725 = vpow.pop %v2724
    %v2726 = vmul.f32 %v2700, 1.442695
    %v2727 = vpow.pop %v2726
    %v2728 = vmul.f32 %v2701, 1.442695
    %v2729 = vpow.pop %v2728
    %v2730 = vmul.f32 %v2702, 1.442695
    %v2731 = vpow.pop %v2730
    %v2732 = vmul.f32 %v2703, 1.442695
    %v2733 = vpow.pop %v2732
    %v2734 = vmul.f32 %v2704, 1.442695
    %v2735 = vpow.pop %v2734
    %v2736 = vmul.f32 %v2705, 1.442695
    %v2737 = vpow.pop %v2736
    %v2738 = vsel %vm699, %v2707, 0.0
    %2739 = vadd.xlane.f32.xlu0 %v2738
    %v2740 = vpop.xlane.xlu0 %2739
    %v2741 = vsel %vm699, %v2709, 0.0
    %2742 = vadd.xlane.f32.xlu0 %v2741
    %v2743 = vpop.xlane.xlu0 %2742
    %v2744 = vsel %vm699, %v2711, 0.0
    %2745 = vadd.xlane.f32.xlu0 %v2744
    %v2746 = vpop.xlane.xlu0 %2745
    %v2747 = vsel %vm699, %v2713, 0.0
    %2748 = vadd.xlane.f32.xlu0 %v2747
    %v2749 = vpop.xlane.xlu0 %2748
    %v2750 = vsel %vm699, %v2715, 0.0
    %2751 = vadd.xlane.f32.xlu0 %v2750
    %v2752 = vpop.xlane.xlu0 %2751
    %v2753 = vsel %vm699, %v2717, 0.0
    %2754 = vadd.xlane.f32.xlu0 %v2753
    %v2755 = vpop.xlane.xlu0 %2754
    %v2756 = vsel %vm699, %v2719, 0.0
    %2757 = vadd.xlane.f32.xlu0 %v2756
    %v2758 = vpop.xlane.xlu0 %2757
    %v2759 = vsel %vm699, %v2721, 0.0
    %2760 = vadd.xlane.f32.xlu0 %v2759
    %v2761 = vpop.xlane.xlu0 %2760
    %v2762 = vsel %vm699, %v2723, 0.0
    %2763 = vadd.xlane.f32.xlu0 %v2762
    %v2764 = vpop.xlane.xlu0 %2763
    %v2765 = vsel %vm699, %v2725, 0.0
    %2766 = vadd.xlane.f32.xlu0 %v2765
    %v2767 = vpop.xlane.xlu0 %2766
    %v2768 = vsel %vm699, %v2727, 0.0
    %2769 = vadd.xlane.f32.xlu0 %v2768
    %v2770 = vpop.xlane.xlu0 %2769
    %v2771 = vsel %vm699, %v2729, 0.0
    %2772 = vadd.xlane.f32.xlu0 %v2771
    %v2773 = vpop.xlane.xlu0 %2772
    %v2774 = vsel %vm699, %v2731, 0.0
    %2775 = vadd.xlane.f32.xlu0 %v2774
    %v2776 = vpop.xlane.xlu0 %2775
    %v2777 = vsel %vm699, %v2733, 0.0
    %2778 = vadd.xlane.f32.xlu0 %v2777
    %v2779 = vpop.xlane.xlu0 %2778
    %v2780 = vsel %vm699, %v2735, 0.0
    %2781 = vadd.xlane.f32.xlu0 %v2780
    %v2782 = vpop.xlane.xlu0 %2781
    %v2783 = vsel %vm699, %v2737, 0.0
    %2784 = vadd.xlane.f32.xlu0 %v2783
    %v2785 = vpop.xlane.xlu0 %2784
    %v2786 = vrcp.pop %v2740
    %v2787 = vmul.f32 %v2707, %v2786
    %v2788 = vrcp.pop %v2743
    %v2789 = vmul.f32 %v2709, %v2788
    %v2790 = vrcp.pop %v2746
    %v2791 = vmul.f32 %v2711, %v2790
    %v2792 = vrcp.pop %v2749
    %v2793 = vmul.f32 %v2713, %v2792
    %v2794 = vrcp.pop %v2752
    %v2795 = vmul.f32 %v2715, %v2794
    %v2796 = vrcp.pop %v2755
    %v2797 = vmul.f32 %v2717, %v2796
    %v2798 = vrcp.pop %v2758
    %v2799 = vmul.f32 %v2719, %v2798
    %v2800 = vrcp.pop %v2761
    %v2801 = vmul.f32 %v2721, %v2800
    %v2802 = vrcp.pop %v2764
    %v2803 = vmul.f32 %v2723, %v2802
    %v2804 = vrcp.pop %v2767
    %v2805 = vmul.f32 %v2725, %v2804
    %v2806 = vrcp.pop %v2770
    %v2807 = vmul.f32 %v2727, %v2806
    %v2808 = vrcp.pop %v2773
    %v2809 = vmul.f32 %v2729, %v2808
    %v2810 = vrcp.pop %v2776
    %v2811 = vmul.f32 %v2731, %v2810
    %v2812 = vrcp.pop %v2779
    %v2813 = vmul.f32 %v2733, %v2812
    %v2814 = vrcp.pop %v2782
    %v2815 = vmul.f32 %v2735, %v2814
    %v2816 = vrcp.pop %v2785
    %v2817 = vmul.f32 %v2737, %v2816
    %v2818 = vpack.c.bf16 %v2789, %v2787
    %v2819 = vpack.c.bf16 %v2793, %v2791
    %v2820 = vpack.c.bf16 %v2797, %v2795
    %v2821 = vpack.c.bf16 %v2801, %v2799
    %v2822 = vpack.c.bf16 %v2805, %v2803
    %v2823 = vpack.c.bf16 %v2809, %v2807
    %v2824 = vpack.c.bf16 %v2813, %v2811
    %v2825 = vpack.c.bf16 %v2817, %v2815
    %2826 = vrot.lane.b32.xlu0 %v496, 32
    %v2827 = vpop.permute.xlu0 %2826
    %2828 = vrot.lane.b32.xlu0 %v497, 32
    %v2829 = vpop.permute.xlu0 %2828
    %2830 = vrot.lane.b32.xlu0 %v498, 32
    %v2831 = vpop.permute.xlu0 %2830
    %2832 = vrot.lane.b32.xlu0 %v499, 32
    %v2833 = vpop.permute.xlu0 %2832
    %v2839 = vsel %vm699, %v2818, 0
    %v2842 = vsel %vm699, %v2819, 0
    %v2845 = vsel %vm699, %v2820, 0
    %v2848 = vsel %vm699, %v2821, 0
    %2850 = vmatprep.subr.bf16.mxu0 0
    %2851 = vmatpush1.bf16.msra.mxu0 0
    %2852 = vmatprep.subr.bf16.mxu0 0
    %2853 = vmatpush1.bf16.msra.mxu0 0
    %2854 = vmatprep.subr.bf16.mxu0 0
    %2855 = vmatpush1.bf16.msra.mxu0 0
    %2856 = vmatprep.subr.bf16.mxu0 0
    %2857 = vmatpush1.bf16.msra.mxu0 0
    %2858 = vmatprep.subr.bf16.mxu0 0
    %2859 = vmatpush1.bf16.msra.mxu0 %v2833
    %2860 = vmatprep.subr.bf16.mxu0 0
    %2861 = vmatpush1.bf16.msra.mxu0 %v2831
    %2862 = vmatprep.subr.bf16.mxu0 0
    %2863 = vmatpush1.bf16.msra.mxu0 %v2829
    %2864 = vmatprep.subr.bf16.mxu0 0
    %2865 = vmatpush1.bf16.msra.mxu0 %v2827
    %2866 = vmatprep.subr.bf16.mxu0 0
    %2867 = vmatpush2.bf16.msra.mxu0 0
    %2868 = vmatprep.subr.bf16.mxu0 0
    %2869 = vmatpush2.bf16.msra.mxu0 0
    %2870 = vmatprep.subr.bf16.mxu0 0
    %2871 = vmatpush2.bf16.msra.mxu0 0
    %2872 = vmatprep.subr.bf16.mxu0 0
    %2873 = vmatpush2.bf16.msra.mxu0 0
    %2874 = vmatprep.subr.bf16.mxu0 0
    %2875 = vmatpush2.bf16.msra.mxu0 0
    %2876 = vmatprep.subr.bf16.mxu0 0
    %2877 = vmatpush2.bf16.msra.mxu0 0
    %2878 = vmatprep.subr.bf16.mxu0 0
    %2879 = vmatpush2.bf16.msra.mxu0 0
    %2880 = vmatprep.subr.bf16.mxu0 0
    %2881 = vmatpush2.bf16.msra.mxu0 0
    %2882 = vmatprep.mubr.bf16.mxu0 0
    %2883 = vmatmul.mubr.bf16.gmra.mxu0 %v2839
    %v2884 = vpop.f32.mrf.mxu0
    %v2885 = vadd.f32 0.0, %v2884
    %v2886 = vpop.f32.mrf.mxu0
    %v2887 = vpop.f32.mrf.mxu0
    %v2888 = vadd.f32 0.0, %v2887
    %v2889 = vpop.f32.mrf.mxu0
    %2890 = vmatprep.mubr.bf16.mxu0 0
    %2891 = vmatmul.mubr.bf16.gmra.mxu0 %v2842
    %v2892 = vpop.f32.mrf.mxu0
    %v2893 = vadd.f32 0.0, %v2892
    %v2894 = vpop.f32.mrf.mxu0
    %v2895 = vpop.f32.mrf.mxu0
    %v2896 = vadd.f32 0.0, %v2895
    %v2897 = vpop.f32.mrf.mxu0
    %2898 = vmatprep.mubr.bf16.mxu0 0
    %2899 = vmatmul.mubr.bf16.gmra.mxu0 %v2845
    %v2900 = vpop.f32.mrf.mxu0
    %v2901 = vadd.f32 0.0, %v2900
    %v2902 = vpop.f32.mrf.mxu0
    %v2903 = vpop.f32.mrf.mxu0
    %v2904 = vadd.f32 0.0, %v2903
    %v2905 = vpop.f32.mrf.mxu0
    %2906 = vmatprep.mubr.bf16.mxu0 0
    %2907 = vmatmul.mubr.bf16.gmra.mxu0 %v2848
    %v2908 = vpop.f32.mrf.mxu0
    %v2909 = vadd.f32 0.0, %v2908
    %v2910 = vpop.f32.mrf.mxu0
    %v2911 = vpop.f32.mrf.mxu0
    %v2912 = vadd.f32 0.0, %v2911
    %v2913 = vpop.f32.mrf.mxu0
    %2914 = vdwg.mxu0
    %2915 = vrot.lane.b32.xlu0 %v500, 32
    %v2916 = vpop.permute.xlu0 %2915
    %2917 = vrot.lane.b32.xlu0 %v501, 32
    %v2918 = vpop.permute.xlu0 %2917
    %2919 = vrot.lane.b32.xlu0 %v502, 32
    %v2920 = vpop.permute.xlu0 %2919
    %2921 = vrot.lane.b32.xlu0 %v503, 32
    %v2922 = vpop.permute.xlu0 %2921
    %v2928 = vsel %vm699, %v2822, 0
    %v2931 = vsel %vm699, %v2823, 0
    %v2934 = vsel %vm699, %v2824, 0
    %v2937 = vsel %vm699, %v2825, 0
    %2939 = vmatprep.subr.bf16.mxu0 0
    %2940 = vmatpush1.bf16.msra.mxu0 0
    %2941 = vmatprep.subr.bf16.mxu0 0
    %2942 = vmatpush1.bf16.msra.mxu0 0
    %2943 = vmatprep.subr.bf16.mxu0 0
    %2944 = vmatpush1.bf16.msra.mxu0 0
    %2945 = vmatprep.subr.bf16.mxu0 0
    %2946 = vmatpush1.bf16.msra.mxu0 0
    %2947 = vmatprep.subr.bf16.mxu0 0
    %2948 = vmatpush1.bf16.msra.mxu0 %v2922
    %2949 = vmatprep.subr.bf16.mxu0 0
    %2950 = vmatpush1.bf16.msra.mxu0 %v2920
    %2951 = vmatprep.subr.bf16.mxu0 0
    %2952 = vmatpush1.bf16.msra.mxu0 %v2918
    %2953 = vmatprep.subr.bf16.mxu0 0
    %2954 = vmatpush1.bf16.msra.mxu0 %v2916
    %2955 = vmatprep.subr.bf16.mxu0 0
    %2956 = vmatpush2.bf16.msra.mxu0 0
    %2957 = vmatprep.subr.bf16.mxu0 0
    %2958 = vmatpush2.bf16.msra.mxu0 0
    %2959 = vmatprep.subr.bf16.mxu0 0
    %2960 = vmatpush2.bf16.msra.mxu0 0
    %2961 = vmatprep.subr.bf16.mxu0 0
    %2962 = vmatpush2.bf16.msra.mxu0 0
    %2963 = vmatprep.subr.bf16.mxu0 0
    %2964 = vmatpush2.bf16.msra.mxu0 0
    %2965 = vmatprep.subr.bf16.mxu0 0
    %2966 = vmatpush2.bf16.msra.mxu0 0
    %2967 = vmatprep.subr.bf16.mxu0 0
    %2968 = vmatpush2.bf16.msra.mxu0 0
    %2969 = vmatprep.subr.bf16.mxu0 0
    %2970 = vmatpush2.bf16.msra.mxu0 0
    %2971 = vmatprep.mubr.bf16.mxu0 0
    %2972 = vmatmul.mubr.bf16.gmra.mxu0 %v2928
    %v2973 = vpop.f32.mrf.mxu0
    %v2974 = vadd.f32 0.0, %v2973
    %v2975 = vpop.f32.mrf.mxu0
    %v2976 = vpop.f32.mrf.mxu0
    %v2977 = vadd.f32 0.0, %v2976
    %v2978 = vpop.f32.mrf.mxu0
    %2979 = vmatprep.mubr.bf16.mxu0 0
    %2980 = vmatmul.mubr.bf16.gmra.mxu0 %v2931
    %v2981 = vpop.f32.mrf.mxu0
    %v2982 = vadd.f32 0.0, %v2981
    %v2983 = vpop.f32.mrf.mxu0
    %v2984 = vpop.f32.mrf.mxu0
    %v2985 = vadd.f32 0.0, %v2984
    %v2986 = vpop.f32.mrf.mxu0
    %2987 = vmatprep.mubr.bf16.mxu0 0
    %2988 = vmatmul.mubr.bf16.gmra.mxu0 %v2934
    %v2989 = vpop.f32.mrf.mxu0
    %v2990 = vadd.f32 0.0, %v2989
    %v2991 = vpop.f32.mrf.mxu0
    %v2992 = vpop.f32.mrf.mxu0
    %v2993 = vadd.f32 0.0, %v2992
    %v2994 = vpop.f32.mrf.mxu0
    %2995 = vmatprep.mubr.bf16.mxu0 0
    %2996 = vmatmul.mubr.bf16.gmra.mxu0 %v2937
    %v2997 = vpop.f32.mrf.mxu0
    %v2998 = vadd.f32 0.0, %v2997
    %v2999 = vpop.f32.mrf.mxu0
    %v3000 = vpop.f32.mrf.mxu0
    %v3001 = vadd.f32 0.0, %v3000
    %v3002 = vpop.f32.mrf.mxu0
    %3003 = vdwg.mxu0
    %3020 = vrot.lane.b32.xlu0 %v2885, 96
    %v3021 = vpop.permute.xlu0 %3020
    %3022 = vrot.lane.b32.xlu0 %v2888, 96
    %v3023 = vpop.permute.xlu0 %3022
    %3024 = vrot.lane.b32.xlu0 %v2893, 96
    %v3025 = vpop.permute.xlu0 %3024
    %3026 = vrot.lane.b32.xlu0 %v2896, 96
    %v3027 = vpop.permute.xlu0 %3026
    %3028 = vrot.lane.b32.xlu0 %v2901, 96
    %v3029 = vpop.permute.xlu0 %3028
    %3030 = vrot.lane.b32.xlu0 %v2904, 96
    %v3031 = vpop.permute.xlu0 %3030
    %3032 = vrot.lane.b32.xlu0 %v2909, 96
    %v3033 = vpop.permute.xlu0 %3032
    %3034 = vrot.lane.b32.xlu0 %v2912, 96
    %v3035 = vpop.permute.xlu0 %3034
    %3036 = vrot.lane.b32.xlu0 %v2974, 96
    %v3037 = vpop.permute.xlu0 %3036
    %3038 = vrot.lane.b32.xlu0 %v2977, 96
    %v3039 = vpop.permute.xlu0 %3038
    %3040 = vrot.lane.b32.xlu0 %v2982, 96
    %v3041 = vpop.permute.xlu0 %3040
    %3042 = vrot.lane.b32.xlu0 %v2985, 96
    %v3043 = vpop.permute.xlu0 %3042
    %3044 = vrot.lane.b32.xlu0 %v2990, 96
    %v3045 = vpop.permute.xlu0 %3044
    %3046 = vrot.lane.b32.xlu0 %v2993, 96
    %v3047 = vpop.permute.xlu0 %3046
    %3048 = vrot.lane.b32.xlu0 %v2998, 96
    %v3049 = vpop.permute.xlu0 %3048
    %3050 = vrot.lane.b32.xlu0 %v3001, 96
    %v3051 = vpop.permute.xlu0 %3050
    %vm3068 = vcmask 1048320
    %3069 = vst.msk [vmem:[#allocation2] sm:$0xff] %vm3068, %v3021
    %3070 = vst.msk [vmem:[#allocation2 + $0x8] sm:$0xff] %vm3068, %v3023
    %3071 = vst.msk [vmem:[#allocation2 + $0x10] sm:$0xff] %vm3068, %v3025
    %3072 = vst.msk [vmem:[#allocation2 + $0x18] sm:$0xff] %vm3068, %v3027
    %3073 = vst.msk [vmem:[#allocation2 + $0x20] sm:$0xff] %vm3068, %v3029
    %3074 = vst.msk [vmem:[#allocation2 + $0x28] sm:$0xff] %vm3068, %v3031
    %3075 = vst.msk [vmem:[#allocation2 + $0x30] sm:$0xff] %vm3068, %v3033
    %3076 = vst.msk [vmem:[#allocation2 + $0x38] sm:$0xff] %vm3068, %v3035
    %3077 = vst.msk [vmem:[#allocation2 + $0x40] sm:$0xff] %vm3068, %v3037
    %3078 = vst.msk [vmem:[#allocation2 + $0x48] sm:$0xff] %vm3068, %v3039
    %3079 = vst.msk [vmem:[#allocation2 + $0x50] sm:$0xff] %vm3068, %v3041
    %3080 = vst.msk [vmem:[#allocation2 + $0x58] sm:$0xff] %vm3068, %v3043
    %3081 = vst.msk [vmem:[#allocation2 + $0x60] sm:$0xff] %vm3068, %v3045
    %3082 = vst.msk [vmem:[#allocation2 + $0x68] sm:$0xff] %vm3068, %v3047
    %3083 = vst.msk [vmem:[#allocation2 + $0x70] sm:$0xff] %vm3068, %v3049
    %3084 = vst.msk [vmem:[#allocation2 + $0x78] sm:$0xff] %vm3068, %v3051
    %v3085 = vld [vmem:[#allocation2] sm:$0xff]
    %v3086 = vld [vmem:[#allocation2 + $0x8] sm:$0xff]
    %v3087 = vld [vmem:[#allocation2 + $0x10] sm:$0xff]
    %v3088 = vld [vmem:[#allocation2 + $0x18] sm:$0xff]
    %v3089 = vld [vmem:[#allocation2 + $0x20] sm:$0xff]
    %v3090 = vld [vmem:[#allocation2 + $0x28] sm:$0xff]
    %v3091 = vld [vmem:[#allocation2 + $0x30] sm:$0xff]
    %v3092 = vld [vmem:[#allocation2 + $0x38] sm:$0xff]
    %v3093 = vld [vmem:[#allocation2 + $0x40] sm:$0xff]
    %v3094 = vld [vmem:[#allocation2 + $0x48] sm:$0xff]
    %v3095 = vld [vmem:[#allocation2 + $0x50] sm:$0xff]
    %v3096 = vld [vmem:[#allocation2 + $0x58] sm:$0xff]
    %v3097 = vld [vmem:[#allocation2 + $0x60] sm:$0xff]
    %v3098 = vld [vmem:[#allocation2 + $0x68] sm:$0xff]
    %v3099 = vld [vmem:[#allocation2 + $0x70] sm:$0xff]
    %v3100 = vld [vmem:[#allocation2 + $0x78] sm:$0xff]
    %v3101 = vadd.f32 %v69, %v3085
    %v3102 = vadd.f32 %v70, %v3086
    %v3103 = vadd.f32 %v71, %v3087
    %v3104 = vadd.f32 %v72, %v3088
    %v3105 = vadd.f32 %v73, %v3089
    %v3106 = vadd.f32 %v74, %v3090
    %v3107 = vadd.f32 %v75, %v3091
    %v3108 = vadd.f32 %v76, %v3092
    %v3109 = vadd.f32 %v77, %v3093
    %v3110 = vadd.f32 %v78, %v3094
    %v3111 = vadd.f32 %v79, %v3095
    %v3112 = vadd.f32 %v80, %v3096
    %v3113 = vadd.f32 %v81, %v3097
    %v3114 = vadd.f32 %v82, %v3098
    %v3115 = vadd.f32 %v83, %v3099
    %v3116 = vadd.f32 %v84, %v3100
    %3117 = vadd.xlane.f32.xlu0 %v3101
    %v3118 = vpop.xlane.xlu0 %3117
    %3119 = vadd.xlane.f32.xlu0 %v3102
    %v3120 = vpop.xlane.xlu0 %3119
    %3121 = vadd.xlane.f32.xlu0 %v3103
    %v3122 = vpop.xlane.xlu0 %3121
    %3123 = vadd.xlane.f32.xlu0 %v3104
    %v3124 = vpop.xlane.xlu0 %3123
    %3125 = vadd.xlane.f32.xlu0 %v3105
    %v3126 = vpop.xlane.xlu0 %3125
    %3127 = vadd.xlane.f32.xlu0 %v3106
    %v3128 = vpop.xlane.xlu0 %3127
    %3129 = vadd.xlane.f32.xlu0 %v3107
    %v3130 = vpop.xlane.xlu0 %3129
    %3131 = vadd.xlane.f32.xlu0 %v3108
    %v3132 = vpop.xlane.xlu0 %3131
    %3133 = vadd.xlane.f32.xlu0 %v3109
    %v3134 = vpop.xlane.xlu0 %3133
    %3135 = vadd.xlane.f32.xlu0 %v3110
    %v3136 = vpop.xlane.xlu0 %3135
    %3137 = vadd.xlane.f32.xlu0 %v3111
    %v3138 = vpop.xlane.xlu0 %3137
    %3139 = vadd.xlane.f32.xlu0 %v3112
    %v3140 = vpop.xlane.xlu0 %3139
    %3141 = vadd.xlane.f32.xlu0 %v3113
    %v3142 = vpop.xlane.xlu0 %3141
    %3143 = vadd.xlane.f32.xlu0 %v3114
    %v3144 = vpop.xlane.xlu0 %3143
    %3145 = vadd.xlane.f32.xlu0 %v3115
    %v3146 = vpop.xlane.xlu0 %3145
    %3147 = vadd.xlane.f32.xlu0 %v3116
    %v3148 = vpop.xlane.xlu0 %3147
    %v3149 = vrcp.pop 128.0
    %v3150 = vmul.f32 %v3118, %v3149
    %v3151 = vmul.f32 %v3120, %v3149
    %v3152 = vmul.f32 %v3122, %v3149
    %v3153 = vmul.f32 %v3124, %v3149
    %v3154 = vmul.f32 %v3126, %v3149
    %v3155 = vmul.f32 %v3128, %v3149
    %v3156 = vmul.f32 %v3130, %v3149
    %v3157 = vmul.f32 %v3132, %v3149
    %v3158 = vmul.f32 %v3134, %v3149
    %v3159 = vmul.f32 %v3136, %v3149
    %v3160 = vmul.f32 %v3138, %v3149
    %v3161 = vmul.f32 %v3140, %v3149
    %v3162 = vmul.f32 %v3142, %v3149
    %v3163 = vmul.f32 %v3144, %v3149
    %v3164 = vmul.f32 %v3146, %v3149
    %v3165 = vmul.f32 %v3148, %v3149
    %v3166 = vsub.f32 %v3101, %v3150
    %v3167 = vsub.f32 %v3102, %v3151
    %v3168 = vsub.f32 %v3103, %v3152
    %v3169 = vsub.f32 %v3104, %v3153
    %v3170 = vsub.f32 %v3105, %v3154
    %v3171 = vsub.f32 %v3106, %v3155
    %v3172 = vsub.f32 %v3107, %v3156
    %v3173 = vsub.f32 %v3108, %v3157
    %v3174 = vsub.f32 %v3109, %v3158
    %v3175 = vsub.f32 %v3110, %v3159
    %v3176 = vsub.f32 %v3111, %v3160
    %v3177 = vsub.f32 %v3112, %v3161
    %v3178 = vsub.f32 %v3113, %v3162
    %v3179 = vsub.f32 %v3114, %v3163
    %v3180 = vsub.f32 %v3115, %v3164
    %v3181 = vsub.f32 %v3116, %v3165
    %v3182 = vmul.f32 %v3166, %v3166
    %v3183 = vmul.f32 %v3167, %v3167
    %v3184 = vmul.f32 %v3168, %v3168
    %v3185 = vmul.f32 %v3169, %v3169
    %v3186 = vmul.f32 %v3170, %v3170
    %v3187 = vmul.f32 %v3171, %v3171
    %v3188 = vmul.f32 %v3172, %v3172
    %v3189 = vmul.f32 %v3173, %v3173
    %v3190 = vmul.f32 %v3174, %v3174
    %v3191 = vmul.f32 %v3175, %v3175
    %v3192 = vmul.f32 %v3176, %v3176
    %v3193 = vmul.f32 %v3177, %v3177
    %v3194 = vmul.f32 %v3178, %v3178
    %v3195 = vmul.f32 %v3179, %v3179
    %v3196 = vmul.f32 %v3180, %v3180
    %v3197 = vmul.f32 %v3181, %v3181
    %3198 = vadd.xlane.f32.xlu0 %v3182
    %v3199 = vpop.xlane.xlu0 %3198
    %3200 = vadd.xlane.f32.xlu0 %v3183
    %v3201 = vpop.xlane.xlu0 %3200
    %3202 = vadd.xlane.f32.xlu0 %v3184
    %v3203 = vpop.xlane.xlu0 %3202
    %3204 = vadd.xlane.f32.xlu0 %v3185
    %v3205 = vpop.xlane.xlu0 %3204
    %3206 = vadd.xlane.f32.xlu0 %v3186
    %v3207 = vpop.xlane.xlu0 %3206
    %3208 = vadd.xlane.f32.xlu0 %v3187
    %v3209 = vpop.xlane.xlu0 %3208
    %3210 = vadd.xlane.f32.xlu0 %v3188
    %v3211 = vpop.xlane.xlu0 %3210
    %3212 = vadd.xlane.f32.xlu0 %v3189
    %v3213 = vpop.xlane.xlu0 %3212
    %3214 = vadd.xlane.f32.xlu0 %v3190
    %v3215 = vpop.xlane.xlu0 %3214
    %3216 = vadd.xlane.f32.xlu0 %v3191
    %v3217 = vpop.xlane.xlu0 %3216
    %3218 = vadd.xlane.f32.xlu0 %v3192
    %v3219 = vpop.xlane.xlu0 %3218
    %3220 = vadd.xlane.f32.xlu0 %v3193
    %v3221 = vpop.xlane.xlu0 %3220
    %3222 = vadd.xlane.f32.xlu0 %v3194
    %v3223 = vpop.xlane.xlu0 %3222
    %3224 = vadd.xlane.f32.xlu0 %v3195
    %v3225 = vpop.xlane.xlu0 %3224
    %3226 = vadd.xlane.f32.xlu0 %v3196
    %v3227 = vpop.xlane.xlu0 %3226
    %3228 = vadd.xlane.f32.xlu0 %v3197
    %v3229 = vpop.xlane.xlu0 %3228
    %v3230 = vmul.f32 %v3199, %v3149
    %v3231 = vmul.f32 %v3201, %v3149
    %v3232 = vmul.f32 %v3203, %v3149
    %v3233 = vmul.f32 %v3205, %v3149
    %v3234 = vmul.f32 %v3207, %v3149
    %v3235 = vmul.f32 %v3209, %v3149
    %v3236 = vmul.f32 %v3211, %v3149
    %v3237 = vmul.f32 %v3213, %v3149
    %v3238 = vmul.f32 %v3215, %v3149
    %v3239 = vmul.f32 %v3217, %v3149
    %v3240 = vmul.f32 %v3219, %v3149
    %v3241 = vmul.f32 %v3221, %v3149
    %v3242 = vmul.f32 %v3223, %v3149
    %v3243 = vmul.f32 %v3225, %v3149
    %v3244 = vmul.f32 %v3227, %v3149
    %v3245 = vmul.f32 %v3229, %v3149
    %v3246 = vadd.f32 %v3230, 1e-06
    %v3247 = vadd.f32 %v3231, 1e-06
    %v3248 = vadd.f32 %v3232, 1e-06
    %v3249 = vadd.f32 %v3233, 1e-06
    %v3250 = vadd.f32 %v3234, 1e-06
    %v3251 = vadd.f32 %v3235, 1e-06
    %v3252 = vadd.f32 %v3236, 1e-06
    %v3253 = vadd.f32 %v3237, 1e-06
    %v3254 = vadd.f32 %v3238, 1e-06
    %v3255 = vadd.f32 %v3239, 1e-06
    %v3256 = vadd.f32 %v3240, 1e-06
    %v3257 = vadd.f32 %v3241, 1e-06
    %v3258 = vadd.f32 %v3242, 1e-06
    %v3259 = vadd.f32 %v3243, 1e-06
    %v3260 = vadd.f32 %v3244, 1e-06
    %v3261 = vadd.f32 %v3245, 1e-06
    %v3262 = vrsqrt.pop %v3246
    %v3263 = vrsqrt.pop %v3247
    %v3264 = vrsqrt.pop %v3248
    %v3265 = vrsqrt.pop %v3249
    %v3266 = vrsqrt.pop %v3250
    %v3267 = vrsqrt.pop %v3251
    %v3268 = vrsqrt.pop %v3252
    %v3269 = vrsqrt.pop %v3253
    %v3270 = vrsqrt.pop %v3254
    %v3271 = vrsqrt.pop %v3255
    %v3272 = vrsqrt.pop %v3256
    %v3273 = vrsqrt.pop %v3257
    %v3274 = vrsqrt.pop %v3258
    %v3275 = vrsqrt.pop %v3259
    %v3276 = vrsqrt.pop %v3260
    %v3277 = vrsqrt.pop %v3261
    %v3278 = vmul.f32 %v3166, %v3262
    %v3279 = vmul.f32 %v3167, %v3263
    %v3280 = vmul.f32 %v3168, %v3264
    %v3281 = vmul.f32 %v3169, %v3265
    %v3282 = vmul.f32 %v3170, %v3266
    %v3283 = vmul.f32 %v3171, %v3267
    %v3284 = vmul.f32 %v3172, %v3268
    %v3285 = vmul.f32 %v3173, %v3269
    %v3286 = vmul.f32 %v3174, %v3270
    %v3287 = vmul.f32 %v3175, %v3271
    %v3288 = vmul.f32 %v3176, %v3272
    %v3289 = vmul.f32 %v3177, %v3273
    %v3290 = vmul.f32 %v3178, %v3274
    %v3291 = vmul.f32 %v3179, %v3275
    %v3292 = vmul.f32 %v3180, %v3276
    %v3293 = vmul.f32 %v3181, %v3277
    %v3294 = vld [vmem:[%s5] sm:$0x1]
    %v3296 = vlaneseq
    %v3297 = vshrl.u32 %v3296, 7
    %v3298 = vsub.s32 0, %v3297
    %v3299 = vrot.slane %v3294, %v3298
    %v3301 = vmul.f32 %v3278, %v3299
    %v3302 = vmul.f32 %v3279, %v3299
    %v3303 = vmul.f32 %v3280, %v3299
    %v3304 = vmul.f32 %v3281, %v3299
    %v3305 = vmul.f32 %v3282, %v3299
    %v3306 = vmul.f32 %v3283, %v3299
    %v3307 = vmul.f32 %v3284, %v3299
    %v3308 = vmul.f32 %v3285, %v3299
    %v3309 = vmul.f32 %v3286, %v3299
    %v3310 = vmul.f32 %v3287, %v3299
    %v3311 = vmul.f32 %v3288, %v3299
    %v3312 = vmul.f32 %v3289, %v3299
    %v3313 = vmul.f32 %v3290, %v3299
    %v3314 = vmul.f32 %v3291, %v3299
    %v3315 = vmul.f32 %v3292, %v3299
    %v3316 = vmul.f32 %v3293, %v3299
    %v3317 = vld [vmem:[%s6] sm:$0x1]
    %v3319 = vlaneseq
    %v3320 = vshrl.u32 %v3319, 7
    %v3321 = vsub.s32 0, %v3320
    %v3322 = vrot.slane %v3317, %v3321
    %v3324 = vadd.f32 %v3301, %v3322
    %v3325 = vadd.f32 %v3302, %v3322
    %v3326 = vadd.f32 %v3303, %v3322
    %v3327 = vadd.f32 %v3304, %v3322
    %v3328 = vadd.f32 %v3305, %v3322
    %v3329 = vadd.f32 %v3306, %v3322
    %v3330 = vadd.f32 %v3307, %v3322
    %v3331 = vadd.f32 %v3308, %v3322
    %v3332 = vadd.f32 %v3309, %v3322
    %v3333 = vadd.f32 %v3310, %v3322
    %v3334 = vadd.f32 %v3311, %v3322
    %v3335 = vadd.f32 %v3312, %v3322
    %v3336 = vadd.f32 %v3313, %v3322
    %v3337 = vadd.f32 %v3314, %v3322
    %v3338 = vadd.f32 %v3315, %v3322
    %v3339 = vadd.f32 %v3316, %v3322
    %v3340 = vpack.c.bf16 %v3325, %v3324
    %v3341 = vpack.c.bf16 %v3327, %v3326
    %v3342 = vpack.c.bf16 %v3329, %v3328
    %v3343 = vpack.c.bf16 %v3331, %v3330
    %v3344 = vpack.c.bf16 %v3333, %v3332
    %v3345 = vpack.c.bf16 %v3335, %v3334
    %v3346 = vpack.c.bf16 %v3337, %v3336
    %v3347 = vpack.c.bf16 %v3339, %v3338
    %v3348 = vld [vmem:[#allocation8] sm:$0xf]
    %v3349 = vld [vmem:[#allocation8 + $0x4] sm:$0xf]
    %v3350 = vld [vmem:[#allocation8 + $0x8] sm:$0xf]
    %v3351 = vld [vmem:[#allocation8 + $0xc] sm:$0xf]
    %v3352 = vld [vmem:[#allocation8 + $0x10] sm:$0xf]
    %v3353 = vld [vmem:[#allocation8 + $0x14] sm:$0xf]
    %v3354 = vld [vmem:[#allocation8 + $0x18] sm:$0xf]
    %v3355 = vld [vmem:[#allocation8 + $0x1c] sm:$0xf]
    %v3356 = vld [vmem:[#allocation8 + $0x20] sm:$0xf]
    %v3357 = vld [vmem:[#allocation8 + $0x24] sm:$0xf]
    %v3358 = vld [vmem:[#allocation8 + $0x28] sm:$0xf]
    %v3359 = vld [vmem:[#allocation8 + $0x2c] sm:$0xf]
    %v3360 = vld [vmem:[#allocation8 + $0x30] sm:$0xf]
    %v3361 = vld [vmem:[#allocation8 + $0x34] sm:$0xf]
    %v3362 = vld [vmem:[#allocation8 + $0x38] sm:$0xf]
    %v3363 = vld [vmem:[#allocation8 + $0x3c] sm:$0xf]
    %v3364 = vld [vmem:[%s4] sm:$0x1]
    %v3366 = vlaneseq
    %v3367 = vshrl.u32 %v3366, 7
    %v3368 = vsub.s32 0, %v3367
    %v3369 = vrot.slane %v3364, %v3368
    %v3387 = vunpack.c.l.b16 %v3348
    %v3388 = vunpack.c.l.b16 %v3349
    %v3389 = vunpack.c.l.b16 %v3350
    %v3390 = vunpack.c.l.b16 %v3351
    %v3391 = vunpack.c.l.b16 %v3352
    %v3392 = vunpack.c.l.b16 %v3353
    %v3393 = vunpack.c.l.b16 %v3354
    %v3394 = vunpack.c.l.b16 %v3355
    %v3395 = vunpack.c.l.b16 %v3356
    %v3396 = vunpack.c.l.b16 %v3357
    %v3397 = vunpack.c.l.b16 %v3358
    %v3398 = vunpack.c.l.b16 %v3359
    %v3399 = vunpack.c.l.b16 %v3360
    %v3400 = vunpack.c.l.b16 %v3361
    %v3401 = vunpack.c.l.b16 %v3362
    %v3402 = vunpack.c.l.b16 %v3363
    %v3403 = vpack.c.b16 %v3388, %v3387
    %v3404 = vpack.c.b16 %v3390, %v3389
    %v3405 = vpack.c.b16 %v3392, %v3391
    %v3406 = vpack.c.b16 %v3394, %v3393
    %v3407 = vpack.c.b16 %v3396, %v3395
    %v3408 = vpack.c.b16 %v3398, %v3397
    %v3409 = vpack.c.b16 %v3400, %v3399
    %v3410 = vpack.c.b16 %v3402, %v3401
    %3419 = vmatprep.subr.bf16.mxu0 0
    %3420 = vmatpush1.bf16.msra.mxu0 %v3410
    %3421 = vmatprep.subr.bf16.mxu0 0
    %3422 = vmatpush1.bf16.msra.mxu0 %v3409
    %3423 = vmatprep.subr.bf16.mxu0 0
    %3424 = vmatpush1.bf16.msra.mxu0 %v3408
    %3425 = vmatprep.subr.bf16.mxu0 0
    %3426 = vmatpush1.bf16.msra.mxu0 %v3407
    %3427 = vmatprep.subr.bf16.mxu0 0
    %3428 = vmatpush1.bf16.msra.mxu0 %v3406
    %3429 = vmatprep.subr.bf16.mxu0 0
    %3430 = vmatpush1.bf16.msra.mxu0 %v3405
    %3431 = vmatprep.subr.bf16.mxu0 0
    %3432 = vmatpush1.bf16.msra.mxu0 %v3404
    %3433 = vmatprep.subr.bf16.mxu0 0
    %3434 = vmatpush1.bf16.msra.mxu0 %v3403
    %3435 = vmatprep.subr.bf16.mxu0 0
    %3436 = vmatpush2.bf16.msra.mxu0 0
    %3437 = vmatprep.subr.bf16.mxu0 0
    %3438 = vmatpush2.bf16.msra.mxu0 0
    %3439 = vmatprep.subr.bf16.mxu0 0
    %3440 = vmatpush2.bf16.msra.mxu0 0
    %3441 = vmatprep.subr.bf16.mxu0 0
    %3442 = vmatpush2.bf16.msra.mxu0 0
    %3443 = vmatprep.subr.bf16.mxu0 0
    %3444 = vmatpush2.bf16.msra.mxu0 0
    %3445 = vmatprep.subr.bf16.mxu0 0
    %3446 = vmatpush2.bf16.msra.mxu0 0
    %3447 = vmatprep.subr.bf16.mxu0 0
    %3448 = vmatpush2.bf16.msra.mxu0 0
    %3449 = vmatprep.subr.bf16.mxu0 0
    %3450 = vmatpush2.bf16.msra.mxu0 0
    %3451 = vmatprep.mubr.bf16.mxu0 0
    %3452 = vmatmul.mubr.bf16.gmra.mxu0 %v3340
    %v3453 = vpop.f32.mrf.mxu0
    %v3454 = vadd.f32 %v3369, %v3453
    %v3455 = vpop.f32.mrf.mxu0
    %v3456 = vpop.f32.mrf.mxu0
    %v3457 = vadd.f32 %v3369, %v3456
    %v3458 = vpop.f32.mrf.mxu0
    %3459 = vmatprep.mubr.bf16.mxu0 0
    %3460 = vmatmul.mubr.bf16.gmra.mxu0 %v3341
    %v3461 = vpop.f32.mrf.mxu0
    %v3462 = vadd.f32 %v3369, %v3461
    %v3463 = vpop.f32.mrf.mxu0
    %v3464 = vpop.f32.mrf.mxu0
    %v3465 = vadd.f32 %v3369, %v3464
    %v3466 = vpop.f32.mrf.mxu0
    %3467 = vmatprep.mubr.bf16.mxu0 0
    %3468 = vmatmul.mubr.bf16.gmra.mxu0 %v3342
    %v3469 = vpop.f32.mrf.mxu0
    %v3470 = vadd.f32 %v3369, %v3469
    %v3471 = vpop.f32.mrf.mxu0
    %v3472 = vpop.f32.mrf.mxu0
    %v3473 = vadd.f32 %v3369, %v3472
    %v3474 = vpop.f32.mrf.mxu0
    %3475 = vmatprep.mubr.bf16.mxu0 0
    %3476 = vmatmul.mubr.bf16.gmra.mxu0 %v3343
    %v3477 = vpop.f32.mrf.mxu0
    %v3478 = vadd.f32 %v3369, %v3477
    %v3479 = vpop.f32.mrf.mxu0
    %v3480 = vpop.f32.mrf.mxu0
    %v3481 = vadd.f32 %v3369, %v3480
    %v3482 = vpop.f32.mrf.mxu0
    %3483 = vmatprep.mubr.bf16.mxu0 0
    %3484 = vmatmul.mubr.bf16.gmra.mxu0 %v3344
    %v3485 = vpop.f32.mrf.mxu0
    %v3486 = vadd.f32 %v3369, %v3485
    %v3487 = vpop.f32.mrf.mxu0
    %v3488 = vpop.f32.mrf.mxu0
    %v3489 = vadd.f32 %v3369, %v3488
    %v3490 = vpop.f32.mrf.mxu0
    %3491 = vmatprep.mubr.bf16.mxu0 0
    %3492 = vmatmul.mubr.bf16.gmra.mxu0 %v3345
    %v3493 = vpop.f32.mrf.mxu0
    %v3494 = vadd.f32 %v3369, %v3493
    %v3495 = vpop.f32.mrf.mxu0
    %v3496 = vpop.f32.mrf.mxu0
    %v3497 = vadd.f32 %v3369, %v3496
    %v3498 = vpop.f32.mrf.mxu0
    %3499 = vmatprep.mubr.bf16.mxu0 0
    %3500 = vmatmul.mubr.bf16.gmra.mxu0 %v3346
    %v3501 = vpop.f32.mrf.mxu0
    %v3502 = vadd.f32 %v3369, %v3501
    %v3503 = vpop.f32.mrf.mxu0
    %v3504 = vpop.f32.mrf.mxu0
    %v3505 = vadd.f32 %v3369, %v3504
    %v3506 = vpop.f32.mrf.mxu0
    %3507 = vmatprep.mubr.bf16.mxu0 0
    %3508 = vmatmul.mubr.bf16.gmra.mxu0 %v3347
    %v3509 = vpop.f32.mrf.mxu0
    %v3510 = vadd.f32 %v3369, %v3509
    %v3511 = vpop.f32.mrf.mxu0
    %v3512 = vpop.f32.mrf.mxu0
    %v3513 = vadd.f32 %v3369, %v3512
    %v3514 = vpop.f32.mrf.mxu0
    %3515 = vdwg.mxu0
    %3516 = vst [vmem:[#allocation9] sm:$0xff] %v3454
    %3517 = vst [vmem:[#allocation9 + $0x8] sm:$0xff] %v3457
    %3518 = vst [vmem:[#allocation9 + $0x10] sm:$0xff] %v3462
    %3519 = vst [vmem:[#allocation9 + $0x18] sm:$0xff] %v3465
    %3520 = vst [vmem:[#allocation9 + $0x20] sm:$0xff] %v3470
    %3521 = vst [vmem:[#allocation9 + $0x28] sm:$0xff] %v3473
    %3522 = vst [vmem:[#allocation9 + $0x30] sm:$0xff] %v3478
    %3523 = vst [vmem:[#allocation9 + $0x38] sm:$0xff] %v3481
    %3524 = vst [vmem:[#allocation9 + $0x40] sm:$0xff] %v3486
    %3525 = vst [vmem:[#allocation9 + $0x48] sm:$0xff] %v3489
    %3526 = vst [vmem:[#allocation9 + $0x50] sm:$0xff] %v3494
    %3527 = vst [vmem:[#allocation9 + $0x58] sm:$0xff] %v3497
    %3528 = vst [vmem:[#allocation9 + $0x60] sm:$0xff] %v3502
    %3529 = vst [vmem:[#allocation9 + $0x68] sm:$0xff] %v3505
    %3530 = vst [vmem:[#allocation9 + $0x70] sm:$0xff] %v3510
    %3531 = vst [vmem:[#allocation9 + $0x78] sm:$0xff] %v3513
    // Predicated region
    $region42: #{tpu_custom_call.1} parent=1 // pred_check
      _
    $region43: #{tpu_custom_call.1} parent=1 // pred_check_branch
      %3533 = sbr.rel (0) target = $region45
    $region44: #{tpu_custom_call.1} parent=1 // pred_region
      %s3535 = ssub.s32 2048, 2048
      %3536 = vsyncadd [#allocation5], %s3535
      %s3537 = sshll.u32 [#allocation9], 4
      %s3538 = int_to_ptr.vmem [resolvable:$true] %s3537
      %3543 = dma.vmem_to_hbm [thread:$0]  %s3538, 2048, %s7, [#allocation5], 128, 128, 8
    $region45: #{tpu_custom_call.1} parent=1 // pred_fallthru
      _
    // Predicated region
    $region46: #{tpu_custom_call.1} parent=1 // pred_check
      _
    $region47: #{tpu_custom_call.1} parent=1 // pred_check_branch
      %3545 = sbr.rel (0) target = $region49
    $region48: #{tpu_custom_call.1} parent=1 // pred_region
      %3546 = dma.done [#allocation5], 2048
    $region49: #{tpu_custom_call.1} parent=1 // pred_fallthru
      _
    %3547 = vsyncpa [#allocation4], 1
    %3548 = vsyncpa [#allocation7], 1
    %3549 = vsyncpa [#allocation5], 1

</llo_original>
